<compile_context>
chip_gen: v5e
topology: v5e:2x2
jax: 0.10.0
libtpu: 0.0.40
codegen_flags: <defaults>
</compile_context>

<pallas_src>
import jax
import jax.numpy as jnp
from jax import lax
from jax.experimental import pallas as pl
from jax.experimental.pallas import tpu as pltpu


# ----------------------------------------------------------------------------
# Pallas kernels
# ----------------------------------------------------------------------------
def _conv_pool_kernel_cm(p0_ref, p1_ref, p2_ref, p3_ref, w_ref, b_ref, o_ref):
    """Channels-major fused conv+relu+maxpool:
       o[c, m] = relu(max_s (w[c,:] @ p_s[:, m]) + b[c]),  m on lanes (lane-dense)."""
    w = w_ref[...]
    m01 = jnp.maximum(
        jnp.dot(w, p0_ref[...], preferred_element_type=jnp.float32),
        jnp.dot(w, p1_ref[...], preferred_element_type=jnp.float32))
    m23 = jnp.maximum(
        jnp.dot(w, p2_ref[...], preferred_element_type=jnp.float32),
        jnp.dot(w, p3_ref[...], preferred_element_type=jnp.float32))
    o_ref[...] = jnp.maximum(jnp.maximum(m01, m23) + b_ref[...], 0.0)


def _conv_pool_kernel_rm(p0_ref, p1_ref, p2_ref, p3_ref, w_ref, b_ref, o_ref):
    """Rows-major fused conv+relu+maxpool (tiny stages 2/3):
       o[m, c] = relu(max_s (p_s[m,:] @ w[:, c]) + b[c])."""
    w = w_ref[...]
    m01 = jnp.maximum(
        jnp.dot(p0_ref[...], w, preferred_element_type=jnp.float32),
        jnp.dot(p1_ref[...], w, preferred_element_type=jnp.float32))
    m23 = jnp.maximum(
        jnp.dot(p2_ref[...], w, preferred_element_type=jnp.float32),
        jnp.dot(p3_ref[...], w, preferred_element_type=jnp.float32))
    o_ref[...] = jnp.maximum(jnp.maximum(m01, m23) + b_ref[...], 0.0)


def _gru_fc_kernel(x_ref, wih_ref, whh_ref, bih_ref, bhh_ref,
                   w1_ref, b1_ref, w2_ref, b2_ref,
                   out_ref,
                   gates_scr, h_scr, rnn_scr):
    """GRU (seq_len = T = leading batch dim, inner batch = 1, hidden = 256)
    followed by fc1 and a lane-padded fc2 (output (T, 128), cols >=3 are zero)."""
    H = 256
    T = x_ref.shape[0]

    # Input projections for all timesteps in one MXU call: (T, 3H)
    gates_scr[...] = (
        jnp.dot(x_ref[...], wih_ref[...], preferred_element_type=jnp.float32)
        + bih_ref[...])
    h_scr[...] = jnp.zeros_like(h_scr)

    # Hoist recurrent weights/biases out of the time loop.
    whh = whh_ref[...]
    bhh = bhh_ref[...]

    def step(t, carry):
        gx = gates_scr[pl.ds(t, 1), :]                       # (1, 3H)
        h = h_scr[...]                                       # (1, H)
        gh = jnp.dot(h, whh, preferred_element_type=jnp.float32) + bhh
        r = jax.nn.sigmoid(gx[:, 0:H] + gh[:, 0:H])
        z = jax.nn.sigmoid(gx[:, H:2 * H] + gh[:, H:2 * H])
        n = jnp.tanh(gx[:, 2 * H:3 * H] + r * gh[:, 2 * H:3 * H])
        h_new = (1.0 - z) * n + z * h
        h_scr[...] = h_new
        rnn_scr[pl.ds(t, 1), :] = h_new
        return carry

    # T is small and static: fully unroll so the scheduler can overlap step-t
    # EUP sigmoid/tanh with step-(t+1) MXU work.
    lax.fori_loop(0, T, step, 0, unroll=True)

    # fc1 (no activation in the reference forward), then lane-padded fc2.
    fc1 = (jnp.dot(rnn_scr[...], w1_ref[...], preferred_element_type=jnp.float32)
           + b1_ref[...])
    out_ref[...] = (jnp.dot(fc1, w2_ref[...], preferred_element_type=jnp.float32)
                    + b2_ref[...])


# ----------------------------------------------------------------------------
# Plain-JAX glue: per-pool-slab im2col with ceil_mode edge clamping
# ----------------------------------------------------------------------------
def _ceil_div(a, b):
    return -(-a // b)


def _conv_pool_slabs(x, kh, kw, stride, pad):
    """For each of the 4 pool-window offsets (di, dj) build the im2col patch
    matrix evaluated only at pooled output positions.  ceil_mode is handled by
    clamping out-of-range conv-output indices to the last valid index (the
    duplicate is already inside the pool window, so the max is unchanged).
    Returns 4 arrays of shape (B*PH*PW, C*kh*kw) and (B, PH, PW)."""
    B, C, H, W = x.shape
    OH = (H + 2 * pad - kh) // stride + 1
    OW = (W + 2 * pad - kw) // stride + 1
    PH, PW = _ceil_div(OH, 2), _ceil_div(OW, 2)
    xp = jnp.pad(x, ((0, 0), (0, 0), (pad, pad), (pad, pad)))
    cols = []
    for i in range(kh):
        for j in range(kw):
            cols.append(xp[:, :,
                           i:i + stride * (OH - 1) + 1:stride,
                           j:j + stride * (OW - 1) + 1:stride])
    p = jnp.stack(cols, axis=0)            # (kh*kw, B, C, OH, OW)
    p = p.transpose(1, 3, 4, 2, 0)         # (B, OH, OW, C, kh*kw)
    p = p.reshape(B, OH, OW, C * kh * kw)  # feature order matches W.reshape(Cout,-1)
    slabs = []
    for di in (0, 1):
        oh = [min(2 * r + di, OH - 1) for r in range(PH)]
        for dj in (0, 1):
            ow = [min(2 * c + dj, OW - 1) for c in range(PW)]
            s = p[:, oh][:, :, ow]         # (B, PH, PW, K)
            slabs.append(s.reshape(B * PH * PW, C * kh * kw))
    return slabs, (B, PH, PW)


# ----------------------------------------------------------------------------
# pallas_call wrappers
# ----------------------------------------------------------------------------
def _full_spec(shape):
    nd = len(shape)
    return pl.BlockSpec(shape, lambda i, _nd=nd: (0,) * _nd)


def conv1_pool(x, w_cm, b_cm):
    """conv1(8x8, stride 4, pad 2) + ReLU + maxpool1, channels-major output
    (32, B*10*10) with the big spatial*batch dimension on lanes."""
    slabs, (B, PH, PW) = _conv_pool_slabs(x, 8, 8, 4, 2)
    M = B * PH * PW
    K = slabs[0].shape[1]
    Cout = w_cm.shape[0]
    slabs_t = [s.T for s in slabs]                      # (K, M), M on lanes

    # Optional M-tiling: only when a lane-aligned tile divides M (keeps the
    # kernel batch-scalable on v7x's 64 MiB VMEM / 2 TensorCores); otherwise a
    # single full block (the B=4 demo case).
    tm = M
    for cand in (2048, 1024, 512, 256):
        if M > cand and M % cand == 0:
            tm = cand
            break
    grid = (M // tm,)

    out = pl.pallas_call(
        _conv_pool_kernel_cm,
        out_shape=jax.ShapeDtypeStruct((Cout, M), jnp.float32),
        grid=grid,
        in_specs=[pl.BlockSpec((K, tm), lambda i: (0, i))] * 4
                 + [pl.BlockSpec((Cout, K), lambda i: (0, 0)),
                    pl.BlockSpec((Cout, 1), lambda i: (0, 0))],
        out_specs=pl.BlockSpec((Cout, tm), lambda i: (0, i)),
        compiler_params=pltpu.CompilerParams(
            dimension_semantics=("parallel",)),
    )(*slabs_t, w_cm, b_cm)
    return out, (B, PH, PW)


def conv_pool_rm(x, w_rm, b_rm, kh, kw, stride, pad):
    """Fused conv+ReLU+maxpool for the tiny stages 2/3 (single full block)."""
    slabs, (B, PH, PW) = _conv_pool_slabs(x, kh, kw, stride, pad)
    M, K = slabs[0].shape
    Cout = w_rm.shape[1]
    out = pl.pallas_call(
        _conv_pool_kernel_rm,
        out_shape=jax.ShapeDtypeStruct((M, Cout), jnp.float32),
        grid=(1,),
        in_specs=[_full_spec((M, K))] * 4
                 + [_full_spec((K, Cout)), _full_spec((1, Cout))],
        out_specs=_full_spec((M, Cout)),
        compiler_params=pltpu.CompilerParams(
            dimension_semantics=("arbitrary",)),
    )(*slabs, w_rm, b_rm)
    return out, (B, PH, PW)


def gru_fc(x, wih_t, whh_t, bih, bhh, w1_t, b1, w2_t_pad, b2_pad):
    T, H = x.shape                     # H = 256
    NP = w2_t_pad.shape[1]             # 128 (fc2 padded to lane width)
    return pl.pallas_call(
        _gru_fc_kernel,
        out_shape=jax.ShapeDtypeStruct((T, NP), jnp.float32),
        grid=(1,),
        in_specs=[
            _full_spec((T, H)),
            _full_spec((H, 3 * H)), _full_spec((H, 3 * H)),
            _full_spec((1, 3 * H)), _full_spec((1, 3 * H)),
            _full_spec((H, 128)), _full_spec((1, 128)),
            _full_spec((128, NP)), _full_spec((1, NP)),
        ],
        out_specs=_full_spec((T, NP)),
        scratch_shapes=[
            pltpu.VMEM((T, 3 * H), jnp.float32),   # input-gate projections
            pltpu.VMEM((1, H), jnp.float32),       # hidden state
            pltpu.VMEM((T, H), jnp.float32),       # rnn outputs
        ],
        compiler_params=pltpu.CompilerParams(
            dimension_semantics=("arbitrary",)),
    )(x, wih_t, whh_t, bih, bhh, w1_t, b1, w2_t_pad, b2_pad)


# ----------------------------------------------------------------------------
# Forward pass
# ----------------------------------------------------------------------------
@jax.jit
def deep_rqnet_forward(x, params):
    x = x.reshape(-1, 1, 80, 80).astype(jnp.float32)
    B = x.shape[0]

    # Stage 1: conv1 + ReLU + maxpool1 (fused), lane-dense (32, B*100) output.
    y1, (_, PH1, PW1) = conv1_pool(x, params["c1_w_cm"], params["c1_b_cm"])
    y1 = y1.reshape(32, B, PH1, PW1).transpose(1, 0, 2, 3)          # (B,32,10,10)

    # Stage 2: conv2 + ReLU + maxpool2 (fused).
    y2, (_, PH2, PW2) = conv_pool_rm(y1, params["c2_w_rm"], params["c2_b_rm"],
                                     4, 4, 2, 1)                    # (B*9, 64)
    y2 = y2.reshape(B, PH2, PW2, 64).transpose(0, 3, 1, 2)          # (B,64,3,3)

    # Stage 3: conv3 + ReLU + maxpool3 (fused).
    y3, (_, PH3, PW3) = conv_pool_rm(y2, params["c3_w_rm"], params["c3_b_rm"],
                                     3, 3, 1, 1)                    # (B*4, 64)
    # Flatten in PyTorch (B, 64, 2, 2) -> (B, 256) order.
    flat = y3.reshape(B, PH3, PW3, 64).transpose(0, 3, 1, 2).reshape(B, 256)

    # GRU over the leading (batch) dim as the time dim (batch_first=False,
    # inner batch = 1 — exactly the reference module's unsqueeze(1)), + fc1/fc2.
    out = gru_fc(flat,
                 params["gru_wih_t"], params["gru_whh_t"],
                 params["gru_bih"], params["gru_bhh"],
                 params["fc1_w_t"], params["fc1_b"],
                 params["fc2_w_t_pad"], params["fc2_b_pad"])        # (B, 128)
    return out[:, :3]


# ----------------------------------------------------------------------------
# Parameters: raw PyTorch-layout init + one-time kernel-layout preparation
# ----------------------------------------------------------------------------
def init_params(key):
    ks = jax.random.split(key, 14)
    n = lambda k, s, sc=0.05: (sc * jax.random.normal(k, s)).astype(jnp.float32)
    return {
        "c1_w": n(ks[0], (32, 1, 8, 8)),   "c1_b": n(ks[1], (32,)),
        "c2_w": n(ks[2], (64, 32, 4, 4)),  "c2_b": n(ks[3], (64,)),
        "c3_w": n(ks[4], (64, 64, 3, 3)),  "c3_b": n(ks[5], (64,)),
        "gru_wih": n(ks[6], (768, 256)),   "gru_whh": n(ks[7], (768, 256)),
        "gru_bih": n(ks[8], (768,)),       "gru_bhh": n(ks[9], (768,)),
        "fc1_w": n(ks[10], (128, 256)),    "fc1_b": n(ks[11], (128,)),
        "fc2_w": n(ks[12], (3, 128)),      "fc2_b": n(ks[13], (3,)),
    }


def prepare_params(raw):
    """One-time layout prep (outside the jitted forward): reshape / transpose /
    pad the PyTorch-layout weights into the kernel-friendly layouts."""
    p = {}
    # conv1 (channels-major kernel): (Cout, K) weight, (Cout, 1) bias.
    p["c1_w_cm"] = raw["c1_w"].reshape(32, 1 * 8 * 8)
    p["c1_b_cm"] = raw["c1_b"].reshape(32, 1)
    # conv2/conv3 (rows-major kernel): (K, Cout) weight, (1, Cout) bias.
    p["c2_w_rm"] = raw["c2_w"].reshape(64, 32 * 4 * 4).T
    p["c2_b_rm"] = raw["c2_b"].reshape(1, 64)
    p["c3_w_rm"] = raw["c3_w"].reshape(64, 64 * 3 * 3).T
    p["c3_b_rm"] = raw["c3_b"].reshape(1, 64)
    # GRU / FC: pre-transposed once here.
    p["gru_wih_t"] = raw["gru_wih"].T                     # (256, 768)
    p["gru_whh_t"] = raw["gru_whh"].T                     # (256, 768)
    p["gru_bih"] = raw["gru_bih"].reshape(1, 768)
    p["gru_bhh"] = raw["gru_bhh"].reshape(1, 768)
    p["fc1_w_t"] = raw["fc1_w"].T                         # (256, 128)
    p["fc1_b"] = raw["fc1_b"].reshape(1, 128)
    # fc2 zero-padded to 128 output columns -> lane-dense store in the kernel.
    p["fc2_w_t_pad"] = jnp.pad(raw["fc2_w"].T, ((0, 0), (0, 125)))   # (128, 128)
    p["fc2_b_pad"] = jnp.pad(raw["fc2_b"].reshape(1, 3), ((0, 0), (0, 125)))
    return p


if __name__ == "__main__":
    key = jax.random.PRNGKey(0)
    k_params, k_x = jax.random.split(key)
    raw = init_params(k_params)
    params = prepare_params(raw)

    # 80x80 spatial size is fixed by the architecture (flatten -> 256).
    x = jax.random.normal(k_x, (4, 1, 80, 80), dtype=jnp.float32)

    out = deep_rqnet_forward(x, params)
    out = jax.block_until_ready(out)

    assert out.shape == (4, 3), out.shape
    assert bool(jnp.all(jnp.isfinite(out)))
    print("KERNEL_OK")
</pallas_src>

<mosaic_0001>
module attributes {stable_mosaic.version = 11 : i64} {
  func.func @_conv_pool_kernel_cm(%arg0: i32, %arg1: memref<64x400xf32, #tpu.memory_space<vmem>>, %arg2: memref<64x400xf32, #tpu.memory_space<vmem>>, %arg3: memref<64x400xf32, #tpu.memory_space<vmem>>, %arg4: memref<64x400xf32, #tpu.memory_space<vmem>>, %arg5: memref<32x64xf32, #tpu.memory_space<vmem>>, %arg6: memref<32x1xf32, #tpu.memory_space<vmem>>, %arg7: memref<32x400xf32, #tpu.memory_space<vmem>>) attributes {dimension_semantics = [#tpu.dimension_semantics<parallel>], iteration_bounds = array<i64: 1>, scalar_prefetch = 0 : i64, scratch_operands = 0 : i64, tpu.core_type = #tpu.core_type<tc>, window_params = [{transform_indices = @transform_0, window_bounds = array<i64: 64, 400>}, {transform_indices = @transform_1, window_bounds = array<i64: 64, 400>}, {transform_indices = @transform_2, window_bounds = array<i64: 64, 400>}, {transform_indices = @transform_3, window_bounds = array<i64: 64, 400>}, {pipeline_mode = #tpu.pipeline_mode<synchronous>, transform_indices = @transform_4, window_bounds = array<i64: 32, 64>}, {pipeline_mode = #tpu.pipeline_mode<synchronous>, transform_indices = @transform_5, window_bounds = array<i64: 32, 1>}, {transform_indices = @transform_6, window_bounds = array<i64: 32, 400>}]} {
    %c0 = arith.constant 0 : index
    %c0_0 = arith.constant 0 : index
    %0 = vector.load %arg5[%c0, %c0_0] : memref<32x64xf32, #tpu.memory_space<vmem>>, vector<32x64xf32>
    %c0_1 = arith.constant 0 : index
    %c0_2 = arith.constant 0 : index
    %1 = vector.load %arg1[%c0_1, %c0_2] : memref<64x400xf32, #tpu.memory_space<vmem>>, vector<64x400xf32>
    %cst = arith.constant dense<0.000000e+00> : vector<32x400xf32>
    %2 = tpu.matmul %0, %1, %cst {dimension_numbers = #tpu.dot_dimension_numbers<[1], [0], [0], [1], [0, 0, 1, 1], [], []>} : vector<32x64xf32>, vector<64x400xf32>, vector<32x400xf32> -> vector<32x400xf32>
    %c0_3 = arith.constant 0 : index
    %c0_4 = arith.constant 0 : index
    %3 = vector.load %arg2[%c0_3, %c0_4] : memref<64x400xf32, #tpu.memory_space<vmem>>, vector<64x400xf32>
    %cst_5 = arith.constant dense<0.000000e+00> : vector<32x400xf32>
    %4 = tpu.matmul %0, %3, %cst_5 {dimension_numbers = #tpu.dot_dimension_numbers<[1], [0], [0], [1], [0, 0, 1, 1], [], []>} : vector<32x64xf32>, vector<64x400xf32>, vector<32x400xf32> -> vector<32x400xf32>
    %5 = arith.maximumf %2, %4 : vector<32x400xf32>
    %c0_6 = arith.constant 0 : index
    %c0_7 = arith.constant 0 : index
    %6 = vector.load %arg3[%c0_6, %c0_7] : memref<64x400xf32, #tpu.memory_space<vmem>>, vector<64x400xf32>
    %cst_8 = arith.constant dense<0.000000e+00> : vector<32x400xf32>
    %7 = tpu.matmul %0, %6, %cst_8 {dimension_numbers = #tpu.dot_dimension_numbers<[1], [0], [0], [1], [0, 0, 1, 1], [], []>} : vector<32x64xf32>, vector<64x400xf32>, vector<32x400xf32> -> vector<32x400xf32>
    %c0_9 = arith.constant 0 : index
    %c0_10 = arith.constant 0 : index
    %8 = vector.load %arg4[%c0_9, %c0_10] : memref<64x400xf32, #tpu.memory_space<vmem>>, vector<64x400xf32>
    %cst_11 = arith.constant dense<0.000000e+00> : vector<32x400xf32>
    %9 = tpu.matmul %0, %8, %cst_11 {dimension_numbers = #tpu.dot_dimension_numbers<[1], [0], [0], [1], [0, 0, 1, 1], [], []>} : vector<32x64xf32>, vector<64x400xf32>, vector<32x400xf32> -> vector<32x400xf32>
    %10 = arith.maximumf %7, %9 : vector<32x400xf32>
    %11 = arith.maximumf %5, %10 : vector<32x400xf32>
    %c0_12 = arith.constant 0 : index
    %c0_13 = arith.constant 0 : index
    %12 = vector.load %arg6[%c0_12, %c0_13] : memref<32x1xf32, #tpu.memory_space<vmem>>, vector<32x1xf32>
    %13 = vector.broadcast %12 : vector<32x1xf32> to vector<32x400xf32>
    %14 = arith.addf %11, %13 : vector<32x400xf32>
    %cst_14 = arith.constant 0.000000e+00 : f32
    %15 = vector.broadcast %cst_14 : f32 to vector<32x400xf32>
    %16 = arith.maximumf %14, %15 : vector<32x400xf32>
    %c0_15 = arith.constant 0 : index
    %c0_16 = arith.constant 0 : index
    %17 = vector.load %arg7[%c0_15, %c0_16] : memref<32x400xf32, #tpu.memory_space<vmem>>, vector<32x400xf32>
    tpu.vector_store %arg7[%c0_15, %c0_16], %16 {strides = array<i32>} : memref<32x400xf32, #tpu.memory_space<vmem>>, vector<32x400xf32>,
    return
  }
  func.func @transform_0(%arg0: i32) -> (i32, i32) {
    %c0_i32 = arith.constant 0 : i32
    %c0_i32_0 = arith.constant 0 : i32
    return %c0_i32, %arg0 : i32, i32
  }
  func.func @transform_1(%arg0: i32) -> (i32, i32) {
    %c0_i32 = arith.constant 0 : i32
    %c0_i32_0 = arith.constant 0 : i32
    return %c0_i32, %arg0 : i32, i32
  }
  func.func @transform_2(%arg0: i32) -> (i32, i32) {
    %c0_i32 = arith.constant 0 : i32
    %c0_i32_0 = arith.constant 0 : i32
    return %c0_i32, %arg0 : i32, i32
  }
  func.func @transform_3(%arg0: i32) -> (i32, i32) {
    %c0_i32 = arith.constant 0 : i32
    %c0_i32_0 = arith.constant 0 : i32
    return %c0_i32, %arg0 : i32, i32
  }
  func.func @transform_4(%arg0: i32) -> (i32, i32) {
    %c0_i32 = arith.constant 0 : i32
    %c0_i32_0 = arith.constant 0 : i32
    %c0_i32_1 = arith.constant 0 : i32
    return %c0_i32, %c0_i32_0 : i32, i32
  }
  func.func @transform_5(%arg0: i32) -> (i32, i32) {
    %c0_i32 = arith.constant 0 : i32
    %c0_i32_0 = arith.constant 0 : i32
    %c0_i32_1 = arith.constant 0 : i32
    return %c0_i32, %c0_i32_0 : i32, i32
  }
  func.func @transform_6(%arg0: i32) -> (i32, i32) {
    %c0_i32 = arith.constant 0 : i32
    %c0_i32_0 = arith.constant 0 : i32
    return %c0_i32, %arg0 : i32, i32
  }
}

module attributes {stable_mosaic.version = 11 : i64} {
  func.func @_conv_pool_kernel_rm(%arg0: i32, %arg1: memref<36x512xf32, #tpu.memory_space<vmem>>, %arg2: memref<36x512xf32, #tpu.memory_space<vmem>>, %arg3: memref<36x512xf32, #tpu.memory_space<vmem>>, %arg4: memref<36x512xf32, #tpu.memory_space<vmem>>, %arg5: memref<512x64xf32, #tpu.memory_space<vmem>>, %arg6: memref<1x64xf32, #tpu.memory_space<vmem>>, %arg7: memref<36x64xf32, #tpu.memory_space<vmem>>) attributes {dimension_semantics = [#tpu.dimension_semantics<arbitrary>], iteration_bounds = array<i64: 1>, scalar_prefetch = 0 : i64, scratch_operands = 0 : i64, tpu.core_type = #tpu.core_type<tc>, window_params = [{pipeline_mode = #tpu.pipeline_mode<synchronous>, transform_indices = @transform_0, window_bounds = array<i64: 36, 512>}, {pipeline_mode = #tpu.pipeline_mode<synchronous>, transform_indices = @transform_1, window_bounds = array<i64: 36, 512>}, {pipeline_mode = #tpu.pipeline_mode<synchronous>, transform_indices = @transform_2, window_bounds = array<i64: 36, 512>}, {pipeline_mode = #tpu.pipeline_mode<synchronous>, transform_indices = @transform_3, window_bounds = array<i64: 36, 512>}, {pipeline_mode = #tpu.pipeline_mode<synchronous>, transform_indices = @transform_4, window_bounds = array<i64: 512, 64>}, {pipeline_mode = #tpu.pipeline_mode<synchronous>, transform_indices = @transform_5, window_bounds = array<i64: 1, 64>}, {pipeline_mode = #tpu.pipeline_mode<synchronous>, transform_indices = @transform_6, window_bounds = array<i64: 36, 64>}]} {
    %c0 = arith.constant 0 : index
    %c0_0 = arith.constant 0 : index
    %0 = vector.load %arg5[%c0, %c0_0] : memref<512x64xf32, #tpu.memory_space<vmem>>, vector<512x64xf32>
    %c0_1 = arith.constant 0 : index
    %c0_2 = arith.constant 0 : index
    %1 = vector.load %arg1[%c0_1, %c0_2] : memref<36x512xf32, #tpu.memory_space<vmem>>, vector<36x512xf32>
    %cst = arith.constant dense<0.000000e+00> : vector<36x64xf32>
    %2 = tpu.matmul %1, %0, %cst {dimension_numbers = #tpu.dot_dimension_numbers<[1], [0], [0], [1], [0, 0, 1, 1], [], []>} : vector<36x512xf32>, vector<512x64xf32>, vector<36x64xf32> -> vector<36x64xf32>
    %c0_3 = arith.constant 0 : index
    %c0_4 = arith.constant 0 : index
    %3 = vector.load %arg2[%c0_3, %c0_4] : memref<36x512xf32, #tpu.memory_space<vmem>>, vector<36x512xf32>
    %cst_5 = arith.constant dense<0.000000e+00> : vector<36x64xf32>
    %4 = tpu.matmul %3, %0, %cst_5 {dimension_numbers = #tpu.dot_dimension_numbers<[1], [0], [0], [1], [0, 0, 1, 1], [], []>} : vector<36x512xf32>, vector<512x64xf32>, vector<36x64xf32> -> vector<36x64xf32>
    %5 = arith.maximumf %2, %4 : vector<36x64xf32>
    %c0_6 = arith.constant 0 : index
    %c0_7 = arith.constant 0 : index
    %6 = vector.load %arg3[%c0_6, %c0_7] : memref<36x512xf32, #tpu.memory_space<vmem>>, vector<36x512xf32>
    %cst_8 = arith.constant dense<0.000000e+00> : vector<36x64xf32>
    %7 = tpu.matmul %6, %0, %cst_8 {dimension_numbers = #tpu.dot_dimension_numbers<[1], [0], [0], [1], [0, 0, 1, 1], [], []>} : vector<36x512xf32>, vector<512x64xf32>, vector<36x64xf32> -> vector<36x64xf32>
    %c0_9 = arith.constant 0 : index
    %c0_10 = arith.constant 0 : index
    %8 = vector.load %arg4[%c0_9, %c0_10] : memref<36x512xf32, #tpu.memory_space<vmem>>, vector<36x512xf32>
    %cst_11 = arith.constant dense<0.000000e+00> : vector<36x64xf32>
    %9 = tpu.matmul %8, %0, %cst_11 {dimension_numbers = #tpu.dot_dimension_numbers<[1], [0], [0], [1], [0, 0, 1, 1], [], []>} : vector<36x512xf32>, vector<512x64xf32>, vector<36x64xf32> -> vector<36x64xf32>
    %10 = arith.maximumf %7, %9 : vector<36x64xf32>
    %11 = arith.maximumf %5, %10 : vector<36x64xf32>
    %c0_12 = arith.constant 0 : index
    %c0_13 = arith.constant 0 : index
    %12 = vector.load %arg6[%c0_12, %c0_13] : memref<1x64xf32, #tpu.memory_space<vmem>>, vector<1x64xf32>
    %13 = vector.broadcast %12 : vector<1x64xf32> to vector<36x64xf32>
    %14 = arith.addf %11, %13 : vector<36x64xf32>
    %cst_14 = arith.constant 0.000000e+00 : f32
    %15 = vector.broadcast %cst_14 : f32 to vector<36x64xf32>
    %16 = arith.maximumf %14, %15 : vector<36x64xf32>
    %c0_15 = arith.constant 0 : index
    %c0_16 = arith.constant 0 : index
    %17 = vector.load %arg7[%c0_15, %c0_16] : memref<36x64xf32, #tpu.memory_space<vmem>>, vector<36x64xf32>
    tpu.vector_store %arg7[%c0_15, %c0_16], %16 {strides = array<i32>} : memref<36x64xf32, #tpu.memory_space<vmem>>, vector<36x64xf32>,
    return
  }
  func.func @transform_0(%arg0: i32) -> (i32, i32) {
    %c0_i32 = arith.constant 0 : i32
    %c0_i32_0 = arith.constant 0 : i32
    %c0_i32_1 = arith.constant 0 : i32
    return %c0_i32, %c0_i32_0 : i32, i32
  }
  func.func @transform_1(%arg0: i32) -> (i32, i32) {
    %c0_i32 = arith.constant 0 : i32
    %c0_i32_0 = arith.constant 0 : i32
    %c0_i32_1 = arith.constant 0 : i32
    return %c0_i32, %c0_i32_0 : i32, i32
  }
  func.func @transform_2(%arg0: i32) -> (i32, i32) {
    %c0_i32 = arith.constant 0 : i32
    %c0_i32_0 = arith.constant 0 : i32
    %c0_i32_1 = arith.constant 0 : i32
    return %c0_i32, %c0_i32_0 : i32, i32
  }
  func.func @transform_3(%arg0: i32) -> (i32, i32) {
    %c0_i32 = arith.constant 0 : i32
    %c0_i32_0 = arith.constant 0 : i32
    %c0_i32_1 = arith.constant 0 : i32
    return %c0_i32, %c0_i32_0 : i32, i32
  }
  func.func @transform_4(%arg0: i32) -> (i32, i32) {
    %c0_i32 = arith.constant 0 : i32
    %c0_i32_0 = arith.constant 0 : i32
    %c0_i32_1 = arith.constant 0 : i32
    return %c0_i32, %c0_i32_0 : i32, i32
  }
  func.func @transform_5(%arg0: i32) -> (i32, i32) {
    %c0_i32 = arith.constant 0 : i32
    %c0_i32_0 = arith.constant 0 : i32
    %c0_i32_1 = arith.constant 0 : i32
    return %c0_i32, %c0_i32_0 : i32, i32
  }
  func.func @transform_6(%arg0: i32) -> (i32, i32) {
    %c0_i32 = arith.constant 0 : i32
    %c0_i32_0 = arith.constant 0 : i32
    %c0_i32_1 = arith.constant 0 : i32
    return %c0_i32, %c0_i32_0 : i32, i32
  }
}

module attributes {stable_mosaic.version = 11 : i64} {
  func.func @_conv_pool_kernel_rm(%arg0: i32, %arg1: memref<16x576xf32, #tpu.memory_space<vmem>>, %arg2: memref<16x576xf32, #tpu.memory_space<vmem>>, %arg3: memref<16x576xf32, #tpu.memory_space<vmem>>, %arg4: memref<16x576xf32, #tpu.memory_space<vmem>>, %arg5: memref<576x64xf32, #tpu.memory_space<vmem>>, %arg6: memref<1x64xf32, #tpu.memory_space<vmem>>, %arg7: memref<16x64xf32, #tpu.memory_space<vmem>>) attributes {dimension_semantics = [#tpu.dimension_semantics<arbitrary>], iteration_bounds = array<i64: 1>, scalar_prefetch = 0 : i64, scratch_operands = 0 : i64, tpu.core_type = #tpu.core_type<tc>, window_params = [{pipeline_mode = #tpu.pipeline_mode<synchronous>, transform_indices = @transform_0, window_bounds = array<i64: 16, 576>}, {pipeline_mode = #tpu.pipeline_mode<synchronous>, transform_indices = @transform_1, window_bounds = array<i64: 16, 576>}, {pipeline_mode = #tpu.pipeline_mode<synchronous>, transform_indices = @transform_2, window_bounds = array<i64: 16, 576>}, {pipeline_mode = #tpu.pipeline_mode<synchronous>, transform_indices = @transform_3, window_bounds = array<i64: 16, 576>}, {pipeline_mode = #tpu.pipeline_mode<synchronous>, transform_indices = @transform_4, window_bounds = array<i64: 576, 64>}, {pipeline_mode = #tpu.pipeline_mode<synchronous>, transform_indices = @transform_5, window_bounds = array<i64: 1, 64>}, {pipeline_mode = #tpu.pipeline_mode<synchronous>, transform_indices = @transform_6, window_bounds = array<i64: 16, 64>}]} {
    %c0 = arith.constant 0 : index
    %c0_0 = arith.constant 0 : index
    %0 = vector.load %arg5[%c0, %c0_0] : memref<576x64xf32, #tpu.memory_space<vmem>>, vector<576x64xf32>
    %c0_1 = arith.constant 0 : index
    %c0_2 = arith.constant 0 : index
    %1 = vector.load %arg1[%c0_1, %c0_2] : memref<16x576xf32, #tpu.memory_space<vmem>>, vector<16x576xf32>
    %cst = arith.constant dense<0.000000e+00> : vector<16x64xf32>
    %2 = tpu.matmul %1, %0, %cst {dimension_numbers = #tpu.dot_dimension_numbers<[1], [0], [0], [1], [0, 0, 1, 1], [], []>} : vector<16x576xf32>, vector<576x64xf32>, vector<16x64xf32> -> vector<16x64xf32>
    %c0_3 = arith.constant 0 : index
    %c0_4 = arith.constant 0 : index
    %3 = vector.load %arg2[%c0_3, %c0_4] : memref<16x576xf32, #tpu.memory_space<vmem>>, vector<16x576xf32>
    %cst_5 = arith.constant dense<0.000000e+00> : vector<16x64xf32>
    %4 = tpu.matmul %3, %0, %cst_5 {dimension_numbers = #tpu.dot_dimension_numbers<[1], [0], [0], [1], [0, 0, 1, 1], [], []>} : vector<16x576xf32>, vector<576x64xf32>, vector<16x64xf32> -> vector<16x64xf32>
    %5 = arith.maximumf %2, %4 : vector<16x64xf32>
    %c0_6 = arith.constant 0 : index
    %c0_7 = arith.constant 0 : index
    %6 = vector.load %arg3[%c0_6, %c0_7] : memref<16x576xf32, #tpu.memory_space<vmem>>, vector<16x576xf32>
    %cst_8 = arith.constant dense<0.000000e+00> : vector<16x64xf32>
    %7 = tpu.matmul %6, %0, %cst_8 {dimension_numbers = #tpu.dot_dimension_numbers<[1], [0], [0], [1], [0, 0, 1, 1], [], []>} : vector<16x576xf32>, vector<576x64xf32>, vector<16x64xf32> -> vector<16x64xf32>
    %c0_9 = arith.constant 0 : index
    %c0_10 = arith.constant 0 : index
    %8 = vector.load %arg4[%c0_9, %c0_10] : memref<16x576xf32, #tpu.memory_space<vmem>>, vector<16x576xf32>
    %cst_11 = arith.constant dense<0.000000e+00> : vector<16x64xf32>
    %9 = tpu.matmul %8, %0, %cst_11 {dimension_numbers = #tpu.dot_dimension_numbers<[1], [0], [0], [1], [0, 0, 1, 1], [], []>} : vector<16x576xf32>, vector<576x64xf32>, vector<16x64xf32> -> vector<16x64xf32>
    %10 = arith.maximumf %7, %9 : vector<16x64xf32>
    %11 = arith.maximumf %5, %10 : vector<16x64xf32>
    %c0_12 = arith.constant 0 : index
    %c0_13 = arith.constant 0 : index
    %12 = vector.load %arg6[%c0_12, %c0_13] : memref<1x64xf32, #tpu.memory_space<vmem>>, vector<1x64xf32>
    %13 = vector.broadcast %12 : vector<1x64xf32> to vector<16x64xf32>
    %14 = arith.addf %11, %13 : vector<16x64xf32>
    %cst_14 = arith.constant 0.000000e+00 : f32
    %15 = vector.broadcast %cst_14 : f32 to vector<16x64xf32>
    %16 = arith.maximumf %14, %15 : vector<16x64xf32>
    %c0_15 = arith.constant 0 : index
    %c0_16 = arith.constant 0 : index
    %17 = vector.load %arg7[%c0_15, %c0_16] : memref<16x64xf32, #tpu.memory_space<vmem>>, vector<16x64xf32>
    tpu.vector_store %arg7[%c0_15, %c0_16], %16 {strides = array<i32>} : memref<16x64xf32, #tpu.memory_space<vmem>>, vector<16x64xf32>,
    return
  }
  func.func @transform_0(%arg0: i32) -> (i32, i32) {
    %c0_i32 = arith.constant 0 : i32
    %c0_i32_0 = arith.constant 0 : i32
    %c0_i32_1 = arith.constant 0 : i32
    return %c0_i32, %c0_i32_0 : i32, i32
  }
  func.func @transform_1(%arg0: i32) -> (i32, i32) {
    %c0_i32 = arith.constant 0 : i32
    %c0_i32_0 = arith.constant 0 : i32
    %c0_i32_1 = arith.constant 0 : i32
    return %c0_i32, %c0_i32_0 : i32, i32
  }
  func.func @transform_2(%arg0: i32) -> (i32, i32) {
    %c0_i32 = arith.constant 0 : i32
    %c0_i32_0 = arith.constant 0 : i32
    %c0_i32_1 = arith.constant 0 : i32
    return %c0_i32, %c0_i32_0 : i32, i32
  }
  func.func @transform_3(%arg0: i32) -> (i32, i32) {
    %c0_i32 = arith.constant 0 : i32
    %c0_i32_0 = arith.constant 0 : i32
    %c0_i32_1 = arith.constant 0 : i32
    return %c0_i32, %c0_i32_0 : i32, i32
  }
  func.func @transform_4(%arg0: i32) -> (i32, i32) {
    %c0_i32 = arith.constant 0 : i32
    %c0_i32_0 = arith.constant 0 : i32
    %c0_i32_1 = arith.constant 0 : i32
    return %c0_i32, %c0_i32_0 : i32, i32
  }
  func.func @transform_5(%arg0: i32) -> (i32, i32) {
    %c0_i32 = arith.constant 0 : i32
    %c0_i32_0 = arith.constant 0 : i32
    %c0_i32_1 = arith.constant 0 : i32
    return %c0_i32, %c0_i32_0 : i32, i32
  }
  func.func @transform_6(%arg0: i32) -> (i32, i32) {
    %c0_i32 = arith.constant 0 : i32
    %c0_i32_0 = arith.constant 0 : i32
    %c0_i32_1 = arith.constant 0 : i32
    return %c0_i32, %c0_i32_0 : i32, i32
  }
}

module attributes {stable_mosaic.version = 11 : i64} {
  func.func @_gru_fc_kernel(%arg0: i32, %arg1: memref<4x256xf32, #tpu.memory_space<vmem>>, %arg2: memref<256x768xf32, #tpu.memory_space<vmem>>, %arg3: memref<256x768xf32, #tpu.memory_space<vmem>>, %arg4: memref<1x768xf32, #tpu.memory_space<vmem>>, %arg5: memref<1x768xf32, #tpu.memory_space<vmem>>, %arg6: memref<256x128xf32, #tpu.memory_space<vmem>>, %arg7: memref<1x128xf32, #tpu.memory_space<vmem>>, %arg8: memref<128x128xf32, #tpu.memory_space<vmem>>, %arg9: memref<1x128xf32, #tpu.memory_space<vmem>>, %arg10: memref<4x128xf32, #tpu.memory_space<vmem>>, %arg11: memref<4x768xf32, #tpu.memory_space<vmem>>, %arg12: memref<1x256xf32, #tpu.memory_space<vmem>>, %arg13: memref<4x256xf32, #tpu.memory_space<vmem>>) attributes {dimension_semantics = [#tpu.dimension_semantics<arbitrary>], iteration_bounds = array<i64: 1>, scalar_prefetch = 0 : i64, scratch_operands = 3 : i64, tpu.core_type = #tpu.core_type<tc>, window_params = [{pipeline_mode = #tpu.pipeline_mode<synchronous>, transform_indices = @transform_0, window_bounds = array<i64: 4, 256>}, {pipeline_mode = #tpu.pipeline_mode<synchronous>, transform_indices = @transform_1, window_bounds = array<i64: 256, 768>}, {pipeline_mode = #tpu.pipeline_mode<synchronous>, transform_indices = @transform_2, window_bounds = array<i64: 256, 768>}, {pipeline_mode = #tpu.pipeline_mode<synchronous>, transform_indices = @transform_3, window_bounds = array<i64: 1, 768>}, {pipeline_mode = #tpu.pipeline_mode<synchronous>, transform_indices = @transform_4, window_bounds = array<i64: 1, 768>}, {pipeline_mode = #tpu.pipeline_mode<synchronous>, transform_indices = @transform_5, window_bounds = array<i64: 256, 128>}, {pipeline_mode = #tpu.pipeline_mode<synchronous>, transform_indices = @transform_6, window_bounds = array<i64: 1, 128>}, {pipeline_mode = #tpu.pipeline_mode<synchronous>, transform_indices = @transform_7, window_bounds = array<i64: 128, 128>}, {pipeline_mode = #tpu.pipeline_mode<synchronous>, transform_indices = @transform_8, window_bounds = array<i64: 1, 128>}, {pipeline_mode = #tpu.pipeline_mode<synchronous>, transform_indices = @transform_9, window_bounds = array<i64: 4, 128>}]} {
    %c0 = arith.constant 0 : index
    %c0_0 = arith.constant 0 : index
    %0 = vector.load %arg1[%c0, %c0_0] : memref<4x256xf32, #tpu.memory_space<vmem>>, vector<4x256xf32>
    %c0_1 = arith.constant 0 : index
    %c0_2 = arith.constant 0 : index
    %1 = vector.load %arg2[%c0_1, %c0_2] : memref<256x768xf32, #tpu.memory_space<vmem>>, vector<256x768xf32>
    %cst = arith.constant dense<0.000000e+00> : vector<4x768xf32>
    %2 = tpu.matmul %0, %1, %cst {dimension_numbers = #tpu.dot_dimension_numbers<[1], [0], [0], [1], [0, 0, 1, 1], [], []>} : vector<4x256xf32>, vector<256x768xf32>, vector<4x768xf32> -> vector<4x768xf32>
    %c0_3 = arith.constant 0 : index
    %c0_4 = arith.constant 0 : index
    %3 = vector.load %arg4[%c0_3, %c0_4] : memref<1x768xf32, #tpu.memory_space<vmem>>, vector<1x768xf32>
    %4 = vector.broadcast %3 : vector<1x768xf32> to vector<4x768xf32>
    %5 = arith.addf %2, %4 : vector<4x768xf32>
    %c0_5 = arith.constant 0 : index
    %c0_6 = arith.constant 0 : index
    %6 = vector.load %arg11[%c0_5, %c0_6] : memref<4x768xf32, #tpu.memory_space<vmem>>, vector<4x768xf32>
    tpu.vector_store %arg11[%c0_5, %c0_6], %5 {strides = array<i32>} : memref<4x768xf32, #tpu.memory_space<vmem>>, vector<4x768xf32>,
    %cst_7 = arith.constant 0.000000e+00 : f32
    %7 = vector.broadcast %cst_7 : f32 to vector<1x256xf32>
    %c0_8 = arith.constant 0 : index
    %c0_9 = arith.constant 0 : index
    %8 = vector.load %arg12[%c0_8, %c0_9] : memref<1x256xf32, #tpu.memory_space<vmem>>, vector<1x256xf32>
    tpu.vector_store %arg12[%c0_8, %c0_9], %7 {strides = array<i32>} : memref<1x256xf32, #tpu.memory_space<vmem>>, vector<1x256xf32>,
    %c0_10 = arith.constant 0 : index
    %c0_11 = arith.constant 0 : index
    %9 = vector.load %arg3[%c0_10, %c0_11] : memref<256x768xf32, #tpu.memory_space<vmem>>, vector<256x768xf32>
    %c0_12 = arith.constant 0 : index
    %c0_13 = arith.constant 0 : index
    %10 = vector.load %arg5[%c0_12, %c0_13] : memref<1x768xf32, #tpu.memory_space<vmem>>, vector<1x768xf32>
    %c0_i32 = arith.constant 0 : i32
    %11 = arith.index_cast %c0_i32 : i32 to index
    %c0_14 = arith.constant 0 : index
    %12 = vector.load %arg11[%11, %c0_14] : memref<4x768xf32, #tpu.memory_space<vmem>>, vector<1x768xf32>
    %c0_15 = arith.constant 0 : index
    %c0_16 = arith.constant 0 : index
    %13 = vector.load %arg12[%c0_15, %c0_16] : memref<1x256xf32, #tpu.memory_space<vmem>>, vector<1x256xf32>
    %cst_17 = arith.constant dense<0.000000e+00> : vector<1x768xf32>
    %14 = tpu.matmul %13, %9, %cst_17 {dimension_numbers = #tpu.dot_dimension_numbers<[1], [0], [0], [1], [0, 0, 1, 1], [], []>} : vector<1x256xf32>, vector<256x768xf32>, vector<1x768xf32> -> vector<1x768xf32>
    %15 = arith.addf %14, %10 : vector<1x768xf32>
    %16 = vector.extract_strided_slice %12 {offsets = [0, 0], sizes = [1, 256], strides = [1, 1]} : vector<1x768xf32> to vector<1x256xf32>
    %17 = vector.extract_strided_slice %15 {offsets = [0, 0], sizes = [1, 256], strides = [1, 1]} : vector<1x768xf32> to vector<1x256xf32>
    %18 = arith.addf %16, %17 : vector<1x256xf32>
    %19 = arith.negf %18 : vector<1x256xf32>
    %20 = math.exp %19 : vector<1x256xf32>
    %cst_18 = arith.constant 1.000000e+00 : f32
    %21 = vector.broadcast %cst_18 : f32 to vector<1x256xf32>
    %22 = arith.addf %21, %20 : vector<1x256xf32>
    %23 = arith.divf %21, %22 : vector<1x256xf32>
    %24 = vector.extract_strided_slice %12 {offsets = [0, 256], sizes = [1, 256], strides = [1, 1]} : vector<1x768xf32> to vector<1x256xf32>
    %25 = vector.extract_strided_slice %15 {offsets = [0, 256], sizes = [1, 256], strides = [1, 1]} : vector<1x768xf32> to vector<1x256xf32>
    %26 = arith.addf %24, %25 : vector<1x256xf32>
    %27 = arith.negf %26 : vector<1x256xf32>
    %28 = math.exp %27 : vector<1x256xf32>
    %cst_19 = arith.constant 1.000000e+00 : f32
    %29 = vector.broadcast %cst_19 : f32 to vector<1x256xf32>
    %30 = arith.addf %29, %28 : vector<1x256xf32>
    %31 = arith.divf %29, %30 : vector<1x256xf32>
    %32 = vector.extract_strided_slice %12 {offsets = [0, 512], sizes = [1, 256], strides = [1, 1]} : vector<1x768xf32> to vector<1x256xf32>
    %33 = vector.extract_strided_slice %15 {offsets = [0, 512], sizes = [1, 256], strides = [1, 1]} : vector<1x768xf32> to vector<1x256xf32>
    %34 = arith.mulf %23, %33 : vector<1x256xf32>
    %35 = arith.addf %32, %34 : vector<1x256xf32>
    %36 = math.tanh %35 : vector<1x256xf32>
    %cst_20 = arith.constant 1.000000e+00 : f32
    %37 = vector.broadcast %cst_20 : f32 to vector<1x256xf32>
    %38 = arith.subf %37, %31 : vector<1x256xf32>
    %39 = arith.mulf %38, %36 : vector<1x256xf32>
    %40 = arith.mulf %31, %13 : vector<1x256xf32>
    %41 = arith.addf %39, %40 : vector<1x256xf32>
    %c0_21 = arith.constant 0 : index
    %c0_22 = arith.constant 0 : index
    %42 = vector.load %arg12[%c0_21, %c0_22] : memref<1x256xf32, #tpu.memory_space<vmem>>, vector<1x256xf32>
    tpu.vector_store %arg12[%c0_21, %c0_22], %41 {strides = array<i32>} : memref<1x256xf32, #tpu.memory_space<vmem>>, vector<1x256xf32>,
    %43 = arith.index_cast %c0_i32 : i32 to index
    %c0_23 = arith.constant 0 : index
    %44 = vector.load %arg13[%43, %c0_23] : memref<4x256xf32, #tpu.memory_space<vmem>>, vector<1x256xf32>
    tpu.vector_store %arg13[%43, %c0_23], %41 {strides = array<i32>} : memref<4x256xf32, #tpu.memory_space<vmem>>, vector<1x256xf32>,
    %c1_i32 = arith.constant 1 : i32
    %45 = arith.index_cast %c1_i32 : i32 to index
    %c0_24 = arith.constant 0 : index
    %46 = vector.load %arg11[%45, %c0_24] : memref<4x768xf32, #tpu.memory_space<vmem>>, vector<1x768xf32>
    %c0_25 = arith.constant 0 : index
    %c0_26 = arith.constant 0 : index
    %47 = vector.load %arg12[%c0_25, %c0_26] : memref<1x256xf32, #tpu.memory_space<vmem>>, vector<1x256xf32>
    %cst_27 = arith.constant dense<0.000000e+00> : vector<1x768xf32>
    %48 = tpu.matmul %47, %9, %cst_27 {dimension_numbers = #tpu.dot_dimension_numbers<[1], [0], [0], [1], [0, 0, 1, 1], [], []>} : vector<1x256xf32>, vector<256x768xf32>, vector<1x768xf32> -> vector<1x768xf32>
    %49 = arith.addf %48, %10 : vector<1x768xf32>
    %50 = vector.extract_strided_slice %46 {offsets = [0, 0], sizes = [1, 256], strides = [1, 1]} : vector<1x768xf32> to vector<1x256xf32>
    %51 = vector.extract_strided_slice %49 {offsets = [0, 0], sizes = [1, 256], strides = [1, 1]} : vector<1x768xf32> to vector<1x256xf32>
    %52 = arith.addf %50, %51 : vector<1x256xf32>
    %53 = arith.negf %52 : vector<1x256xf32>
    %54 = math.exp %53 : vector<1x256xf32>
    %cst_28 = arith.constant 1.000000e+00 : f32
    %55 = vector.broadcast %cst_28 : f32 to vector<1x256xf32>
    %56 = arith.addf %55, %54 : vector<1x256xf32>
    %57 = arith.divf %55, %56 : vector<1x256xf32>
    %58 = vector.extract_strided_slice %46 {offsets = [0, 256], sizes = [1, 256], strides = [1, 1]} : vector<1x768xf32> to vector<1x256xf32>
    %59 = vector.extract_strided_slice %49 {offsets = [0, 256], sizes = [1, 256], strides = [1, 1]} : vector<1x768xf32> to vector<1x256xf32>
    %60 = arith.addf %58, %59 : vector<1x256xf32>
    %61 = arith.negf %60 : vector<1x256xf32>
    %62 = math.exp %61 : vector<1x256xf32>
    %cst_29 = arith.constant 1.000000e+00 : f32
    %63 = vector.broadcast %cst_29 : f32 to vector<1x256xf32>
    %64 = arith.addf %63, %62 : vector<1x256xf32>
    %65 = arith.divf %63, %64 : vector<1x256xf32>
    %66 = vector.extract_strided_slice %46 {offsets = [0, 512], sizes = [1, 256], strides = [1, 1]} : vector<1x768xf32> to vector<1x256xf32>
    %67 = vector.extract_strided_slice %49 {offsets = [0, 512], sizes = [1, 256], strides = [1, 1]} : vector<1x768xf32> to vector<1x256xf32>
    %68 = arith.mulf %57, %67 : vector<1x256xf32>
    %69 = arith.addf %66, %68 : vector<1x256xf32>
    %70 = math.tanh %69 : vector<1x256xf32>
    %cst_30 = arith.constant 1.000000e+00 : f32
    %71 = vector.broadcast %cst_30 : f32 to vector<1x256xf32>
    %72 = arith.subf %71, %65 : vector<1x256xf32>
    %73 = arith.mulf %72, %70 : vector<1x256xf32>
    %74 = arith.mulf %65, %47 : vector<1x256xf32>
    %75 = arith.addf %73, %74 : vector<1x256xf32>
    %c0_31 = arith.constant 0 : index
    %c0_32 = arith.constant 0 : index
    %76 = vector.load %arg12[%c0_31, %c0_32] : memref<1x256xf32, #tpu.memory_space<vmem>>, vector<1x256xf32>
    tpu.vector_store %arg12[%c0_31, %c0_32], %75 {strides = array<i32>} : memref<1x256xf32, #tpu.memory_space<vmem>>, vector<1x256xf32>,
    %77 = arith.index_cast %c1_i32 : i32 to index
    %c0_33 = arith.constant 0 : index
    %78 = vector.load %arg13[%77, %c0_33] : memref<4x256xf32, #tpu.memory_space<vmem>>, vector<1x256xf32>
    tpu.vector_store %arg13[%77, %c0_33], %75 {strides = array<i32>} : memref<4x256xf32, #tpu.memory_space<vmem>>, vector<1x256xf32>,
    %c2_i32 = arith.constant 2 : i32
    %79 = arith.index_cast %c2_i32 : i32 to index
    %c0_34 = arith.constant 0 : index
    %80 = vector.load %arg11[%79, %c0_34] : memref<4x768xf32, #tpu.memory_space<vmem>>, vector<1x768xf32>
    %c0_35 = arith.constant 0 : index
    %c0_36 = arith.constant 0 : index
    %81 = vector.load %arg12[%c0_35, %c0_36] : memref<1x256xf32, #tpu.memory_space<vmem>>, vector<1x256xf32>
    %cst_37 = arith.constant dense<0.000000e+00> : vector<1x768xf32>
    %82 = tpu.matmul %81, %9, %cst_37 {dimension_numbers = #tpu.dot_dimension_numbers<[1], [0], [0], [1], [0, 0, 1, 1], [], []>} : vector<1x256xf32>, vector<256x768xf32>, vector<1x768xf32> -> vector<1x768xf32>
    %83 = arith.addf %82, %10 : vector<1x768xf32>
    %84 = vector.extract_strided_slice %80 {offsets = [0, 0], sizes = [1, 256], strides = [1, 1]} : vector<1x768xf32> to vector<1x256xf32>
    %85 = vector.extract_strided_slice %83 {offsets = [0, 0], sizes = [1, 256], strides = [1, 1]} : vector<1x768xf32> to vector<1x256xf32>
    %86 = arith.addf %84, %85 : vector<1x256xf32>
    %87 = arith.negf %86 : vector<1x256xf32>
    %88 = math.exp %87 : vector<1x256xf32>
    %cst_38 = arith.constant 1.000000e+00 : f32
    %89 = vector.broadcast %cst_38 : f32 to vector<1x256xf32>
    %90 = arith.addf %89, %88 : vector<1x256xf32>
    %91 = arith.divf %89, %90 : vector<1x256xf32>
    %92 = vector.extract_strided_slice %80 {offsets = [0, 256], sizes = [1, 256], strides = [1, 1]} : vector<1x768xf32> to vector<1x256xf32>
    %93 = vector.extract_strided_slice %83 {offsets = [0, 256], sizes = [1, 256], strides = [1, 1]} : vector<1x768xf32> to vector<1x256xf32>
    %94 = arith.addf %92, %93 : vector<1x256xf32>
    %95 = arith.negf %94 : vector<1x256xf32>
    %96 = math.exp %95 : vector<1x256xf32>
    %cst_39 = arith.constant 1.000000e+00 : f32
    %97 = vector.broadcast %cst_39 : f32 to vector<1x256xf32>
    %98 = arith.addf %97, %96 : vector<1x256xf32>
    %99 = arith.divf %97, %98 : vector<1x256xf32>
    %100 = vector.extract_strided_slice %80 {offsets = [0, 512], sizes = [1, 256], strides = [1, 1]} : vector<1x768xf32> to vector<1x256xf32>
    %101 = vector.extract_strided_slice %83 {offsets = [0, 512], sizes = [1, 256], strides = [1, 1]} : vector<1x768xf32> to vector<1x256xf32>
    %102 = arith.mulf %91, %101 : vector<1x256xf32>
    %103 = arith.addf %100, %102 : vector<1x256xf32>
    %104 = math.tanh %103 : vector<1x256xf32>
    %cst_40 = arith.constant 1.000000e+00 : f32
    %105 = vector.broadcast %cst_40 : f32 to vector<1x256xf32>
    %106 = arith.subf %105, %99 : vector<1x256xf32>
    %107 = arith.mulf %106, %104 : vector<1x256xf32>
    %108 = arith.mulf %99, %81 : vector<1x256xf32>
    %109 = arith.addf %107, %108 : vector<1x256xf32>
    %c0_41 = arith.constant 0 : index
    %c0_42 = arith.constant 0 : index
    %110 = vector.load %arg12[%c0_41, %c0_42] : memref<1x256xf32, #tpu.memory_space<vmem>>, vector<1x256xf32>
    tpu.vector_store %arg12[%c0_41, %c0_42], %109 {strides = array<i32>} : memref<1x256xf32, #tpu.memory_space<vmem>>, vector<1x256xf32>,
    %111 = arith.index_cast %c2_i32 : i32 to index
    %c0_43 = arith.constant 0 : index
    %112 = vector.load %arg13[%111, %c0_43] : memref<4x256xf32, #tpu.memory_space<vmem>>, vector<1x256xf32>
    tpu.vector_store %arg13[%111, %c0_43], %109 {strides = array<i32>} : memref<4x256xf32, #tpu.memory_space<vmem>>, vector<1x256xf32>,
    %c3_i32 = arith.constant 3 : i32
    %113 = arith.index_cast %c3_i32 : i32 to index
    %c0_44 = arith.constant 0 : index
    %114 = vector.load %arg11[%113, %c0_44] : memref<4x768xf32, #tpu.memory_space<vmem>>, vector<1x768xf32>
    %c0_45 = arith.constant 0 : index
    %c0_46 = arith.constant 0 : index
    %115 = vector.load %arg12[%c0_45, %c0_46] : memref<1x256xf32, #tpu.memory_space<vmem>>, vector<1x256xf32>
    %cst_47 = arith.constant dense<0.000000e+00> : vector<1x768xf32>
    %116 = tpu.matmul %115, %9, %cst_47 {dimension_numbers = #tpu.dot_dimension_numbers<[1], [0], [0], [1], [0, 0, 1, 1], [], []>} : vector<1x256xf32>, vector<256x768xf32>, vector<1x768xf32> -> vector<1x768xf32>
    %117 = arith.addf %116, %10 : vector<1x768xf32>
    %118 = vector.extract_strided_slice %114 {offsets = [0, 0], sizes = [1, 256], strides = [1, 1]} : vector<1x768xf32> to vector<1x256xf32>
    %119 = vector.extract_strided_slice %117 {offsets = [0, 0], sizes = [1, 256], strides = [1, 1]} : vector<1x768xf32> to vector<1x256xf32>
    %120 = arith.addf %118, %119 : vector<1x256xf32>
    %121 = arith.negf %120 : vector<1x256xf32>
    %122 = math.exp %121 : vector<1x256xf32>
    %cst_48 = arith.constant 1.000000e+00 : f32
    %123 = vector.broadcast %cst_48 : f32 to vector<1x256xf32>
    %124 = arith.addf %123, %122 : vector<1x256xf32>
    %125 = arith.divf %123, %124 : vector<1x256xf32>
    %126 = vector.extract_strided_slice %114 {offsets = [0, 256], sizes = [1, 256], strides = [1, 1]} : vector<1x768xf32> to vector<1x256xf32>
    %127 = vector.extract_strided_slice %117 {offsets = [0, 256], sizes = [1, 256], strides = [1, 1]} : vector<1x768xf32> to vector<1x256xf32>
    %128 = arith.addf %126, %127 : vector<1x256xf32>
    %129 = arith.negf %128 : vector<1x256xf32>
    %130 = math.exp %129 : vector<1x256xf32>
    %cst_49 = arith.constant 1.000000e+00 : f32
    %131 = vector.broadcast %cst_49 : f32 to vector<1x256xf32>
    %132 = arith.addf %131, %130 : vector<1x256xf32>
    %133 = arith.divf %131, %132 : vector<1x256xf32>
    %134 = vector.extract_strided_slice %114 {offsets = [0, 512], sizes = [1, 256], strides = [1, 1]} : vector<1x768xf32> to vector<1x256xf32>
    %135 = vector.extract_strided_slice %117 {offsets = [0, 512], sizes = [1, 256], strides = [1, 1]} : vector<1x768xf32> to vector<1x256xf32>
    %136 = arith.mulf %125, %135 : vector<1x256xf32>
    %137 = arith.addf %134, %136 : vector<1x256xf32>
    %138 = math.tanh %137 : vector<1x256xf32>
    %cst_50 = arith.constant 1.000000e+00 : f32
    %139 = vector.broadcast %cst_50 : f32 to vector<1x256xf32>
    %140 = arith.subf %139, %133 : vector<1x256xf32>
    %141 = arith.mulf %140, %138 : vector<1x256xf32>
    %142 = arith.mulf %133, %115 : vector<1x256xf32>
    %143 = arith.addf %141, %142 : vector<1x256xf32>
    %c0_51 = arith.constant 0 : index
    %c0_52 = arith.constant 0 : index
    %144 = vector.load %arg12[%c0_51, %c0_52] : memref<1x256xf32, #tpu.memory_space<vmem>>, vector<1x256xf32>
    tpu.vector_store %arg12[%c0_51, %c0_52], %143 {strides = array<i32>} : memref<1x256xf32, #tpu.memory_space<vmem>>, vector<1x256xf32>,
    %145 = arith.index_cast %c3_i32 : i32 to index
    %c0_53 = arith.constant 0 : index
    %146 = vector.load %arg13[%145, %c0_53] : memref<4x256xf32, #tpu.memory_space<vmem>>, vector<1x256xf32>
    tpu.vector_store %arg13[%145, %c0_53], %143 {strides = array<i32>} : memref<4x256xf32, #tpu.memory_space<vmem>>, vector<1x256xf32>,
    %c4_i32 = arith.constant 4 : i32
    %c0_54 = arith.constant 0 : index
    %c0_55 = arith.constant 0 : index
    %147 = vector.load %arg13[%c0_54, %c0_55] : memref<4x256xf32, #tpu.memory_space<vmem>>, vector<4x256xf32>
    %c0_56 = arith.constant 0 : index
    %c0_57 = arith.constant 0 : index
    %148 = vector.load %arg6[%c0_56, %c0_57] : memref<256x128xf32, #tpu.memory_space<vmem>>, vector<256x128xf32>
    %cst_58 = arith.constant dense<0.000000e+00> : vector<4x128xf32>
    %149 = tpu.matmul %147, %148, %cst_58 {dimension_numbers = #tpu.dot_dimension_numbers<[1], [0], [0], [1], [0, 0, 1, 1], [], []>} : vector<4x256xf32>, vector<256x128xf32>, vector<4x128xf32> -> vector<4x128xf32>
    %c0_59 = arith.constant 0 : index
    %c0_60 = arith.constant 0 : index
    %150 = vector.load %arg7[%c0_59, %c0_60] : memref<1x128xf32, #tpu.memory_space<vmem>>, vector<1x128xf32>
    %151 = vector.broadcast %150 : vector<1x128xf32> to vector<4x128xf32>
    %152 = arith.addf %149, %151 : vector<4x128xf32>
    %c0_61 = arith.constant 0 : index
    %c0_62 = arith.constant 0 : index
    %153 = vector.load %arg8[%c0_61, %c0_62] : memref<128x128xf32, #tpu.memory_space<vmem>>, vector<128x128xf32>
    %cst_63 = arith.constant dense<0.000000e+00> : vector<4x128xf32>
    %154 = tpu.matmul %152, %153, %cst_63 {dimension_numbers = #tpu.dot_dimension_numbers<[1], [0], [0], [1], [0, 0, 1, 1], [], []>} : vector<4x128xf32>, vector<128x128xf32>, vector<4x128xf32> -> vector<4x128xf32>
    %c0_64 = arith.constant 0 : index
    %c0_65 = arith.constant 0 : index
    %155 = vector.load %arg9[%c0_64, %c0_65] : memref<1x128xf32, #tpu.memory_space<vmem>>, vector<1x128xf32>
    %156 = vector.broadcast %155 : vector<1x128xf32> to vector<4x128xf32>
    %157 = arith.addf %154, %156 : vector<4x128xf32>
    %c0_66 = arith.constant 0 : index
    %c0_67 = arith.constant 0 : index
    %158 = vector.load %arg10[%c0_66, %c0_67] : memref<4x128xf32, #tpu.memory_space<vmem>>, vector<4x128xf32>
    tpu.vector_store %arg10[%c0_66, %c0_67], %157 {strides = array<i32>} : memref<4x128xf32, #tpu.memory_space<vmem>>, vector<4x128xf32>,
    return
  }
  func.func @transform_0(%arg0: i32) -> (i32, i32) {
    %c0_i32 = arith.constant 0 : i32
    %c0_i32_0 = arith.constant 0 : i32
    %c0_i32_1 = arith.constant 0 : i32
    return %c0_i32, %c0_i32_0 : i32, i32
  }
  func.func @transform_1(%arg0: i32) -> (i32, i32) {
    %c0_i32 = arith.constant 0 : i32
    %c0_i32_0 = arith.constant 0 : i32
    %c0_i32_1 = arith.constant 0 : i32
    return %c0_i32, %c0_i32_0 : i32, i32
  }
  func.func @transform_2(%arg0: i32) -> (i32, i32) {
    %c0_i32 = arith.constant 0 : i32
    %c0_i32_0 = arith.constant 0 : i32
    %c0_i32_1 = arith.constant 0 : i32
    return %c0_i32, %c0_i32_0 : i32, i32
  }
  func.func @transform_3(%arg0: i32) -> (i32, i32) {
    %c0_i32 = arith.constant 0 : i32
    %c0_i32_0 = arith.constant 0 : i32
    %c0_i32_1 = arith.constant 0 : i32
    return %c0_i32, %c0_i32_0 : i32, i32
  }
  func.func @transform_4(%arg0: i32) -> (i32, i32) {
    %c0_i32 = arith.constant 0 : i32
    %c0_i32_0 = arith.constant 0 : i32
    %c0_i32_1 = arith.constant 0 : i32
    return %c0_i32, %c0_i32_0 : i32, i32
  }
  func.func @transform_5(%arg0: i32) -> (i32, i32) {
    %c0_i32 = arith.constant 0 : i32
    %c0_i32_0 = arith.constant 0 : i32
    %c0_i32_1 = arith.constant 0 : i32
    return %c0_i32, %c0_i32_0 : i32, i32
  }
  func.func @transform_6(%arg0: i32) -> (i32, i32) {
    %c0_i32 = arith.constant 0 : i32
    %c0_i32_0 = arith.constant 0 : i32
    %c0_i32_1 = arith.constant 0 : i32
    return %c0_i32, %c0_i32_0 : i32, i32
  }
  func.func @transform_7(%arg0: i32) -> (i32, i32) {
    %c0_i32 = arith.constant 0 : i32
    %c0_i32_0 = arith.constant 0 : i32
    %c0_i32_1 = arith.constant 0 : i32
    return %c0_i32, %c0_i32_0 : i32, i32
  }
  func.func @transform_8(%arg0: i32) -> (i32, i32) {
    %c0_i32 = arith.constant 0 : i32
    %c0_i32_0 = arith.constant 0 : i32
    %c0_i32_1 = arith.constant 0 : i32
    return %c0_i32, %c0_i32_0 : i32, i32
  }
  func.func @transform_9(%arg0: i32) -> (i32, i32) {
    %c0_i32 = arith.constant 0 : i32
    %c0_i32_0 = arith.constant 0 : i32
    %c0_i32_1 = arith.constant 0 : i32
    return %c0_i32, %c0_i32_0 : i32, i32
  }
}

</mosaic_0001>

<llo_original>
// kernel: deep_rqnet_forward.4
$region0: #{deep_rqnet_forward.4}
  #allocation0 [shape = 'u32[]', space=smem, size = 0x4, offset = 0x4, fixed_abs, tag = 'smem constant byte address 0x4 - core index']
  #allocation1 [shape = 'u32[72,128]{1,0:T(1,128)}', space=vmem, size = 0x9000, scoped, tag = 'internal scratch']
  %s0 = inlined_call_operand.vmem [shape: f32[64,400], index: 0, kind: input, shape index: {}]
  %s1 = inlined_call_operand.vmem [shape: f32[64,400], index: 1, kind: input, shape index: {}]
  %s2 = inlined_call_operand.vmem [shape: f32[64,400], index: 2, kind: input, shape index: {}]
  %s3 = inlined_call_operand.vmem [shape: f32[64,400], index: 3, kind: input, shape index: {}]
  %s4 = inlined_call_operand.vmem [shape: f32[32,64], index: 4, kind: input, shape index: {}]
  %s5 = inlined_call_operand.vmem [shape: f32[32,1], index: 5, kind: input, shape index: {}]
  %s6 = inlined_call_operand.vmem [shape: f32[32,400], index: 6, kind: output, shape index: {}]
  %s7 = sld [smem:[#allocation0]]
  $region34: #{deep_rqnet_forward.4} parent=0
    _
  %s9 = ssub.s32 1, %s7
  %s10 = scalar_select 0, %s9, %s7
  // Predicated region
  $region2: #{deep_rqnet_forward.4} parent=0 // pred_check
    _
  $region3: #{deep_rqnet_forward.4} parent=0 // pred_check_branch
    %12 = sbr.rel (0) target = $region5
  $region4: #{deep_rqnet_forward.4} parent=0 // pred_region
    _
  $region5: #{deep_rqnet_forward.4} parent=0 // pred_fallthru
    _
  // Predicated region
  $region6: #{deep_rqnet_forward.4} parent=0 // pred_check
    _
  $region7: #{deep_rqnet_forward.4} parent=0 // pred_check_branch
    %14 = sbr.rel (0) target = $region9
  $region8: #{deep_rqnet_forward.4} parent=0 // pred_region
    _
  $region9: #{deep_rqnet_forward.4} parent=0 // pred_fallthru
    _
  // Predicated region
  $region10: #{deep_rqnet_forward.4} parent=0 // pred_check
    _
  $region11: #{deep_rqnet_forward.4} parent=0 // pred_check_branch
    %16 = sbr.rel (0) target = $region13
  $region12: #{deep_rqnet_forward.4} parent=0 // pred_region
    _
  $region13: #{deep_rqnet_forward.4} parent=0 // pred_fallthru
    _
  // Predicated region
  $region14: #{deep_rqnet_forward.4} parent=0 // pred_check
    _
  $region15: #{deep_rqnet_forward.4} parent=0 // pred_check_branch
    %18 = sbr.rel (0) target = $region17
  $region16: #{deep_rqnet_forward.4} parent=0 // pred_region
    _
  $region17: #{deep_rqnet_forward.4} parent=0 // pred_fallthru
    _
  // Predicated region
  $region18: #{deep_rqnet_forward.4} parent=0 // pred_check
    _
  $region19: #{deep_rqnet_forward.4} parent=0 // pred_check_branch
    %20 = sbr.rel (0) target = $region21
  $region20: #{deep_rqnet_forward.4} parent=0 // pred_region
    _
  $region21: #{deep_rqnet_forward.4} parent=0 // pred_fallthru
    _
  // Predicated region
  $region22: #{deep_rqnet_forward.4} parent=0 // pred_check
    _
  $region23: #{deep_rqnet_forward.4} parent=0 // pred_check_branch
    %22 = sbr.rel (0) target = $region25
  $region24: #{deep_rqnet_forward.4} parent=0 // pred_region
    _
  $region25: #{deep_rqnet_forward.4} parent=0 // pred_fallthru
    _
  %v23 = vld [vmem:[%s4] sm:$0xff]
  %v24 = vld [vmem:[%s4 + $0x8] sm:$0xff]
  %v25 = vld [vmem:[%s4 + $0x10] sm:$0xff]
  %v26 = vld [vmem:[%s4 + $0x18] sm:$0xff]
  %v27 = vld [vmem:[%s0] sm:$0xff]
  %v28 = vld [vmem:[%s0 + $0x8] sm:$0xff]
  %v29 = vld [vmem:[%s0 + $0x10] sm:$0xff]
  %v30 = vld [vmem:[%s0 + $0x18] sm:$0xff]
  %v31 = vld [vmem:[%s0 + $0x20] sm:$0xff]
  %v32 = vld [vmem:[%s0 + $0x28] sm:$0xff]
  %v33 = vld [vmem:[%s0 + $0x30] sm:$0xff]
  %v34 = vld [vmem:[%s0 + $0x38] sm:$0xff]
  %v35 = vld [vmem:[%s0 + $0x40] sm:$0xff]
  %v36 = vld [vmem:[%s0 + $0x48] sm:$0xff]
  %v37 = vld [vmem:[%s0 + $0x50] sm:$0xff]
  %v38 = vld [vmem:[%s0 + $0x58] sm:$0xff]
  %v39 = vld [vmem:[%s0 + $0x60] sm:$0xff]
  %v40 = vld [vmem:[%s0 + $0x68] sm:$0xff]
  %v41 = vld [vmem:[%s0 + $0x70] sm:$0xff]
  %v42 = vld [vmem:[%s0 + $0x78] sm:$0xff]
  %v43 = vld [vmem:[%s0 + $0x80] sm:$0xff]
  %v44 = vld [vmem:[%s0 + $0x88] sm:$0xff]
  %v45 = vld [vmem:[%s0 + $0x90] sm:$0xff]
  %v46 = vld [vmem:[%s0 + $0x98] sm:$0xff]
  %v47 = vld [vmem:[%s0 + $0xa0] sm:$0xff]
  %v48 = vld [vmem:[%s0 + $0xa8] sm:$0xff]
  %v49 = vld [vmem:[%s0 + $0xb0] sm:$0xff]
  %v50 = vld [vmem:[%s0 + $0xb8] sm:$0xff]
  %v51 = vld [vmem:[%s0 + $0xc0] sm:$0xff]
  %v52 = vld [vmem:[%s0 + $0xc8] sm:$0xff]
  %v53 = vld [vmem:[%s0 + $0xd0] sm:$0xff]
  %v54 = vld [vmem:[%s0 + $0xd8] sm:$0xff]
  %v55 = vld [vmem:[%s0 + $0xe0] sm:$0xff]
  %v56 = vld [vmem:[%s0 + $0xe8] sm:$0xff]
  %v57 = vld [vmem:[%s0 + $0xf0] sm:$0xff]
  %v58 = vld [vmem:[%s0 + $0xf8] sm:$0xff]
  %vm59 = vcmask 523264
  %v61 = vsel %vm59, %v23, 0
  %v64 = vsel %vm59, %v24, 0
  %v67 = vsel %vm59, %v25, 0
  %v70 = vsel %vm59, %v26, 0
  %72 = vmatpush.msra.mxu0 0.0
  %73 = vmatpush.msra.mxu0 0.0
  %74 = vmatpush.msra.mxu0 0.0
  %75 = vmatpush.msra.mxu0 0.0
  %76 = vmatpush.msra.mxu0 0.0
  %77 = vmatpush.msra.mxu0 0.0
  %78 = vmatpush.msra.mxu0 0.0
  %79 = vmatpush.msra.mxu0 0.0
  %80 = vmatpush.msra.mxu0 %v55
  %81 = vmatpush.msra.mxu0 %v51
  %82 = vmatpush.msra.mxu0 %v47
  %83 = vmatpush.msra.mxu0 %v43
  %84 = vmatpush.msra.mxu0 %v39
  %85 = vmatpush.msra.mxu0 %v35
  %86 = vmatpush.msra.mxu0 %v31
  %87 = vmatpush.msra.mxu0 %v27
  %88 = vmatmul.f32.gmra.mxu0 %v61
  %v89 = vpop.f32.mrf.mxu0
  %v90 = vadd.f32 0.0, %v89
  %91 = vmatmul.f32.gmra.mxu0 %v64
  %v92 = vpop.f32.mrf.mxu0
  %v93 = vadd.f32 0.0, %v92
  %94 = vmatmul.f32.gmra.mxu0 %v67
  %v95 = vpop.f32.mrf.mxu0
  %v96 = vadd.f32 0.0, %v95
  %97 = vmatmul.f32.gmra.mxu0 %v70
  %v98 = vpop.f32.mrf.mxu0
  %v99 = vadd.f32 0.0, %v98
  %100 = vdwg.mxu0
  %101 = vmatpush.msra.mxu0 0.0
  %102 = vmatpush.msra.mxu0 0.0
  %103 = vmatpush.msra.mxu0 0.0
  %104 = vmatpush.msra.mxu0 0.0
  %105 = vmatpush.msra.mxu0 0.0
  %106 = vmatpush.msra.mxu0 0.0
  %107 = vmatpush.msra.mxu0 0.0
  %108 = vmatpush.msra.mxu0 0.0
  %109 = vmatpush.msra.mxu0 %v56
  %110 = vmatpush.msra.mxu0 %v52
  %111 = vmatpush.msra.mxu0 %v48
  %112 = vmatpush.msra.mxu0 %v44
  %113 = vmatpush.msra.mxu0 %v40
  %114 = vmatpush.msra.mxu0 %v36
  %115 = vmatpush.msra.mxu0 %v32
  %116 = vmatpush.msra.mxu0 %v28
  %117 = vmatmul.f32.gmra.mxu0 %v61
  %v118 = vpop.f32.mrf.mxu0
  %v119 = vadd.f32 0.0, %v118
  %120 = vmatmul.f32.gmra.mxu0 %v64
  %v121 = vpop.f32.mrf.mxu0
  %v122 = vadd.f32 0.0, %v121
  %123 = vmatmul.f32.gmra.mxu0 %v67
  %v124 = vpop.f32.mrf.mxu0
  %v125 = vadd.f32 0.0, %v124
  %126 = vmatmul.f32.gmra.mxu0 %v70
  %v127 = vpop.f32.mrf.mxu0
  %v128 = vadd.f32 0.0, %v127
  %129 = vdwg.mxu0
  %130 = vmatpush.msra.mxu0 0.0
  %131 = vmatpush.msra.mxu0 0.0
  %132 = vmatpush.msra.mxu0 0.0
  %133 = vmatpush.msra.mxu0 0.0
  %134 = vmatpush.msra.mxu0 0.0
  %135 = vmatpush.msra.mxu0 0.0
  %136 = vmatpush.msra.mxu0 0.0
  %137 = vmatpush.msra.mxu0 0.0
  %138 = vmatpush.msra.mxu0 %v57
  %139 = vmatpush.msra.mxu0 %v53
  %140 = vmatpush.msra.mxu0 %v49
  %141 = vmatpush.msra.mxu0 %v45
  %142 = vmatpush.msra.mxu0 %v41
  %143 = vmatpush.msra.mxu0 %v37
  %144 = vmatpush.msra.mxu0 %v33
  %145 = vmatpush.msra.mxu0 %v29
  %146 = vmatmul.f32.gmra.mxu0 %v61
  %v147 = vpop.f32.mrf.mxu0
  %v148 = vadd.f32 0.0, %v147
  %149 = vmatmul.f32.gmra.mxu0 %v64
  %v150 = vpop.f32.mrf.mxu0
  %v151 = vadd.f32 0.0, %v150
  %152 = vmatmul.f32.gmra.mxu0 %v67
  %v153 = vpop.f32.mrf.mxu0
  %v154 = vadd.f32 0.0, %v153
  %155 = vmatmul.f32.gmra.mxu0 %v70
  %v156 = vpop.f32.mrf.mxu0
  %v157 = vadd.f32 0.0, %v156
  %158 = vdwg.mxu0
  %159 = vmatpush.msra.mxu0 0.0
  %160 = vmatpush.msra.mxu0 0.0
  %161 = vmatpush.msra.mxu0 0.0
  %162 = vmatpush.msra.mxu0 0.0
  %163 = vmatpush.msra.mxu0 0.0
  %164 = vmatpush.msra.mxu0 0.0
  %165 = vmatpush.msra.mxu0 0.0
  %166 = vmatpush.msra.mxu0 0.0
  %167 = vmatpush.msra.mxu0 %v58
  %168 = vmatpush.msra.mxu0 %v54
  %169 = vmatpush.msra.mxu0 %v50
  %170 = vmatpush.msra.mxu0 %v46
  %171 = vmatpush.msra.mxu0 %v42
  %172 = vmatpush.msra.mxu0 %v38
  %173 = vmatpush.msra.mxu0 %v34
  %174 = vmatpush.msra.mxu0 %v30
  %175 = vmatmul.f32.gmra.mxu0 %v61
  %v176 = vpop.f32.mrf.mxu0
  %v177 = vadd.f32 0.0, %v176
  %178 = vmatmul.f32.gmra.mxu0 %v64
  %v179 = vpop.f32.mrf.mxu0
  %v180 = vadd.f32 0.0, %v179
  %181 = vmatmul.f32.gmra.mxu0 %v67
  %v182 = vpop.f32.mrf.mxu0
  %v183 = vadd.f32 0.0, %v182
  %184 = vmatmul.f32.gmra.mxu0 %v70
  %v185 = vpop.f32.mrf.mxu0
  %v186 = vadd.f32 0.0, %v185
  %187 = vdwg.mxu0
  %v188 = vld [vmem:[%s1] sm:$0xff]
  %v189 = vld [vmem:[%s1 + $0x8] sm:$0xff]
  %v190 = vld [vmem:[%s1 + $0x10] sm:$0xff]
  %v191 = vld [vmem:[%s1 + $0x18] sm:$0xff]
  %v192 = vld [vmem:[%s1 + $0x20] sm:$0xff]
  %v193 = vld [vmem:[%s1 + $0x28] sm:$0xff]
  %v194 = vld [vmem:[%s1 + $0x30] sm:$0xff]
  %v195 = vld [vmem:[%s1 + $0x38] sm:$0xff]
  %v196 = vld [vmem:[%s1 + $0x40] sm:$0xff]
  %v197 = vld [vmem:[%s1 + $0x48] sm:$0xff]
  %v198 = vld [vmem:[%s1 + $0x50] sm:$0xff]
  %v199 = vld [vmem:[%s1 + $0x58] sm:$0xff]
  %v200 = vld [vmem:[%s1 + $0x60] sm:$0xff]
  %v201 = vld [vmem:[%s1 + $0x68] sm:$0xff]
  %v202 = vld [vmem:[%s1 + $0x70] sm:$0xff]
  %v203 = vld [vmem:[%s1 + $0x78] sm:$0xff]
  %v204 = vld [vmem:[%s1 + $0x80] sm:$0xff]
  %v205 = vld [vmem:[%s1 + $0x88] sm:$0xff]
  %v206 = vld [vmem:[%s1 + $0x90] sm:$0xff]
  %v207 = vld [vmem:[%s1 + $0x98] sm:$0xff]
  %v208 = vld [vmem:[%s1 + $0xa0] sm:$0xff]
  %v209 = vld [vmem:[%s1 + $0xa8] sm:$0xff]
  %v210 = vld [vmem:[%s1 + $0xb0] sm:$0xff]
  %v211 = vld [vmem:[%s1 + $0xb8] sm:$0xff]
  %v212 = vld [vmem:[%s1 + $0xc0] sm:$0xff]
  %v213 = vld [vmem:[%s1 + $0xc8] sm:$0xff]
  %v214 = vld [vmem:[%s1 + $0xd0] sm:$0xff]
  %v215 = vld [vmem:[%s1 + $0xd8] sm:$0xff]
  %v216 = vld [vmem:[%s1 + $0xe0] sm:$0xff]
  %v217 = vld [vmem:[%s1 + $0xe8] sm:$0xff]
  %v218 = vld [vmem:[%s1 + $0xf0] sm:$0xff]
  %v219 = vld [vmem:[%s1 + $0xf8] sm:$0xff]
  %220 = vmatpush.msra.mxu0 0.0
  %221 = vmatpush.msra.mxu0 0.0
  %222 = vmatpush.msra.mxu0 0.0
  %223 = vmatpush.msra.mxu0 0.0
  %224 = vmatpush.msra.mxu0 0.0
  %225 = vmatpush.msra.mxu0 0.0
  %226 = vmatpush.msra.mxu0 0.0
  %227 = vmatpush.msra.mxu0 0.0
  %228 = vmatpush.msra.mxu0 %v216
  %229 = vmatpush.msra.mxu0 %v212
  %230 = vmatpush.msra.mxu0 %v208
  %231 = vmatpush.msra.mxu0 %v204
  %232 = vmatpush.msra.mxu0 %v200
  %233 = vmatpush.msra.mxu0 %v196
  %234 = vmatpush.msra.mxu0 %v192
  %235 = vmatpush.msra.mxu0 %v188
  %236 = vmatmul.f32.gmra.mxu0 %v61
  %v237 = vpop.f32.mrf.mxu0
  %v238 = vadd.f32 0.0, %v237
  %239 = vmatmul.f32.gmra.mxu0 %v64
  %v240 = vpop.f32.mrf.mxu0
  %v241 = vadd.f32 0.0, %v240
  %242 = vmatmul.f32.gmra.mxu0 %v67
  %v243 = vpop.f32.mrf.mxu0
  %v244 = vadd.f32 0.0, %v243
  %245 = vmatmul.f32.gmra.mxu0 %v70
  %v246 = vpop.f32.mrf.mxu0
  %v247 = vadd.f32 0.0, %v246
  %248 = vdwg.mxu0
  %249 = vmatpush.msra.mxu0 0.0
  %250 = vmatpush.msra.mxu0 0.0
  %251 = vmatpush.msra.mxu0 0.0
  %252 = vmatpush.msra.mxu0 0.0
  %253 = vmatpush.msra.mxu0 0.0
  %254 = vmatpush.msra.mxu0 0.0
  %255 = vmatpush.msra.mxu0 0.0
  %256 = vmatpush.msra.mxu0 0.0
  %257 = vmatpush.msra.mxu0 %v217
  %258 = vmatpush.msra.mxu0 %v213
  %259 = vmatpush.msra.mxu0 %v209
  %260 = vmatpush.msra.mxu0 %v205
  %261 = vmatpush.msra.mxu0 %v201
  %262 = vmatpush.msra.mxu0 %v197
  %263 = vmatpush.msra.mxu0 %v193
  %264 = vmatpush.msra.mxu0 %v189
  %265 = vmatmul.f32.gmra.mxu0 %v61
  %v266 = vpop.f32.mrf.mxu0
  %v267 = vadd.f32 0.0, %v266
  %268 = vmatmul.f32.gmra.mxu0 %v64
  %v269 = vpop.f32.mrf.mxu0
  %v270 = vadd.f32 0.0, %v269
  %271 = vmatmul.f32.gmra.mxu0 %v67
  %v272 = vpop.f32.mrf.mxu0
  %v273 = vadd.f32 0.0, %v272
  %274 = vmatmul.f32.gmra.mxu0 %v70
  %v275 = vpop.f32.mrf.mxu0
  %v276 = vadd.f32 0.0, %v275
  %277 = vdwg.mxu0
  %278 = vmatpush.msra.mxu0 0.0
  %279 = vmatpush.msra.mxu0 0.0
  %280 = vmatpush.msra.mxu0 0.0
  %281 = vmatpush.msra.mxu0 0.0
  %282 = vmatpush.msra.mxu0 0.0
  %283 = vmatpush.msra.mxu0 0.0
  %284 = vmatpush.msra.mxu0 0.0
  %285 = vmatpush.msra.mxu0 0.0
  %286 = vmatpush.msra.mxu0 %v218
  %287 = vmatpush.msra.mxu0 %v214
  %288 = vmatpush.msra.mxu0 %v210
  %289 = vmatpush.msra.mxu0 %v206
  %290 = vmatpush.msra.mxu0 %v202
  %291 = vmatpush.msra.mxu0 %v198
  %292 = vmatpush.msra.mxu0 %v194
  %293 = vmatpush.msra.mxu0 %v190
  %294 = vmatmul.f32.gmra.mxu0 %v61
  %v295 = vpop.f32.mrf.mxu0
  %v296 = vadd.f32 0.0, %v295
  %297 = vmatmul.f32.gmra.mxu0 %v64
  %v298 = vpop.f32.mrf.mxu0
  %v299 = vadd.f32 0.0, %v298
  %300 = vmatmul.f32.gmra.mxu0 %v67
  %v301 = vpop.f32.mrf.mxu0
  %v302 = vadd.f32 0.0, %v301
  %303 = vmatmul.f32.gmra.mxu0 %v70
  %v304 = vpop.f32.mrf.mxu0
  %v305 = vadd.f32 0.0, %v304
  %306 = vdwg.mxu0
  %307 = vmatpush.msra.mxu0 0.0
  %308 = vmatpush.msra.mxu0 0.0
  %309 = vmatpush.msra.mxu0 0.0
  %310 = vmatpush.msra.mxu0 0.0
  %311 = vmatpush.msra.mxu0 0.0
  %312 = vmatpush.msra.mxu0 0.0
  %313 = vmatpush.msra.mxu0 0.0
  %314 = vmatpush.msra.mxu0 0.0
  %315 = vmatpush.msra.mxu0 %v219
  %316 = vmatpush.msra.mxu0 %v215
  %317 = vmatpush.msra.mxu0 %v211
  %318 = vmatpush.msra.mxu0 %v207
  %319 = vmatpush.msra.mxu0 %v203
  %320 = vmatpush.msra.mxu0 %v199
  %321 = vmatpush.msra.mxu0 %v195
  %322 = vmatpush.msra.mxu0 %v191
  %323 = vmatmul.f32.gmra.mxu0 %v61
  %v324 = vpop.f32.mrf.mxu0
  %v325 = vadd.f32 0.0, %v324
  %326 = vmatmul.f32.gmra.mxu0 %v64
  %v327 = vpop.f32.mrf.mxu0
  %v328 = vadd.f32 0.0, %v327
  %329 = vmatmul.f32.gmra.mxu0 %v67
  %v330 = vpop.f32.mrf.mxu0
  %v331 = vadd.f32 0.0, %v330
  %332 = vmatmul.f32.gmra.mxu0 %v70
  %v333 = vpop.f32.mrf.mxu0
  %v334 = vadd.f32 0.0, %v333
  %335 = vdwg.mxu0
  %v336 = vmax.f32 %v90, %v238
  %v337 = vmax.f32 %v119, %v267
  %v338 = vmax.f32 %v148, %v296
  %v339 = vmax.f32 %v177, %v325
  %v340 = vmax.f32 %v93, %v241
  %v341 = vmax.f32 %v122, %v270
  %v342 = vmax.f32 %v151, %v299
  %v343 = vmax.f32 %v180, %v328
  %v344 = vmax.f32 %v96, %v244
  %v345 = vmax.f32 %v125, %v273
  %v346 = vmax.f32 %v154, %v302
  %v347 = vmax.f32 %v183, %v331
  %v348 = vmax.f32 %v99, %v247
  %v349 = vmax.f32 %v128, %v276
  %v350 = vmax.f32 %v157, %v305
  %v351 = vmax.f32 %v186, %v334
  %v352 = vld [vmem:[%s2] sm:$0xff]
  %v353 = vld [vmem:[%s2 + $0x8] sm:$0xff]
  %v354 = vld [vmem:[%s2 + $0x10] sm:$0xff]
  %v355 = vld [vmem:[%s2 + $0x18] sm:$0xff]
  %v356 = vld [vmem:[%s2 + $0x20] sm:$0xff]
  %v357 = vld [vmem:[%s2 + $0x28] sm:$0xff]
  %v358 = vld [vmem:[%s2 + $0x30] sm:$0xff]
  %v359 = vld [vmem:[%s2 + $0x38] sm:$0xff]
  %v360 = vld [vmem:[%s2 + $0x40] sm:$0xff]
  %v361 = vld [vmem:[%s2 + $0x48] sm:$0xff]
  %v362 = vld [vmem:[%s2 + $0x50] sm:$0xff]
  %v363 = vld [vmem:[%s2 + $0x58] sm:$0xff]
  %v364 = vld [vmem:[%s2 + $0x60] sm:$0xff]
  %v365 = vld [vmem:[%s2 + $0x68] sm:$0xff]
  %v366 = vld [vmem:[%s2 + $0x70] sm:$0xff]
  %v367 = vld [vmem:[%s2 + $0x78] sm:$0xff]
  %v368 = vld [vmem:[%s2 + $0x80] sm:$0xff]
  %v369 = vld [vmem:[%s2 + $0x88] sm:$0xff]
  %v370 = vld [vmem:[%s2 + $0x90] sm:$0xff]
  %v371 = vld [vmem:[%s2 + $0x98] sm:$0xff]
  %v372 = vld [vmem:[%s2 + $0xa0] sm:$0xff]
  %v373 = vld [vmem:[%s2 + $0xa8] sm:$0xff]
  %v374 = vld [vmem:[%s2 + $0xb0] sm:$0xff]
  %v375 = vld [vmem:[%s2 + $0xb8] sm:$0xff]
  %v376 = vld [vmem:[%s2 + $0xc0] sm:$0xff]
  %v377 = vld [vmem:[%s2 + $0xc8] sm:$0xff]
  %v378 = vld [vmem:[%s2 + $0xd0] sm:$0xff]
  %v379 = vld [vmem:[%s2 + $0xd8] sm:$0xff]
  %v380 = vld [vmem:[%s2 + $0xe0] sm:$0xff]
  %v381 = vld [vmem:[%s2 + $0xe8] sm:$0xff]
  %v382 = vld [vmem:[%s2 + $0xf0] sm:$0xff]
  %v383 = vld [vmem:[%s2 + $0xf8] sm:$0xff]
  %384 = vmatpush.msra.mxu0 0.0
  %385 = vmatpush.msra.mxu0 0.0
  %386 = vmatpush.msra.mxu0 0.0
  %387 = vmatpush.msra.mxu0 0.0
  %388 = vmatpush.msra.mxu0 0.0
  %389 = vmatpush.msra.mxu0 0.0
  %390 = vmatpush.msra.mxu0 0.0
  %391 = vmatpush.msra.mxu0 0.0
  %392 = vmatpush.msra.mxu0 %v380
  %393 = vmatpush.msra.mxu0 %v376
  %394 = vmatpush.msra.mxu0 %v372
  %395 = vmatpush.msra.mxu0 %v368
  %396 = vmatpush.msra.mxu0 %v364
  %397 = vmatpush.msra.mxu0 %v360
  %398 = vmatpush.msra.mxu0 %v356
  %399 = vmatpush.msra.mxu0 %v352
  %400 = vmatmul.f32.gmra.mxu0 %v61
  %v401 = vpop.f32.mrf.mxu0
  %v402 = vadd.f32 0.0, %v401
  %403 = vmatmul.f32.gmra.mxu0 %v64
  %v404 = vpop.f32.mrf.mxu0
  %v405 = vadd.f32 0.0, %v404
  %406 = vmatmul.f32.gmra.mxu0 %v67
  %v407 = vpop.f32.mrf.mxu0
  %v408 = vadd.f32 0.0, %v407
  %409 = vmatmul.f32.gmra.mxu0 %v70
  %v410 = vpop.f32.mrf.mxu0
  %v411 = vadd.f32 0.0, %v410
  %412 = vdwg.mxu0
  %413 = vmatpush.msra.mxu0 0.0
  %414 = vmatpush.msra.mxu0 0.0
  %415 = vmatpush.msra.mxu0 0.0
  %416 = vmatpush.msra.mxu0 0.0
  %417 = vmatpush.msra.mxu0 0.0
  %418 = vmatpush.msra.mxu0 0.0
  %419 = vmatpush.msra.mxu0 0.0
  %420 = vmatpush.msra.mxu0 0.0
  %421 = vmatpush.msra.mxu0 %v381
  %422 = vmatpush.msra.mxu0 %v377
  %423 = vmatpush.msra.mxu0 %v373
  %424 = vmatpush.msra.mxu0 %v369
  %425 = vmatpush.msra.mxu0 %v365
  %426 = vmatpush.msra.mxu0 %v361
  %427 = vmatpush.msra.mxu0 %v357
  %428 = vmatpush.msra.mxu0 %v353
  %429 = vmatmul.f32.gmra.mxu0 %v61
  %v430 = vpop.f32.mrf.mxu0
  %v431 = vadd.f32 0.0, %v430
  %432 = vmatmul.f32.gmra.mxu0 %v64
  %v433 = vpop.f32.mrf.mxu0
  %v434 = vadd.f32 0.0, %v433
  %435 = vmatmul.f32.gmra.mxu0 %v67
  %v436 = vpop.f32.mrf.mxu0
  %v437 = vadd.f32 0.0, %v436
  %438 = vmatmul.f32.gmra.mxu0 %v70
  %v439 = vpop.f32.mrf.mxu0
  %v440 = vadd.f32 0.0, %v439
  %441 = vdwg.mxu0
  %442 = vmatpush.msra.mxu0 0.0
  %443 = vmatpush.msra.mxu0 0.0
  %444 = vmatpush.msra.mxu0 0.0
  %445 = vmatpush.msra.mxu0 0.0
  %446 = vmatpush.msra.mxu0 0.0
  %447 = vmatpush.msra.mxu0 0.0
  %448 = vmatpush.msra.mxu0 0.0
  %449 = vmatpush.msra.mxu0 0.0
  %450 = vmatpush.msra.mxu0 %v382
  %451 = vmatpush.msra.mxu0 %v378
  %452 = vmatpush.msra.mxu0 %v374
  %453 = vmatpush.msra.mxu0 %v370
  %454 = vmatpush.msra.mxu0 %v366
  %455 = vmatpush.msra.mxu0 %v362
  %456 = vmatpush.msra.mxu0 %v358
  %457 = vmatpush.msra.mxu0 %v354
  %458 = vmatmul.f32.gmra.mxu0 %v61
  %v459 = vpop.f32.mrf.mxu0
  %v460 = vadd.f32 0.0, %v459
  %461 = vmatmul.f32.gmra.mxu0 %v64
  %v462 = vpop.f32.mrf.mxu0
  %v463 = vadd.f32 0.0, %v462
  %464 = vmatmul.f32.gmra.mxu0 %v67
  %v465 = vpop.f32.mrf.mxu0
  %v466 = vadd.f32 0.0, %v465
  %467 = vmatmul.f32.gmra.mxu0 %v70
  %v468 = vpop.f32.mrf.mxu0
  %v469 = vadd.f32 0.0, %v468
  %470 = vdwg.mxu0
  %471 = vmatpush.msra.mxu0 0.0
  %472 = vmatpush.msra.mxu0 0.0
  %473 = vmatpush.msra.mxu0 0.0
  %474 = vmatpush.msra.mxu0 0.0
  %475 = vmatpush.msra.mxu0 0.0
  %476 = vmatpush.msra.mxu0 0.0
  %477 = vmatpush.msra.mxu0 0.0
  %478 = vmatpush.msra.mxu0 0.0
  %479 = vmatpush.msra.mxu0 %v383
  %480 = vmatpush.msra.mxu0 %v379
  %481 = vmatpush.msra.mxu0 %v375
  %482 = vmatpush.msra.mxu0 %v371
  %483 = vmatpush.msra.mxu0 %v367
  %484 = vmatpush.msra.mxu0 %v363
  %485 = vmatpush.msra.mxu0 %v359
  %486 = vmatpush.msra.mxu0 %v355
  %487 = vmatmul.f32.gmra.mxu0 %v61
  %v488 = vpop.f32.mrf.mxu0
  %v489 = vadd.f32 0.0, %v488
  %490 = vmatmul.f32.gmra.mxu0 %v64
  %v491 = vpop.f32.mrf.mxu0
  %v492 = vadd.f32 0.0, %v491
  %493 = vmatmul.f32.gmra.mxu0 %v67
  %v494 = vpop.f32.mrf.mxu0
  %v495 = vadd.f32 0.0, %v494
  %496 = vmatmul.f32.gmra.mxu0 %v70
  %v497 = vpop.f32.mrf.mxu0
  %v498 = vadd.f32 0.0, %v497
  %499 = vdwg.mxu0
  %v500 = vld [vmem:[%s3] sm:$0xff]
  %v501 = vld [vmem:[%s3 + $0x8] sm:$0xff]
  %v502 = vld [vmem:[%s3 + $0x10] sm:$0xff]
  %v503 = vld [vmem:[%s3 + $0x18] sm:$0xff]
  %v504 = vld [vmem:[%s3 + $0x20] sm:$0xff]
  %v505 = vld [vmem:[%s3 + $0x28] sm:$0xff]
  %v506 = vld [vmem:[%s3 + $0x30] sm:$0xff]
  %v507 = vld [vmem:[%s3 + $0x38] sm:$0xff]
  %v508 = vld [vmem:[%s3 + $0x40] sm:$0xff]
  %v509 = vld [vmem:[%s3 + $0x48] sm:$0xff]
  %v510 = vld [vmem:[%s3 + $0x50] sm:$0xff]
  %v511 = vld [vmem:[%s3 + $0x58] sm:$0xff]
  %v512 = vld [vmem:[%s3 + $0x60] sm:$0xff]
  %v513 = vld [vmem:[%s3 + $0x68] sm:$0xff]
  %v514 = vld [vmem:[%s3 + $0x70] sm:$0xff]
  %v515 = vld [vmem:[%s3 + $0x78] sm:$0xff]
  %v516 = vld [vmem:[%s3 + $0x80] sm:$0xff]
  %v517 = vld [vmem:[%s3 + $0x88] sm:$0xff]
  %v518 = vld [vmem:[%s3 + $0x90] sm:$0xff]
  %v519 = vld [vmem:[%s3 + $0x98] sm:$0xff]
  %v520 = vld [vmem:[%s3 + $0xa0] sm:$0xff]
  %v521 = vld [vmem:[%s3 + $0xa8] sm:$0xff]
  %v522 = vld [vmem:[%s3 + $0xb0] sm:$0xff]
  %v523 = vld [vmem:[%s3 + $0xb8] sm:$0xff]
  %v524 = vld [vmem:[%s3 + $0xc0] sm:$0xff]
  %v525 = vld [vmem:[%s3 + $0xc8] sm:$0xff]
  %v526 = vld [vmem:[%s3 + $0xd0] sm:$0xff]
  %v527 = vld [vmem:[%s3 + $0xd8] sm:$0xff]
  %v528 = vld [vmem:[%s3 + $0xe0] sm:$0xff]
  %v529 = vld [vmem:[%s3 + $0xe8] sm:$0xff]
  %v530 = vld [vmem:[%s3 + $0xf0] sm:$0xff]
  %v531 = vld [vmem:[%s3 + $0xf8] sm:$0xff]
  %532 = vmatpush.msra.mxu0 0.0
  %533 = vmatpush.msra.mxu0 0.0
  %534 = vmatpush.msra.mxu0 0.0
  %535 = vmatpush.msra.mxu0 0.0
  %536 = vmatpush.msra.mxu0 0.0
  %537 = vmatpush.msra.mxu0 0.0
  %538 = vmatpush.msra.mxu0 0.0
  %539 = vmatpush.msra.mxu0 0.0
  %540 = vmatpush.msra.mxu0 %v528
  %541 = vmatpush.msra.mxu0 %v524
  %542 = vmatpush.msra.mxu0 %v520
  %543 = vmatpush.msra.mxu0 %v516
  %544 = vmatpush.msra.mxu0 %v512
  %545 = vmatpush.msra.mxu0 %v508
  %546 = vmatpush.msra.mxu0 %v504
  %547 = vmatpush.msra.mxu0 %v500
  %548 = vmatmul.f32.gmra.mxu0 %v61
  %v549 = vpop.f32.mrf.mxu0
  %v550 = vadd.f32 0.0, %v549
  %551 = vmatmul.f32.gmra.mxu0 %v64
  %v552 = vpop.f32.mrf.mxu0
  %v553 = vadd.f32 0.0, %v552
  %554 = vmatmul.f32.gmra.mxu0 %v67
  %v555 = vpop.f32.mrf.mxu0
  %v556 = vadd.f32 0.0, %v555
  %557 = vmatmul.f32.gmra.mxu0 %v70
  %v558 = vpop.f32.mrf.mxu0
  %v559 = vadd.f32 0.0, %v558
  %560 = vdwg.mxu0
  %561 = vmatpush.msra.mxu0 0.0
  %562 = vmatpush.msra.mxu0 0.0
  %563 = vmatpush.msra.mxu0 0.0
  %564 = vmatpush.msra.mxu0 0.0
  %565 = vmatpush.msra.mxu0 0.0
  %566 = vmatpush.msra.mxu0 0.0
  %567 = vmatpush.msra.mxu0 0.0
  %568 = vmatpush.msra.mxu0 0.0
  %569 = vmatpush.msra.mxu0 %v529
  %570 = vmatpush.msra.mxu0 %v525
  %571 = vmatpush.msra.mxu0 %v521
  %572 = vmatpush.msra.mxu0 %v517
  %573 = vmatpush.msra.mxu0 %v513
  %574 = vmatpush.msra.mxu0 %v509
  %575 = vmatpush.msra.mxu0 %v505
  %576 = vmatpush.msra.mxu0 %v501
  %577 = vmatmul.f32.gmra.mxu0 %v61
  %v578 = vpop.f32.mrf.mxu0
  %v579 = vadd.f32 0.0, %v578
  %580 = vmatmul.f32.gmra.mxu0 %v64
  %v581 = vpop.f32.mrf.mxu0
  %v582 = vadd.f32 0.0, %v581
  %583 = vmatmul.f32.gmra.mxu0 %v67
  %v584 = vpop.f32.mrf.mxu0
  %v585 = vadd.f32 0.0, %v584
  %586 = vmatmul.f32.gmra.mxu0 %v70
  %v587 = vpop.f32.mrf.mxu0
  %v588 = vadd.f32 0.0, %v587
  %589 = vdwg.mxu0
  %590 = vmatpush.msra.mxu0 0.0
  %591 = vmatpush.msra.mxu0 0.0
  %592 = vmatpush.msra.mxu0 0.0
  %593 = vmatpush.msra.mxu0 0.0
  %594 = vmatpush.msra.mxu0 0.0
  %595 = vmatpush.msra.mxu0 0.0
  %596 = vmatpush.msra.mxu0 0.0
  %597 = vmatpush.msra.mxu0 0.0
  %598 = vmatpush.msra.mxu0 %v530
  %599 = vmatpush.msra.mxu0 %v526
  %600 = vmatpush.msra.mxu0 %v522
  %601 = vmatpush.msra.mxu0 %v518
  %602 = vmatpush.msra.mxu0 %v514
  %603 = vmatpush.msra.mxu0 %v510
  %604 = vmatpush.msra.mxu0 %v506
  %605 = vmatpush.msra.mxu0 %v502
  %606 = vmatmul.f32.gmra.mxu0 %v61
  %v607 = vpop.f32.mrf.mxu0
  %v608 = vadd.f32 0.0, %v607
  %609 = vmatmul.f32.gmra.mxu0 %v64
  %v610 = vpop.f32.mrf.mxu0
  %v611 = vadd.f32 0.0, %v610
  %612 = vmatmul.f32.gmra.mxu0 %v67
  %v613 = vpop.f32.mrf.mxu0
  %v614 = vadd.f32 0.0, %v613
  %615 = vmatmul.f32.gmra.mxu0 %v70
  %v616 = vpop.f32.mrf.mxu0
  %v617 = vadd.f32 0.0, %v616
  %618 = vdwg.mxu0
  %619 = vmatpush.msra.mxu0 0.0
  %620 = vmatpush.msra.mxu0 0.0
  %621 = vmatpush.msra.mxu0 0.0
  %622 = vmatpush.msra.mxu0 0.0
  %623 = vmatpush.msra.mxu0 0.0
  %624 = vmatpush.msra.mxu0 0.0
  %625 = vmatpush.msra.mxu0 0.0
  %626 = vmatpush.msra.mxu0 0.0
  %627 = vmatpush.msra.mxu0 %v531
  %628 = vmatpush.msra.mxu0 %v527
  %629 = vmatpush.msra.mxu0 %v523
  %630 = vmatpush.msra.mxu0 %v519
  %631 = vmatpush.msra.mxu0 %v515
  %632 = vmatpush.msra.mxu0 %v511
  %633 = vmatpush.msra.mxu0 %v507
  %634 = vmatpush.msra.mxu0 %v503
  %635 = vmatmul.f32.gmra.mxu0 %v61
  %v636 = vpop.f32.mrf.mxu0
  %v637 = vadd.f32 0.0, %v636
  %638 = vmatmul.f32.gmra.mxu0 %v64
  %v639 = vpop.f32.mrf.mxu0
  %v640 = vadd.f32 0.0, %v639
  %641 = vmatmul.f32.gmra.mxu0 %v67
  %v642 = vpop.f32.mrf.mxu0
  %v643 = vadd.f32 0.0, %v642
  %644 = vmatmul.f32.gmra.mxu0 %v70
  %v645 = vpop.f32.mrf.mxu0
  %v646 = vadd.f32 0.0, %v645
  %647 = vdwg.mxu0
  %v648 = vmax.f32 %v402, %v550
  %v649 = vmax.f32 %v431, %v579
  %v650 = vmax.f32 %v460, %v608
  %v651 = vmax.f32 %v489, %v637
  %v652 = vmax.f32 %v405, %v553
  %v653 = vmax.f32 %v434, %v582
  %v654 = vmax.f32 %v463, %v611
  %v655 = vmax.f32 %v492, %v640
  %v656 = vmax.f32 %v408, %v556
  %v657 = vmax.f32 %v437, %v585
  %v658 = vmax.f32 %v466, %v614
  %v659 = vmax.f32 %v495, %v643
  %v660 = vmax.f32 %v411, %v559
  %v661 = vmax.f32 %v440, %v588
  %v662 = vmax.f32 %v469, %v617
  %v663 = vmax.f32 %v498, %v646
  %v664 = vmax.f32 %v336, %v648
  %v665 = vmax.f32 %v337, %v649
  %v666 = vmax.f32 %v338, %v650
  %v667 = vmax.f32 %v339, %v651
  %v668 = vmax.f32 %v340, %v652
  %v669 = vmax.f32 %v341, %v653
  %v670 = vmax.f32 %v342, %v654
  %v671 = vmax.f32 %v343, %v655
  %v672 = vmax.f32 %v344, %v656
  %v673 = vmax.f32 %v345, %v657
  %v674 = vmax.f32 %v346, %v658
  %v675 = vmax.f32 %v347, %v659
  %v676 = vmax.f32 %v348, %v660
  %v677 = vmax.f32 %v349, %v661
  %v678 = vmax.f32 %v350, %v662
  %v679 = vmax.f32 %v351, %v663
  %v680 = vld [vmem:[%s5] sm:$0xff]
  %v681 = vld [vmem:[%s5 + $0x8] sm:$0xff]
  %v682 = vld [vmem:[%s5 + $0x10] sm:$0xff]
  %v683 = vld [vmem:[%s5 + $0x18] sm:$0xff]
  %685 = vset.pattern.permute.xlu0 0
  %686 = vperm.xlu0 %685, %v680
  %v687 = vpop.permute.xlu0 %686
  %690 = vset.pattern.permute.xlu0 0
  %691 = vperm.xlu0 %690, %v681
  %v692 = vpop.permute.xlu0 %691
  %695 = vset.pattern.permute.xlu0 0
  %696 = vperm.xlu0 %695, %v682
  %v697 = vpop.permute.xlu0 %696
  %700 = vset.pattern.permute.xlu0 0
  %701 = vperm.xlu0 %700, %v683
  %v702 = vpop.permute.xlu0 %701
  %v704 = vadd.f32 %v664, %v687
  %v705 = vadd.f32 %v665, %v687
  %v706 = vadd.f32 %v666, %v687
  %v707 = vadd.f32 %v667, %v687
  %v708 = vadd.f32 %v668, %v692
  %v709 = vadd.f32 %v669, %v692
  %v710 = vadd.f32 %v670, %v692
  %v711 = vadd.f32 %v671, %v692
  %v712 = vadd.f32 %v672, %v697
  %v713 = vadd.f32 %v673, %v697
  %v714 = vadd.f32 %v674, %v697
  %v715 = vadd.f32 %v675, %v697
  %v716 = vadd.f32 %v676, %v702
  %v717 = vadd.f32 %v677, %v702
  %v718 = vadd.f32 %v678, %v702
  %v719 = vadd.f32 %v679, %v702
  %v720 = vmax.f32 %v704, 0.0
  %v721 = vmax.f32 %v705, 0.0
  %v722 = vmax.f32 %v706, 0.0
  %v723 = vmax.f32 %v707, 0.0
  %v724 = vmax.f32 %v708, 0.0
  %v725 = vmax.f32 %v709, 0.0
  %v726 = vmax.f32 %v710, 0.0
  %v727 = vmax.f32 %v711, 0.0
  %v728 = vmax.f32 %v712, 0.0
  %v729 = vmax.f32 %v713, 0.0
  %v730 = vmax.f32 %v714, 0.0
  %v731 = vmax.f32 %v715, 0.0
  %v732 = vmax.f32 %v716, 0.0
  %v733 = vmax.f32 %v717, 0.0
  %v734 = vmax.f32 %v718, 0.0
  %v735 = vmax.f32 %v719, 0.0
  %736 = vst [vmem:[%s6] sm:$0xff] %v720
  %737 = vst [vmem:[%s6 + $0x8] sm:$0xff] %v721
  %738 = vst [vmem:[%s6 + $0x10] sm:$0xff] %v722
  %vm739 = vcmask 130048
  %740 = vst.msk [vmem:[%s6 + $0x18] sm:$0xff] %vm739, %v723
  %741 = vst [vmem:[%s6 + $0x20] sm:$0xff] %v724
  %742 = vst [vmem:[%s6 + $0x28] sm:$0xff] %v725
  %743 = vst [vmem:[%s6 + $0x30] sm:$0xff] %v726
  %744 = vst.msk [vmem:[%s6 + $0x38] sm:$0xff] %vm739, %v727
  %745 = vst [vmem:[%s6 + $0x40] sm:$0xff] %v728
  %746 = vst [vmem:[%s6 + $0x48] sm:$0xff] %v729
  %747 = vst [vmem:[%s6 + $0x50] sm:$0xff] %v730
  %748 = vst.msk [vmem:[%s6 + $0x58] sm:$0xff] %vm739, %v731
  %749 = vst [vmem:[%s6 + $0x60] sm:$0xff] %v732
  %750 = vst [vmem:[%s6 + $0x68] sm:$0xff] %v733
  %751 = vst [vmem:[%s6 + $0x70] sm:$0xff] %v734
  %752 = vst.msk [vmem:[%s6 + $0x78] sm:$0xff] %vm739, %v735
  // Predicated region
  $region26: #{deep_rqnet_forward.4} parent=0 // pred_check
    _
  $region27: #{deep_rqnet_forward.4} parent=0 // pred_check_branch
    %754 = sbr.rel (0) target = $region29
  $region28: #{deep_rqnet_forward.4} parent=0 // pred_region
    _
  $region29: #{deep_rqnet_forward.4} parent=0 // pred_fallthru
    _
  // Predicated region
  $region30: #{deep_rqnet_forward.4} parent=0 // pred_check
    _
  $region31: #{deep_rqnet_forward.4} parent=0 // pred_check_branch
    %756 = sbr.rel (0) target = $region33
  $region32: #{deep_rqnet_forward.4} parent=0 // pred_region
    _
  $region33: #{deep_rqnet_forward.4} parent=0 // pred_fallthru
    _

// kernel: deep_rqnet_forward.5
$region0: #{deep_rqnet_forward.5}
  #allocation0 [shape = 'u32[]', space=smem, size = 0x4, offset = 0x4, fixed_abs, tag = 'smem constant byte address 0x4 - core index']
  #allocation1 [shape = 'u32[72,128]{1,0:T(1,128)}', space=vmem, size = 0x9000, scoped, tag = 'internal scratch']
  %s0 = inlined_call_operand.vmem [shape: f32[36,512], index: 0, kind: input, shape index: {}]
  %s1 = inlined_call_operand.vmem [shape: f32[36,512], index: 1, kind: input, shape index: {}]
  %s2 = inlined_call_operand.vmem [shape: f32[36,512], index: 2, kind: input, shape index: {}]
  %s3 = inlined_call_operand.vmem [shape: f32[36,512], index: 3, kind: input, shape index: {}]
  %s4 = inlined_call_operand.vmem [shape: f32[512,64], index: 4, kind: input, shape index: {}]
  %s5 = inlined_call_operand.vmem [shape: f32[1,64], index: 5, kind: input, shape index: {}]
  %s6 = inlined_call_operand.vmem [shape: f32[36,64], index: 6, kind: output, shape index: {}]
  %s7 = sld [smem:[#allocation0]]
  $region34: #{deep_rqnet_forward.5} parent=0
    _
  %s9 = ssub.s32 1, %s7
  %s10 = scalar_select 0, %s9, %s7
  // Predicated region
  $region2: #{deep_rqnet_forward.5} parent=0 // pred_check
    _
  $region3: #{deep_rqnet_forward.5} parent=0 // pred_check_branch
    %12 = sbr.rel (0) target = $region5
  $region4: #{deep_rqnet_forward.5} parent=0 // pred_region
    _
  $region5: #{deep_rqnet_forward.5} parent=0 // pred_fallthru
    _
  // Predicated region
  $region6: #{deep_rqnet_forward.5} parent=0 // pred_check
    _
  $region7: #{deep_rqnet_forward.5} parent=0 // pred_check_branch
    %14 = sbr.rel (0) target = $region9
  $region8: #{deep_rqnet_forward.5} parent=0 // pred_region
    _
  $region9: #{deep_rqnet_forward.5} parent=0 // pred_fallthru
    _
  // Predicated region
  $region10: #{deep_rqnet_forward.5} parent=0 // pred_check
    _
  $region11: #{deep_rqnet_forward.5} parent=0 // pred_check_branch
    %16 = sbr.rel (0) target = $region13
  $region12: #{deep_rqnet_forward.5} parent=0 // pred_region
    _
  $region13: #{deep_rqnet_forward.5} parent=0 // pred_fallthru
    _
  // Predicated region
  $region14: #{deep_rqnet_forward.5} parent=0 // pred_check
    _
  $region15: #{deep_rqnet_forward.5} parent=0 // pred_check_branch
    %18 = sbr.rel (0) target = $region17
  $region16: #{deep_rqnet_forward.5} parent=0 // pred_region
    _
  $region17: #{deep_rqnet_forward.5} parent=0 // pred_fallthru
    _
  // Predicated region
  $region18: #{deep_rqnet_forward.5} parent=0 // pred_check
    _
  $region19: #{deep_rqnet_forward.5} parent=0 // pred_check_branch
    %20 = sbr.rel (0) target = $region21
  $region20: #{deep_rqnet_forward.5} parent=0 // pred_region
    _
  $region21: #{deep_rqnet_forward.5} parent=0 // pred_fallthru
    _
  // Predicated region
  $region22: #{deep_rqnet_forward.5} parent=0 // pred_check
    _
  $region23: #{deep_rqnet_forward.5} parent=0 // pred_check_branch
    %22 = sbr.rel (0) target = $region25
  $region24: #{deep_rqnet_forward.5} parent=0 // pred_region
    _
  $region25: #{deep_rqnet_forward.5} parent=0 // pred_fallthru
    _
  %v23 = vld [vmem:[%s4] sm:$0xff]
  %v24 = vld [vmem:[%s4 + $0x8] sm:$0xff]
  %v25 = vld [vmem:[%s4 + $0x10] sm:$0xff]
  %v26 = vld [vmem:[%s4 + $0x18] sm:$0xff]
  %v27 = vld [vmem:[%s4 + $0x20] sm:$0xff]
  %v28 = vld [vmem:[%s4 + $0x28] sm:$0xff]
  %v29 = vld [vmem:[%s4 + $0x30] sm:$0xff]
  %v30 = vld [vmem:[%s4 + $0x38] sm:$0xff]
  %v31 = vld [vmem:[%s4 + $0x40] sm:$0xff]
  %v32 = vld [vmem:[%s4 + $0x48] sm:$0xff]
  %v33 = vld [vmem:[%s4 + $0x50] sm:$0xff]
  %v34 = vld [vmem:[%s4 + $0x58] sm:$0xff]
  %v35 = vld [vmem:[%s4 + $0x60] sm:$0xff]
  %v36 = vld [vmem:[%s4 + $0x68] sm:$0xff]
  %v37 = vld [vmem:[%s4 + $0x70] sm:$0xff]
  %v38 = vld [vmem:[%s4 + $0x78] sm:$0xff]
  %v39 = vld [vmem:[%s4 + $0x80] sm:$0xff]
  %v40 = vld [vmem:[%s4 + $0x88] sm:$0xff]
  %v41 = vld [vmem:[%s4 + $0x90] sm:$0xff]
  %v42 = vld [vmem:[%s4 + $0x98] sm:$0xff]
  %v43 = vld [vmem:[%s4 + $0xa0] sm:$0xff]
  %v44 = vld [vmem:[%s4 + $0xa8] sm:$0xff]
  %v45 = vld [vmem:[%s4 + $0xb0] sm:$0xff]
  %v46 = vld [vmem:[%s4 + $0xb8] sm:$0xff]
  %v47 = vld [vmem:[%s4 + $0xc0] sm:$0xff]
  %v48 = vld [vmem:[%s4 + $0xc8] sm:$0xff]
  %v49 = vld [vmem:[%s4 + $0xd0] sm:$0xff]
  %v50 = vld [vmem:[%s4 + $0xd8] sm:$0xff]
  %v51 = vld [vmem:[%s4 + $0xe0] sm:$0xff]
  %v52 = vld [vmem:[%s4 + $0xe8] sm:$0xff]
  %v53 = vld [vmem:[%s4 + $0xf0] sm:$0xff]
  %v54 = vld [vmem:[%s4 + $0xf8] sm:$0xff]
  %v55 = vld [vmem:[%s4 + $0x100] sm:$0xff]
  %v56 = vld [vmem:[%s4 + $0x108] sm:$0xff]
  %v57 = vld [vmem:[%s4 + $0x110] sm:$0xff]
  %v58 = vld [vmem:[%s4 + $0x118] sm:$0xff]
  %v59 = vld [vmem:[%s4 + $0x120] sm:$0xff]
  %v60 = vld [vmem:[%s4 + $0x128] sm:$0xff]
  %v61 = vld [vmem:[%s4 + $0x130] sm:$0xff]
  %v62 = vld [vmem:[%s4 + $0x138] sm:$0xff]
  %v63 = vld [vmem:[%s4 + $0x140] sm:$0xff]
  %v64 = vld [vmem:[%s4 + $0x148] sm:$0xff]
  %v65 = vld [vmem:[%s4 + $0x150] sm:$0xff]
  %v66 = vld [vmem:[%s4 + $0x158] sm:$0xff]
  %v67 = vld [vmem:[%s4 + $0x160] sm:$0xff]
  %v68 = vld [vmem:[%s4 + $0x168] sm:$0xff]
  %v69 = vld [vmem:[%s4 + $0x170] sm:$0xff]
  %v70 = vld [vmem:[%s4 + $0x178] sm:$0xff]
  %v71 = vld [vmem:[%s4 + $0x180] sm:$0xff]
  %v72 = vld [vmem:[%s4 + $0x188] sm:$0xff]
  %v73 = vld [vmem:[%s4 + $0x190] sm:$0xff]
  %v74 = vld [vmem:[%s4 + $0x198] sm:$0xff]
  %v75 = vld [vmem:[%s4 + $0x1a0] sm:$0xff]
  %v76 = vld [vmem:[%s4 + $0x1a8] sm:$0xff]
  %v77 = vld [vmem:[%s4 + $0x1b0] sm:$0xff]
  %v78 = vld [vmem:[%s4 + $0x1b8] sm:$0xff]
  %v79 = vld [vmem:[%s4 + $0x1c0] sm:$0xff]
  %v80 = vld [vmem:[%s4 + $0x1c8] sm:$0xff]
  %v81 = vld [vmem:[%s4 + $0x1d0] sm:$0xff]
  %v82 = vld [vmem:[%s4 + $0x1d8] sm:$0xff]
  %v83 = vld [vmem:[%s4 + $0x1e0] sm:$0xff]
  %v84 = vld [vmem:[%s4 + $0x1e8] sm:$0xff]
  %v85 = vld [vmem:[%s4 + $0x1f0] sm:$0xff]
  %v86 = vld [vmem:[%s4 + $0x1f8] sm:$0xff]
  %v87 = vld [vmem:[%s0] sm:$0xff]
  %v88 = vld [vmem:[%s0 + $0x8] sm:$0xff]
  %v89 = vld [vmem:[%s0 + $0x10] sm:$0xff]
  %v90 = vld [vmem:[%s0 + $0x18] sm:$0xff]
  %v91 = vld [vmem:[%s0 + $0x20] sm:$0xff]
  %v92 = vld [vmem:[%s0 + $0x28] sm:$0xff]
  %v93 = vld [vmem:[%s0 + $0x30] sm:$0xff]
  %v94 = vld [vmem:[%s0 + $0x38] sm:$0xff]
  %v95 = vld [vmem:[%s0 + $0x40] sm:$0xff]
  %v96 = vld [vmem:[%s0 + $0x48] sm:$0xff]
  %v97 = vld [vmem:[%s0 + $0x50] sm:$0xff]
  %v98 = vld [vmem:[%s0 + $0x58] sm:$0xff]
  %v99 = vld [vmem:[%s0 + $0x60] sm:$0xff]
  %v100 = vld [vmem:[%s0 + $0x68] sm:$0xff]
  %v101 = vld [vmem:[%s0 + $0x70] sm:$0xff]
  %v102 = vld [vmem:[%s0 + $0x78] sm:$0xff]
  %v103 = vld [vmem:[%s0 + $0x80] sm:$0xf]
  %v104 = vld [vmem:[%s0 + $0x88] sm:$0xf]
  %v105 = vld [vmem:[%s0 + $0x90] sm:$0xf]
  %v106 = vld [vmem:[%s0 + $0x98] sm:$0xf]
  %107 = vmatpush.msra.mxu0 %v38
  %108 = vmatpush.msra.mxu0 %v37
  %109 = vmatpush.msra.mxu0 %v36
  %110 = vmatpush.msra.mxu0 %v35
  %111 = vmatpush.msra.mxu0 %v34
  %112 = vmatpush.msra.mxu0 %v33
  %113 = vmatpush.msra.mxu0 %v32
  %114 = vmatpush.msra.mxu0 %v31
  %115 = vmatpush.msra.mxu0 %v30
  %116 = vmatpush.msra.mxu0 %v29
  %117 = vmatpush.msra.mxu0 %v28
  %118 = vmatpush.msra.mxu0 %v27
  %119 = vmatpush.msra.mxu0 %v26
  %120 = vmatpush.msra.mxu0 %v25
  %121 = vmatpush.msra.mxu0 %v24
  %122 = vmatpush.msra.mxu0 %v23
  %123 = vmatmul.f32.gmra.mxu0 %v87
  %v124 = vpop.f32.mrf.mxu0
  %v125 = vadd.f32 0.0, %v124
  %126 = vmatmul.f32.gmra.mxu0 %v91
  %v127 = vpop.f32.mrf.mxu0
  %v128 = vadd.f32 0.0, %v127
  %129 = vmatmul.f32.gmra.mxu0 %v95
  %v130 = vpop.f32.mrf.mxu0
  %v131 = vadd.f32 0.0, %v130
  %132 = vmatmul.f32.gmra.mxu0 %v99
  %v133 = vpop.f32.mrf.mxu0
  %v134 = vadd.f32 0.0, %v133
  %135 = vmatmul.f32.gmra.mxu0 %v103
  %v136 = vpop.f32.mrf.mxu0
  %v137 = vadd.f32 0.0, %v136
  %138 = vdwg.mxu0
  %139 = vmatpush.msra.mxu0 %v54
  %140 = vmatpush.msra.mxu0 %v53
  %141 = vmatpush.msra.mxu0 %v52
  %142 = vmatpush.msra.mxu0 %v51
  %143 = vmatpush.msra.mxu0 %v50
  %144 = vmatpush.msra.mxu0 %v49
  %145 = vmatpush.msra.mxu0 %v48
  %146 = vmatpush.msra.mxu0 %v47
  %147 = vmatpush.msra.mxu0 %v46
  %148 = vmatpush.msra.mxu0 %v45
  %149 = vmatpush.msra.mxu0 %v44
  %150 = vmatpush.msra.mxu0 %v43
  %151 = vmatpush.msra.mxu0 %v42
  %152 = vmatpush.msra.mxu0 %v41
  %153 = vmatpush.msra.mxu0 %v40
  %154 = vmatpush.msra.mxu0 %v39
  %155 = vmatmul.f32.gmra.mxu0 %v88
  %v156 = vpop.f32.mrf.mxu0
  %v157 = vadd.f32 %v125, %v156
  %158 = vmatmul.f32.gmra.mxu0 %v92
  %v159 = vpop.f32.mrf.mxu0
  %v160 = vadd.f32 %v128, %v159
  %161 = vmatmul.f32.gmra.mxu0 %v96
  %v162 = vpop.f32.mrf.mxu0
  %v163 = vadd.f32 %v131, %v162
  %164 = vmatmul.f32.gmra.mxu0 %v100
  %v165 = vpop.f32.mrf.mxu0
  %v166 = vadd.f32 %v134, %v165
  %167 = vmatmul.f32.gmra.mxu0 %v104
  %v168 = vpop.f32.mrf.mxu0
  %v169 = vadd.f32 %v137, %v168
  %170 = vdwg.mxu0
  %171 = vmatpush.msra.mxu0 %v70
  %172 = vmatpush.msra.mxu0 %v69
  %173 = vmatpush.msra.mxu0 %v68
  %174 = vmatpush.msra.mxu0 %v67
  %175 = vmatpush.msra.mxu0 %v66
  %176 = vmatpush.msra.mxu0 %v65
  %177 = vmatpush.msra.mxu0 %v64
  %178 = vmatpush.msra.mxu0 %v63
  %179 = vmatpush.msra.mxu0 %v62
  %180 = vmatpush.msra.mxu0 %v61
  %181 = vmatpush.msra.mxu0 %v60
  %182 = vmatpush.msra.mxu0 %v59
  %183 = vmatpush.msra.mxu0 %v58
  %184 = vmatpush.msra.mxu0 %v57
  %185 = vmatpush.msra.mxu0 %v56
  %186 = vmatpush.msra.mxu0 %v55
  %187 = vmatmul.f32.gmra.mxu0 %v89
  %v188 = vpop.f32.mrf.mxu0
  %v189 = vadd.f32 %v157, %v188
  %190 = vmatmul.f32.gmra.mxu0 %v93
  %v191 = vpop.f32.mrf.mxu0
  %v192 = vadd.f32 %v160, %v191
  %193 = vmatmul.f32.gmra.mxu0 %v97
  %v194 = vpop.f32.mrf.mxu0
  %v195 = vadd.f32 %v163, %v194
  %196 = vmatmul.f32.gmra.mxu0 %v101
  %v197 = vpop.f32.mrf.mxu0
  %v198 = vadd.f32 %v166, %v197
  %199 = vmatmul.f32.gmra.mxu0 %v105
  %v200 = vpop.f32.mrf.mxu0
  %v201 = vadd.f32 %v169, %v200
  %202 = vdwg.mxu0
  %203 = vmatpush.msra.mxu0 %v86
  %204 = vmatpush.msra.mxu0 %v85
  %205 = vmatpush.msra.mxu0 %v84
  %206 = vmatpush.msra.mxu0 %v83
  %207 = vmatpush.msra.mxu0 %v82
  %208 = vmatpush.msra.mxu0 %v81
  %209 = vmatpush.msra.mxu0 %v80
  %210 = vmatpush.msra.mxu0 %v79
  %211 = vmatpush.msra.mxu0 %v78
  %212 = vmatpush.msra.mxu0 %v77
  %213 = vmatpush.msra.mxu0 %v76
  %214 = vmatpush.msra.mxu0 %v75
  %215 = vmatpush.msra.mxu0 %v74
  %216 = vmatpush.msra.mxu0 %v73
  %217 = vmatpush.msra.mxu0 %v72
  %218 = vmatpush.msra.mxu0 %v71
  %219 = vmatmul.f32.gmra.mxu0 %v90
  %v220 = vpop.f32.mrf.mxu0
  %v221 = vadd.f32 %v189, %v220
  %222 = vmatmul.f32.gmra.mxu0 %v94
  %v223 = vpop.f32.mrf.mxu0
  %v224 = vadd.f32 %v192, %v223
  %225 = vmatmul.f32.gmra.mxu0 %v98
  %v226 = vpop.f32.mrf.mxu0
  %v227 = vadd.f32 %v195, %v226
  %228 = vmatmul.f32.gmra.mxu0 %v102
  %v229 = vpop.f32.mrf.mxu0
  %v230 = vadd.f32 %v198, %v229
  %231 = vmatmul.f32.gmra.mxu0 %v106
  %v232 = vpop.f32.mrf.mxu0
  %v233 = vadd.f32 %v201, %v232
  %234 = vdwg.mxu0
  %v235 = vld [vmem:[%s1] sm:$0xff]
  %v236 = vld [vmem:[%s1 + $0x8] sm:$0xff]
  %v237 = vld [vmem:[%s1 + $0x10] sm:$0xff]
  %v238 = vld [vmem:[%s1 + $0x18] sm:$0xff]
  %v239 = vld [vmem:[%s1 + $0x20] sm:$0xff]
  %v240 = vld [vmem:[%s1 + $0x28] sm:$0xff]
  %v241 = vld [vmem:[%s1 + $0x30] sm:$0xff]
  %v242 = vld [vmem:[%s1 + $0x38] sm:$0xff]
  %v243 = vld [vmem:[%s1 + $0x40] sm:$0xff]
  %v244 = vld [vmem:[%s1 + $0x48] sm:$0xff]
  %v245 = vld [vmem:[%s1 + $0x50] sm:$0xff]
  %v246 = vld [vmem:[%s1 + $0x58] sm:$0xff]
  %v247 = vld [vmem:[%s1 + $0x60] sm:$0xff]
  %v248 = vld [vmem:[%s1 + $0x68] sm:$0xff]
  %v249 = vld [vmem:[%s1 + $0x70] sm:$0xff]
  %v250 = vld [vmem:[%s1 + $0x78] sm:$0xff]
  %v251 = vld [vmem:[%s1 + $0x80] sm:$0xf]
  %v252 = vld [vmem:[%s1 + $0x88] sm:$0xf]
  %v253 = vld [vmem:[%s1 + $0x90] sm:$0xf]
  %v254 = vld [vmem:[%s1 + $0x98] sm:$0xf]
  %255 = vmatpush.msra.mxu0 %v38
  %256 = vmatpush.msra.mxu0 %v37
  %257 = vmatpush.msra.mxu0 %v36
  %258 = vmatpush.msra.mxu0 %v35
  %259 = vmatpush.msra.mxu0 %v34
  %260 = vmatpush.msra.mxu0 %v33
  %261 = vmatpush.msra.mxu0 %v32
  %262 = vmatpush.msra.mxu0 %v31
  %263 = vmatpush.msra.mxu0 %v30
  %264 = vmatpush.msra.mxu0 %v29
  %265 = vmatpush.msra.mxu0 %v28
  %266 = vmatpush.msra.mxu0 %v27
  %267 = vmatpush.msra.mxu0 %v26
  %268 = vmatpush.msra.mxu0 %v25
  %269 = vmatpush.msra.mxu0 %v24
  %270 = vmatpush.msra.mxu0 %v23
  %271 = vmatmul.f32.gmra.mxu0 %v235
  %v272 = vpop.f32.mrf.mxu0
  %v273 = vadd.f32 0.0, %v272
  %274 = vmatmul.f32.gmra.mxu0 %v239
  %v275 = vpop.f32.mrf.mxu0
  %v276 = vadd.f32 0.0, %v275
  %277 = vmatmul.f32.gmra.mxu0 %v243
  %v278 = vpop.f32.mrf.mxu0
  %v279 = vadd.f32 0.0, %v278
  %280 = vmatmul.f32.gmra.mxu0 %v247
  %v281 = vpop.f32.mrf.mxu0
  %v282 = vadd.f32 0.0, %v281
  %283 = vmatmul.f32.gmra.mxu0 %v251
  %v284 = vpop.f32.mrf.mxu0
  %v285 = vadd.f32 0.0, %v284
  %286 = vdwg.mxu0
  %287 = vmatpush.msra.mxu0 %v54
  %288 = vmatpush.msra.mxu0 %v53
  %289 = vmatpush.msra.mxu0 %v52
  %290 = vmatpush.msra.mxu0 %v51
  %291 = vmatpush.msra.mxu0 %v50
  %292 = vmatpush.msra.mxu0 %v49
  %293 = vmatpush.msra.mxu0 %v48
  %294 = vmatpush.msra.mxu0 %v47
  %295 = vmatpush.msra.mxu0 %v46
  %296 = vmatpush.msra.mxu0 %v45
  %297 = vmatpush.msra.mxu0 %v44
  %298 = vmatpush.msra.mxu0 %v43
  %299 = vmatpush.msra.mxu0 %v42
  %300 = vmatpush.msra.mxu0 %v41
  %301 = vmatpush.msra.mxu0 %v40
  %302 = vmatpush.msra.mxu0 %v39
  %303 = vmatmul.f32.gmra.mxu0 %v236
  %v304 = vpop.f32.mrf.mxu0
  %v305 = vadd.f32 %v273, %v304
  %306 = vmatmul.f32.gmra.mxu0 %v240
  %v307 = vpop.f32.mrf.mxu0
  %v308 = vadd.f32 %v276, %v307
  %309 = vmatmul.f32.gmra.mxu0 %v244
  %v310 = vpop.f32.mrf.mxu0
  %v311 = vadd.f32 %v279, %v310
  %312 = vmatmul.f32.gmra.mxu0 %v248
  %v313 = vpop.f32.mrf.mxu0
  %v314 = vadd.f32 %v282, %v313
  %315 = vmatmul.f32.gmra.mxu0 %v252
  %v316 = vpop.f32.mrf.mxu0
  %v317 = vadd.f32 %v285, %v316
  %318 = vdwg.mxu0
  %319 = vmatpush.msra.mxu0 %v70
  %320 = vmatpush.msra.mxu0 %v69
  %321 = vmatpush.msra.mxu0 %v68
  %322 = vmatpush.msra.mxu0 %v67
  %323 = vmatpush.msra.mxu0 %v66
  %324 = vmatpush.msra.mxu0 %v65
  %325 = vmatpush.msra.mxu0 %v64
  %326 = vmatpush.msra.mxu0 %v63
  %327 = vmatpush.msra.mxu0 %v62
  %328 = vmatpush.msra.mxu0 %v61
  %329 = vmatpush.msra.mxu0 %v60
  %330 = vmatpush.msra.mxu0 %v59
  %331 = vmatpush.msra.mxu0 %v58
  %332 = vmatpush.msra.mxu0 %v57
  %333 = vmatpush.msra.mxu0 %v56
  %334 = vmatpush.msra.mxu0 %v55
  %335 = vmatmul.f32.gmra.mxu0 %v237
  %v336 = vpop.f32.mrf.mxu0
  %v337 = vadd.f32 %v305, %v336
  %338 = vmatmul.f32.gmra.mxu0 %v241
  %v339 = vpop.f32.mrf.mxu0
  %v340 = vadd.f32 %v308, %v339
  %341 = vmatmul.f32.gmra.mxu0 %v245
  %v342 = vpop.f32.mrf.mxu0
  %v343 = vadd.f32 %v311, %v342
  %344 = vmatmul.f32.gmra.mxu0 %v249
  %v345 = vpop.f32.mrf.mxu0
  %v346 = vadd.f32 %v314, %v345
  %347 = vmatmul.f32.gmra.mxu0 %v253
  %v348 = vpop.f32.mrf.mxu0
  %v349 = vadd.f32 %v317, %v348
  %350 = vdwg.mxu0
  %351 = vmatpush.msra.mxu0 %v86
  %352 = vmatpush.msra.mxu0 %v85
  %353 = vmatpush.msra.mxu0 %v84
  %354 = vmatpush.msra.mxu0 %v83
  %355 = vmatpush.msra.mxu0 %v82
  %356 = vmatpush.msra.mxu0 %v81
  %357 = vmatpush.msra.mxu0 %v80
  %358 = vmatpush.msra.mxu0 %v79
  %359 = vmatpush.msra.mxu0 %v78
  %360 = vmatpush.msra.mxu0 %v77
  %361 = vmatpush.msra.mxu0 %v76
  %362 = vmatpush.msra.mxu0 %v75
  %363 = vmatpush.msra.mxu0 %v74
  %364 = vmatpush.msra.mxu0 %v73
  %365 = vmatpush.msra.mxu0 %v72
  %366 = vmatpush.msra.mxu0 %v71
  %367 = vmatmul.f32.gmra.mxu0 %v238
  %v368 = vpop.f32.mrf.mxu0
  %v369 = vadd.f32 %v337, %v368
  %370 = vmatmul.f32.gmra.mxu0 %v242
  %v371 = vpop.f32.mrf.mxu0
  %v372 = vadd.f32 %v340, %v371
  %373 = vmatmul.f32.gmra.mxu0 %v246
  %v374 = vpop.f32.mrf.mxu0
  %v375 = vadd.f32 %v343, %v374
  %376 = vmatmul.f32.gmra.mxu0 %v250
  %v377 = vpop.f32.mrf.mxu0
  %v378 = vadd.f32 %v346, %v377
  %379 = vmatmul.f32.gmra.mxu0 %v254
  %v380 = vpop.f32.mrf.mxu0
  %v381 = vadd.f32 %v349, %v380
  %382 = vdwg.mxu0
  %v383 = vmax.f32 %v221, %v369
  %v384 = vmax.f32 %v224, %v372
  %v385 = vmax.f32 %v227, %v375
  %v386 = vmax.f32 %v230, %v378
  %v387 = vmax.f32 %v233, %v381
  %v388 = vld [vmem:[%s2] sm:$0xff]
  %v389 = vld [vmem:[%s2 + $0x8] sm:$0xff]
  %v390 = vld [vmem:[%s2 + $0x10] sm:$0xff]
  %v391 = vld [vmem:[%s2 + $0x18] sm:$0xff]
  %v392 = vld [vmem:[%s2 + $0x20] sm:$0xff]
  %v393 = vld [vmem:[%s2 + $0x28] sm:$0xff]
  %v394 = vld [vmem:[%s2 + $0x30] sm:$0xff]
  %v395 = vld [vmem:[%s2 + $0x38] sm:$0xff]
  %v396 = vld [vmem:[%s2 + $0x40] sm:$0xff]
  %v397 = vld [vmem:[%s2 + $0x48] sm:$0xff]
  %v398 = vld [vmem:[%s2 + $0x50] sm:$0xff]
  %v399 = vld [vmem:[%s2 + $0x58] sm:$0xff]
  %v400 = vld [vmem:[%s2 + $0x60] sm:$0xff]
  %v401 = vld [vmem:[%s2 + $0x68] sm:$0xff]
  %v402 = vld [vmem:[%s2 + $0x70] sm:$0xff]
  %v403 = vld [vmem:[%s2 + $0x78] sm:$0xff]
  %v404 = vld [vmem:[%s2 + $0x80] sm:$0xf]
  %v405 = vld [vmem:[%s2 + $0x88] sm:$0xf]
  %v406 = vld [vmem:[%s2 + $0x90] sm:$0xf]
  %v407 = vld [vmem:[%s2 + $0x98] sm:$0xf]
  %408 = vmatpush.msra.mxu0 %v38
  %409 = vmatpush.msra.mxu0 %v37
  %410 = vmatpush.msra.mxu0 %v36
  %411 = vmatpush.msra.mxu0 %v35
  %412 = vmatpush.msra.mxu0 %v34
  %413 = vmatpush.msra.mxu0 %v33
  %414 = vmatpush.msra.mxu0 %v32
  %415 = vmatpush.msra.mxu0 %v31
  %416 = vmatpush.msra.mxu0 %v30
  %417 = vmatpush.msra.mxu0 %v29
  %418 = vmatpush.msra.mxu0 %v28
  %419 = vmatpush.msra.mxu0 %v27
  %420 = vmatpush.msra.mxu0 %v26
  %421 = vmatpush.msra.mxu0 %v25
  %422 = vmatpush.msra.mxu0 %v24
  %423 = vmatpush.msra.mxu0 %v23
  %424 = vmatmul.f32.gmra.mxu0 %v388
  %v425 = vpop.f32.mrf.mxu0
  %v426 = vadd.f32 0.0, %v425
  %427 = vmatmul.f32.gmra.mxu0 %v392
  %v428 = vpop.f32.mrf.mxu0
  %v429 = vadd.f32 0.0, %v428
  %430 = vmatmul.f32.gmra.mxu0 %v396
  %v431 = vpop.f32.mrf.mxu0
  %v432 = vadd.f32 0.0, %v431
  %433 = vmatmul.f32.gmra.mxu0 %v400
  %v434 = vpop.f32.mrf.mxu0
  %v435 = vadd.f32 0.0, %v434
  %436 = vmatmul.f32.gmra.mxu0 %v404
  %v437 = vpop.f32.mrf.mxu0
  %v438 = vadd.f32 0.0, %v437
  %439 = vdwg.mxu0
  %440 = vmatpush.msra.mxu0 %v54
  %441 = vmatpush.msra.mxu0 %v53
  %442 = vmatpush.msra.mxu0 %v52
  %443 = vmatpush.msra.mxu0 %v51
  %444 = vmatpush.msra.mxu0 %v50
  %445 = vmatpush.msra.mxu0 %v49
  %446 = vmatpush.msra.mxu0 %v48
  %447 = vmatpush.msra.mxu0 %v47
  %448 = vmatpush.msra.mxu0 %v46
  %449 = vmatpush.msra.mxu0 %v45
  %450 = vmatpush.msra.mxu0 %v44
  %451 = vmatpush.msra.mxu0 %v43
  %452 = vmatpush.msra.mxu0 %v42
  %453 = vmatpush.msra.mxu0 %v41
  %454 = vmatpush.msra.mxu0 %v40
  %455 = vmatpush.msra.mxu0 %v39
  %456 = vmatmul.f32.gmra.mxu0 %v389
  %v457 = vpop.f32.mrf.mxu0
  %v458 = vadd.f32 %v426, %v457
  %459 = vmatmul.f32.gmra.mxu0 %v393
  %v460 = vpop.f32.mrf.mxu0
  %v461 = vadd.f32 %v429, %v460
  %462 = vmatmul.f32.gmra.mxu0 %v397
  %v463 = vpop.f32.mrf.mxu0
  %v464 = vadd.f32 %v432, %v463
  %465 = vmatmul.f32.gmra.mxu0 %v401
  %v466 = vpop.f32.mrf.mxu0
  %v467 = vadd.f32 %v435, %v466
  %468 = vmatmul.f32.gmra.mxu0 %v405
  %v469 = vpop.f32.mrf.mxu0
  %v470 = vadd.f32 %v438, %v469
  %471 = vdwg.mxu0
  %472 = vmatpush.msra.mxu0 %v70
  %473 = vmatpush.msra.mxu0 %v69
  %474 = vmatpush.msra.mxu0 %v68
  %475 = vmatpush.msra.mxu0 %v67
  %476 = vmatpush.msra.mxu0 %v66
  %477 = vmatpush.msra.mxu0 %v65
  %478 = vmatpush.msra.mxu0 %v64
  %479 = vmatpush.msra.mxu0 %v63
  %480 = vmatpush.msra.mxu0 %v62
  %481 = vmatpush.msra.mxu0 %v61
  %482 = vmatpush.msra.mxu0 %v60
  %483 = vmatpush.msra.mxu0 %v59
  %484 = vmatpush.msra.mxu0 %v58
  %485 = vmatpush.msra.mxu0 %v57
  %486 = vmatpush.msra.mxu0 %v56
  %487 = vmatpush.msra.mxu0 %v55
  %488 = vmatmul.f32.gmra.mxu0 %v390
  %v489 = vpop.f32.mrf.mxu0
  %v490 = vadd.f32 %v458, %v489
  %491 = vmatmul.f32.gmra.mxu0 %v394
  %v492 = vpop.f32.mrf.mxu0
  %v493 = vadd.f32 %v461, %v492
  %494 = vmatmul.f32.gmra.mxu0 %v398
  %v495 = vpop.f32.mrf.mxu0
  %v496 = vadd.f32 %v464, %v495
  %497 = vmatmul.f32.gmra.mxu0 %v402
  %v498 = vpop.f32.mrf.mxu0
  %v499 = vadd.f32 %v467, %v498
  %500 = vmatmul.f32.gmra.mxu0 %v406
  %v501 = vpop.f32.mrf.mxu0
  %v502 = vadd.f32 %v470, %v501
  %503 = vdwg.mxu0
  %504 = vmatpush.msra.mxu0 %v86
  %505 = vmatpush.msra.mxu0 %v85
  %506 = vmatpush.msra.mxu0 %v84
  %507 = vmatpush.msra.mxu0 %v83
  %508 = vmatpush.msra.mxu0 %v82
  %509 = vmatpush.msra.mxu0 %v81
  %510 = vmatpush.msra.mxu0 %v80
  %511 = vmatpush.msra.mxu0 %v79
  %512 = vmatpush.msra.mxu0 %v78
  %513 = vmatpush.msra.mxu0 %v77
  %514 = vmatpush.msra.mxu0 %v76
  %515 = vmatpush.msra.mxu0 %v75
  %516 = vmatpush.msra.mxu0 %v74
  %517 = vmatpush.msra.mxu0 %v73
  %518 = vmatpush.msra.mxu0 %v72
  %519 = vmatpush.msra.mxu0 %v71
  %520 = vmatmul.f32.gmra.mxu0 %v391
  %v521 = vpop.f32.mrf.mxu0
  %v522 = vadd.f32 %v490, %v521
  %523 = vmatmul.f32.gmra.mxu0 %v395
  %v524 = vpop.f32.mrf.mxu0
  %v525 = vadd.f32 %v493, %v524
  %526 = vmatmul.f32.gmra.mxu0 %v399
  %v527 = vpop.f32.mrf.mxu0
  %v528 = vadd.f32 %v496, %v527
  %529 = vmatmul.f32.gmra.mxu0 %v403
  %v530 = vpop.f32.mrf.mxu0
  %v531 = vadd.f32 %v499, %v530
  %532 = vmatmul.f32.gmra.mxu0 %v407
  %v533 = vpop.f32.mrf.mxu0
  %v534 = vadd.f32 %v502, %v533
  %535 = vdwg.mxu0
  %v536 = vld [vmem:[%s3] sm:$0xff]
  %v537 = vld [vmem:[%s3 + $0x8] sm:$0xff]
  %v538 = vld [vmem:[%s3 + $0x10] sm:$0xff]
  %v539 = vld [vmem:[%s3 + $0x18] sm:$0xff]
  %v540 = vld [vmem:[%s3 + $0x20] sm:$0xff]
  %v541 = vld [vmem:[%s3 + $0x28] sm:$0xff]
  %v542 = vld [vmem:[%s3 + $0x30] sm:$0xff]
  %v543 = vld [vmem:[%s3 + $0x38] sm:$0xff]
  %v544 = vld [vmem:[%s3 + $0x40] sm:$0xff]
  %v545 = vld [vmem:[%s3 + $0x48] sm:$0xff]
  %v546 = vld [vmem:[%s3 + $0x50] sm:$0xff]
  %v547 = vld [vmem:[%s3 + $0x58] sm:$0xff]
  %v548 = vld [vmem:[%s3 + $0x60] sm:$0xff]
  %v549 = vld [vmem:[%s3 + $0x68] sm:$0xff]
  %v550 = vld [vmem:[%s3 + $0x70] sm:$0xff]
  %v551 = vld [vmem:[%s3 + $0x78] sm:$0xff]
  %v552 = vld [vmem:[%s3 + $0x80] sm:$0xf]
  %v553 = vld [vmem:[%s3 + $0x88] sm:$0xf]
  %v554 = vld [vmem:[%s3 + $0x90] sm:$0xf]
  %v555 = vld [vmem:[%s3 + $0x98] sm:$0xf]
  %556 = vmatpush.msra.mxu0 %v38
  %557 = vmatpush.msra.mxu0 %v37
  %558 = vmatpush.msra.mxu0 %v36
  %559 = vmatpush.msra.mxu0 %v35
  %560 = vmatpush.msra.mxu0 %v34
  %561 = vmatpush.msra.mxu0 %v33
  %562 = vmatpush.msra.mxu0 %v32
  %563 = vmatpush.msra.mxu0 %v31
  %564 = vmatpush.msra.mxu0 %v30
  %565 = vmatpush.msra.mxu0 %v29
  %566 = vmatpush.msra.mxu0 %v28
  %567 = vmatpush.msra.mxu0 %v27
  %568 = vmatpush.msra.mxu0 %v26
  %569 = vmatpush.msra.mxu0 %v25
  %570 = vmatpush.msra.mxu0 %v24
  %571 = vmatpush.msra.mxu0 %v23
  %572 = vmatmul.f32.gmra.mxu0 %v536
  %v573 = vpop.f32.mrf.mxu0
  %v574 = vadd.f32 0.0, %v573
  %575 = vmatmul.f32.gmra.mxu0 %v540
  %v576 = vpop.f32.mrf.mxu0
  %v577 = vadd.f32 0.0, %v576
  %578 = vmatmul.f32.gmra.mxu0 %v544
  %v579 = vpop.f32.mrf.mxu0
  %v580 = vadd.f32 0.0, %v579
  %581 = vmatmul.f32.gmra.mxu0 %v548
  %v582 = vpop.f32.mrf.mxu0
  %v583 = vadd.f32 0.0, %v582
  %584 = vmatmul.f32.gmra.mxu0 %v552
  %v585 = vpop.f32.mrf.mxu0
  %v586 = vadd.f32 0.0, %v585
  %587 = vdwg.mxu0
  %588 = vmatpush.msra.mxu0 %v54
  %589 = vmatpush.msra.mxu0 %v53
  %590 = vmatpush.msra.mxu0 %v52
  %591 = vmatpush.msra.mxu0 %v51
  %592 = vmatpush.msra.mxu0 %v50
  %593 = vmatpush.msra.mxu0 %v49
  %594 = vmatpush.msra.mxu0 %v48
  %595 = vmatpush.msra.mxu0 %v47
  %596 = vmatpush.msra.mxu0 %v46
  %597 = vmatpush.msra.mxu0 %v45
  %598 = vmatpush.msra.mxu0 %v44
  %599 = vmatpush.msra.mxu0 %v43
  %600 = vmatpush.msra.mxu0 %v42
  %601 = vmatpush.msra.mxu0 %v41
  %602 = vmatpush.msra.mxu0 %v40
  %603 = vmatpush.msra.mxu0 %v39
  %604 = vmatmul.f32.gmra.mxu0 %v537
  %v605 = vpop.f32.mrf.mxu0
  %v606 = vadd.f32 %v574, %v605
  %607 = vmatmul.f32.gmra.mxu0 %v541
  %v608 = vpop.f32.mrf.mxu0
  %v609 = vadd.f32 %v577, %v608
  %610 = vmatmul.f32.gmra.mxu0 %v545
  %v611 = vpop.f32.mrf.mxu0
  %v612 = vadd.f32 %v580, %v611
  %613 = vmatmul.f32.gmra.mxu0 %v549
  %v614 = vpop.f32.mrf.mxu0
  %v615 = vadd.f32 %v583, %v614
  %616 = vmatmul.f32.gmra.mxu0 %v553
  %v617 = vpop.f32.mrf.mxu0
  %v618 = vadd.f32 %v586, %v617
  %619 = vdwg.mxu0
  %620 = vmatpush.msra.mxu0 %v70
  %621 = vmatpush.msra.mxu0 %v69
  %622 = vmatpush.msra.mxu0 %v68
  %623 = vmatpush.msra.mxu0 %v67
  %624 = vmatpush.msra.mxu0 %v66
  %625 = vmatpush.msra.mxu0 %v65
  %626 = vmatpush.msra.mxu0 %v64
  %627 = vmatpush.msra.mxu0 %v63
  %628 = vmatpush.msra.mxu0 %v62
  %629 = vmatpush.msra.mxu0 %v61
  %630 = vmatpush.msra.mxu0 %v60
  %631 = vmatpush.msra.mxu0 %v59
  %632 = vmatpush.msra.mxu0 %v58
  %633 = vmatpush.msra.mxu0 %v57
  %634 = vmatpush.msra.mxu0 %v56
  %635 = vmatpush.msra.mxu0 %v55
  %636 = vmatmul.f32.gmra.mxu0 %v538
  %v637 = vpop.f32.mrf.mxu0
  %v638 = vadd.f32 %v606, %v637
  %639 = vmatmul.f32.gmra.mxu0 %v542
  %v640 = vpop.f32.mrf.mxu0
  %v641 = vadd.f32 %v609, %v640
  %642 = vmatmul.f32.gmra.mxu0 %v546
  %v643 = vpop.f32.mrf.mxu0
  %v644 = vadd.f32 %v612, %v643
  %645 = vmatmul.f32.gmra.mxu0 %v550
  %v646 = vpop.f32.mrf.mxu0
  %v647 = vadd.f32 %v615, %v646
  %648 = vmatmul.f32.gmra.mxu0 %v554
  %v649 = vpop.f32.mrf.mxu0
  %v650 = vadd.f32 %v618, %v649
  %651 = vdwg.mxu0
  %652 = vmatpush.msra.mxu0 %v86
  %653 = vmatpush.msra.mxu0 %v85
  %654 = vmatpush.msra.mxu0 %v84
  %655 = vmatpush.msra.mxu0 %v83
  %656 = vmatpush.msra.mxu0 %v82
  %657 = vmatpush.msra.mxu0 %v81
  %658 = vmatpush.msra.mxu0 %v80
  %659 = vmatpush.msra.mxu0 %v79
  %660 = vmatpush.msra.mxu0 %v78
  %661 = vmatpush.msra.mxu0 %v77
  %662 = vmatpush.msra.mxu0 %v76
  %663 = vmatpush.msra.mxu0 %v75
  %664 = vmatpush.msra.mxu0 %v74
  %665 = vmatpush.msra.mxu0 %v73
  %666 = vmatpush.msra.mxu0 %v72
  %667 = vmatpush.msra.mxu0 %v71
  %668 = vmatmul.f32.gmra.mxu0 %v539
  %v669 = vpop.f32.mrf.mxu0
  %v670 = vadd.f32 %v638, %v669
  %671 = vmatmul.f32.gmra.mxu0 %v543
  %v672 = vpop.f32.mrf.mxu0
  %v673 = vadd.f32 %v641, %v672
  %674 = vmatmul.f32.gmra.mxu0 %v547
  %v675 = vpop.f32.mrf.mxu0
  %v676 = vadd.f32 %v644, %v675
  %677 = vmatmul.f32.gmra.mxu0 %v551
  %v678 = vpop.f32.mrf.mxu0
  %v679 = vadd.f32 %v647, %v678
  %680 = vmatmul.f32.gmra.mxu0 %v555
  %v681 = vpop.f32.mrf.mxu0
  %v682 = vadd.f32 %v650, %v681
  %683 = vdwg.mxu0
  %v684 = vmax.f32 %v522, %v670
  %v685 = vmax.f32 %v525, %v673
  %v686 = vmax.f32 %v528, %v676
  %v687 = vmax.f32 %v531, %v679
  %v688 = vmax.f32 %v534, %v682
  %v689 = vmax.f32 %v383, %v684
  %v690 = vmax.f32 %v384, %v685
  %v691 = vmax.f32 %v385, %v686
  %v692 = vmax.f32 %v386, %v687
  %v693 = vmax.f32 %v387, %v688
  %v694 = vld [vmem:[%s5] sm:$0x1]
  %v696 = vperm.slane %v694, 0
  %v698 = vadd.f32 %v689, %v696
  %v699 = vadd.f32 %v690, %v696
  %v700 = vadd.f32 %v691, %v696
  %v701 = vadd.f32 %v692, %v696
  %v702 = vadd.f32 %v693, %v696
  %v703 = vmax.f32 %v698, 0.0
  %v704 = vmax.f32 %v699, 0.0
  %v705 = vmax.f32 %v700, 0.0
  %v706 = vmax.f32 %v701, 0.0
  %v707 = vmax.f32 %v702, 0.0
  %vm708 = vcmask 523264
  %709 = vst.msk [vmem:[%s6] sm:$0xff] %vm708, %v703
  %710 = vst.msk [vmem:[%s6 + $0x8] sm:$0xff] %vm708, %v704
  %711 = vst.msk [vmem:[%s6 + $0x10] sm:$0xff] %vm708, %v705
  %712 = vst.msk [vmem:[%s6 + $0x18] sm:$0xff] %vm708, %v706
  %vm713 = vcmask 519168
  %714 = vst.msk [vmem:[%s6 + $0x20] sm:$0xf] %vm713, %v707
  // Predicated region
  $region26: #{deep_rqnet_forward.5} parent=0 // pred_check
    _
  $region27: #{deep_rqnet_forward.5} parent=0 // pred_check_branch
    %716 = sbr.rel (0) target = $region29
  $region28: #{deep_rqnet_forward.5} parent=0 // pred_region
    _
  $region29: #{deep_rqnet_forward.5} parent=0 // pred_fallthru
    _
  // Predicated region
  $region30: #{deep_rqnet_forward.5} parent=0 // pred_check
    _
  $region31: #{deep_rqnet_forward.5} parent=0 // pred_check_branch
    %718 = sbr.rel (0) target = $region33
  $region32: #{deep_rqnet_forward.5} parent=0 // pred_region
    _
  $region33: #{deep_rqnet_forward.5} parent=0 // pred_fallthru
    _

// kernel: deep_rqnet_forward.6
$region0: #{deep_rqnet_forward.6}
  #allocation0 [shape = 'u32[]', space=smem, size = 0x4, offset = 0x4, fixed_abs, tag = 'smem constant byte address 0x4 - core index']
  #allocation1 [shape = 'u32[72,128]{1,0:T(1,128)}', space=vmem, size = 0x9000, scoped, tag = 'internal scratch']
  %s0 = inlined_call_operand.vmem [shape: f32[16,576], index: 0, kind: input, shape index: {}]
  %s1 = inlined_call_operand.vmem [shape: f32[16,576], index: 1, kind: input, shape index: {}]
  %s2 = inlined_call_operand.vmem [shape: f32[16,576], index: 2, kind: input, shape index: {}]
  %s3 = inlined_call_operand.vmem [shape: f32[16,576], index: 3, kind: input, shape index: {}]
  %s4 = inlined_call_operand.vmem [shape: f32[576,64], index: 4, kind: input, shape index: {}]
  %s5 = inlined_call_operand.vmem [shape: f32[1,64], index: 5, kind: input, shape index: {}]
  %s6 = inlined_call_operand.vmem [shape: f32[16,64], index: 6, kind: output, shape index: {}]
  %s7 = sld [smem:[#allocation0]]
  $region34: #{deep_rqnet_forward.6} parent=0
    _
  %s9 = ssub.s32 1, %s7
  %s10 = scalar_select 0, %s9, %s7
  // Predicated region
  $region2: #{deep_rqnet_forward.6} parent=0 // pred_check
    _
  $region3: #{deep_rqnet_forward.6} parent=0 // pred_check_branch
    %12 = sbr.rel (0) target = $region5
  $region4: #{deep_rqnet_forward.6} parent=0 // pred_region
    _
  $region5: #{deep_rqnet_forward.6} parent=0 // pred_fallthru
    _
  // Predicated region
  $region6: #{deep_rqnet_forward.6} parent=0 // pred_check
    _
  $region7: #{deep_rqnet_forward.6} parent=0 // pred_check_branch
    %14 = sbr.rel (0) target = $region9
  $region8: #{deep_rqnet_forward.6} parent=0 // pred_region
    _
  $region9: #{deep_rqnet_forward.6} parent=0 // pred_fallthru
    _
  // Predicated region
  $region10: #{deep_rqnet_forward.6} parent=0 // pred_check
    _
  $region11: #{deep_rqnet_forward.6} parent=0 // pred_check_branch
    %16 = sbr.rel (0) target = $region13
  $region12: #{deep_rqnet_forward.6} parent=0 // pred_region
    _
  $region13: #{deep_rqnet_forward.6} parent=0 // pred_fallthru
    _
  // Predicated region
  $region14: #{deep_rqnet_forward.6} parent=0 // pred_check
    _
  $region15: #{deep_rqnet_forward.6} parent=0 // pred_check_branch
    %18 = sbr.rel (0) target = $region17
  $region16: #{deep_rqnet_forward.6} parent=0 // pred_region
    _
  $region17: #{deep_rqnet_forward.6} parent=0 // pred_fallthru
    _
  // Predicated region
  $region18: #{deep_rqnet_forward.6} parent=0 // pred_check
    _
  $region19: #{deep_rqnet_forward.6} parent=0 // pred_check_branch
    %20 = sbr.rel (0) target = $region21
  $region20: #{deep_rqnet_forward.6} parent=0 // pred_region
    _
  $region21: #{deep_rqnet_forward.6} parent=0 // pred_fallthru
    _
  // Predicated region
  $region22: #{deep_rqnet_forward.6} parent=0 // pred_check
    _
  $region23: #{deep_rqnet_forward.6} parent=0 // pred_check_branch
    %22 = sbr.rel (0) target = $region25
  $region24: #{deep_rqnet_forward.6} parent=0 // pred_region
    _
  $region25: #{deep_rqnet_forward.6} parent=0 // pred_fallthru
    _
  %v23 = vld [vmem:[%s4] sm:$0xff]
  %v24 = vld [vmem:[%s4 + $0x8] sm:$0xff]
  %v25 = vld [vmem:[%s4 + $0x10] sm:$0xff]
  %v26 = vld [vmem:[%s4 + $0x18] sm:$0xff]
  %v27 = vld [vmem:[%s4 + $0x20] sm:$0xff]
  %v28 = vld [vmem:[%s4 + $0x28] sm:$0xff]
  %v29 = vld [vmem:[%s4 + $0x30] sm:$0xff]
  %v30 = vld [vmem:[%s4 + $0x38] sm:$0xff]
  %v31 = vld [vmem:[%s4 + $0x40] sm:$0xff]
  %v32 = vld [vmem:[%s4 + $0x48] sm:$0xff]
  %v33 = vld [vmem:[%s4 + $0x50] sm:$0xff]
  %v34 = vld [vmem:[%s4 + $0x58] sm:$0xff]
  %v35 = vld [vmem:[%s4 + $0x60] sm:$0xff]
  %v36 = vld [vmem:[%s4 + $0x68] sm:$0xff]
  %v37 = vld [vmem:[%s4 + $0x70] sm:$0xff]
  %v38 = vld [vmem:[%s4 + $0x78] sm:$0xff]
  %v39 = vld [vmem:[%s4 + $0x80] sm:$0xff]
  %v40 = vld [vmem:[%s4 + $0x88] sm:$0xff]
  %v41 = vld [vmem:[%s4 + $0x90] sm:$0xff]
  %v42 = vld [vmem:[%s4 + $0x98] sm:$0xff]
  %v43 = vld [vmem:[%s4 + $0xa0] sm:$0xff]
  %v44 = vld [vmem:[%s4 + $0xa8] sm:$0xff]
  %v45 = vld [vmem:[%s4 + $0xb0] sm:$0xff]
  %v46 = vld [vmem:[%s4 + $0xb8] sm:$0xff]
  %v47 = vld [vmem:[%s4 + $0xc0] sm:$0xff]
  %v48 = vld [vmem:[%s4 + $0xc8] sm:$0xff]
  %v49 = vld [vmem:[%s4 + $0xd0] sm:$0xff]
  %v50 = vld [vmem:[%s4 + $0xd8] sm:$0xff]
  %v51 = vld [vmem:[%s4 + $0xe0] sm:$0xff]
  %v52 = vld [vmem:[%s4 + $0xe8] sm:$0xff]
  %v53 = vld [vmem:[%s4 + $0xf0] sm:$0xff]
  %v54 = vld [vmem:[%s4 + $0xf8] sm:$0xff]
  %v55 = vld [vmem:[%s4 + $0x100] sm:$0xff]
  %v56 = vld [vmem:[%s4 + $0x108] sm:$0xff]
  %v57 = vld [vmem:[%s4 + $0x110] sm:$0xff]
  %v58 = vld [vmem:[%s4 + $0x118] sm:$0xff]
  %v59 = vld [vmem:[%s4 + $0x120] sm:$0xff]
  %v60 = vld [vmem:[%s4 + $0x128] sm:$0xff]
  %v61 = vld [vmem:[%s4 + $0x130] sm:$0xff]
  %v62 = vld [vmem:[%s4 + $0x138] sm:$0xff]
  %v63 = vld [vmem:[%s4 + $0x140] sm:$0xff]
  %v64 = vld [vmem:[%s4 + $0x148] sm:$0xff]
  %v65 = vld [vmem:[%s4 + $0x150] sm:$0xff]
  %v66 = vld [vmem:[%s4 + $0x158] sm:$0xff]
  %v67 = vld [vmem:[%s4 + $0x160] sm:$0xff]
  %v68 = vld [vmem:[%s4 + $0x168] sm:$0xff]
  %v69 = vld [vmem:[%s4 + $0x170] sm:$0xff]
  %v70 = vld [vmem:[%s4 + $0x178] sm:$0xff]
  %v71 = vld [vmem:[%s4 + $0x180] sm:$0xff]
  %v72 = vld [vmem:[%s4 + $0x188] sm:$0xff]
  %v73 = vld [vmem:[%s4 + $0x190] sm:$0xff]
  %v74 = vld [vmem:[%s4 + $0x198] sm:$0xff]
  %v75 = vld [vmem:[%s4 + $0x1a0] sm:$0xff]
  %v76 = vld [vmem:[%s4 + $0x1a8] sm:$0xff]
  %v77 = vld [vmem:[%s4 + $0x1b0] sm:$0xff]
  %v78 = vld [vmem:[%s4 + $0x1b8] sm:$0xff]
  %v79 = vld [vmem:[%s4 + $0x1c0] sm:$0xff]
  %v80 = vld [vmem:[%s4 + $0x1c8] sm:$0xff]
  %v81 = vld [vmem:[%s4 + $0x1d0] sm:$0xff]
  %v82 = vld [vmem:[%s4 + $0x1d8] sm:$0xff]
  %v83 = vld [vmem:[%s4 + $0x1e0] sm:$0xff]
  %v84 = vld [vmem:[%s4 + $0x1e8] sm:$0xff]
  %v85 = vld [vmem:[%s4 + $0x1f0] sm:$0xff]
  %v86 = vld [vmem:[%s4 + $0x1f8] sm:$0xff]
  %v87 = vld [vmem:[%s4 + $0x200] sm:$0xff]
  %v88 = vld [vmem:[%s4 + $0x208] sm:$0xff]
  %v89 = vld [vmem:[%s4 + $0x210] sm:$0xff]
  %v90 = vld [vmem:[%s4 + $0x218] sm:$0xff]
  %v91 = vld [vmem:[%s4 + $0x220] sm:$0xff]
  %v92 = vld [vmem:[%s4 + $0x228] sm:$0xff]
  %v93 = vld [vmem:[%s4 + $0x230] sm:$0xff]
  %v94 = vld [vmem:[%s4 + $0x238] sm:$0xff]
  %v95 = vld [vmem:[%s0] sm:$0xff]
  %v96 = vld [vmem:[%s0 + $0x8] sm:$0xff]
  %v97 = vld [vmem:[%s0 + $0x10] sm:$0xff]
  %v98 = vld [vmem:[%s0 + $0x18] sm:$0xff]
  %v99 = vld [vmem:[%s0 + $0x20] sm:$0xff]
  %v100 = vld [vmem:[%s0 + $0x28] sm:$0xff]
  %v101 = vld [vmem:[%s0 + $0x30] sm:$0xff]
  %v102 = vld [vmem:[%s0 + $0x38] sm:$0xff]
  %v103 = vld [vmem:[%s0 + $0x40] sm:$0xff]
  %v104 = vld [vmem:[%s0 + $0x48] sm:$0xff]
  %vm105 = vcmask 523264
  %v107 = vsel %vm105, %v99, 0
  %v110 = vsel %vm105, %v104, 0
  %112 = vmatpush.msra.mxu0 %v38
  %113 = vmatpush.msra.mxu0 %v37
  %114 = vmatpush.msra.mxu0 %v36
  %115 = vmatpush.msra.mxu0 %v35
  %116 = vmatpush.msra.mxu0 %v34
  %117 = vmatpush.msra.mxu0 %v33
  %118 = vmatpush.msra.mxu0 %v32
  %119 = vmatpush.msra.mxu0 %v31
  %120 = vmatpush.msra.mxu0 %v30
  %121 = vmatpush.msra.mxu0 %v29
  %122 = vmatpush.msra.mxu0 %v28
  %123 = vmatpush.msra.mxu0 %v27
  %124 = vmatpush.msra.mxu0 %v26
  %125 = vmatpush.msra.mxu0 %v25
  %126 = vmatpush.msra.mxu0 %v24
  %127 = vmatpush.msra.mxu0 %v23
  %128 = vmatmul.f32.gmra.mxu0 %v95
  %v129 = vpop.f32.mrf.mxu0
  %v130 = vadd.f32 0.0, %v129
  %131 = vmatmul.f32.gmra.mxu0 %v100
  %v132 = vpop.f32.mrf.mxu0
  %v133 = vadd.f32 0.0, %v132
  %134 = vdwg.mxu0
  %135 = vmatpush.msra.mxu0 %v54
  %136 = vmatpush.msra.mxu0 %v53
  %137 = vmatpush.msra.mxu0 %v52
  %138 = vmatpush.msra.mxu0 %v51
  %139 = vmatpush.msra.mxu0 %v50
  %140 = vmatpush.msra.mxu0 %v49
  %141 = vmatpush.msra.mxu0 %v48
  %142 = vmatpush.msra.mxu0 %v47
  %143 = vmatpush.msra.mxu0 %v46
  %144 = vmatpush.msra.mxu0 %v45
  %145 = vmatpush.msra.mxu0 %v44
  %146 = vmatpush.msra.mxu0 %v43
  %147 = vmatpush.msra.mxu0 %v42
  %148 = vmatpush.msra.mxu0 %v41
  %149 = vmatpush.msra.mxu0 %v40
  %150 = vmatpush.msra.mxu0 %v39
  %151 = vmatmul.f32.gmra.mxu0 %v96
  %v152 = vpop.f32.mrf.mxu0
  %v153 = vadd.f32 %v130, %v152
  %154 = vmatmul.f32.gmra.mxu0 %v101
  %v155 = vpop.f32.mrf.mxu0
  %v156 = vadd.f32 %v133, %v155
  %157 = vdwg.mxu0
  %158 = vmatpush.msra.mxu0 %v70
  %159 = vmatpush.msra.mxu0 %v69
  %160 = vmatpush.msra.mxu0 %v68
  %161 = vmatpush.msra.mxu0 %v67
  %162 = vmatpush.msra.mxu0 %v66
  %163 = vmatpush.msra.mxu0 %v65
  %164 = vmatpush.msra.mxu0 %v64
  %165 = vmatpush.msra.mxu0 %v63
  %166 = vmatpush.msra.mxu0 %v62
  %167 = vmatpush.msra.mxu0 %v61
  %168 = vmatpush.msra.mxu0 %v60
  %169 = vmatpush.msra.mxu0 %v59
  %170 = vmatpush.msra.mxu0 %v58
  %171 = vmatpush.msra.mxu0 %v57
  %172 = vmatpush.msra.mxu0 %v56
  %173 = vmatpush.msra.mxu0 %v55
  %174 = vmatmul.f32.gmra.mxu0 %v97
  %v175 = vpop.f32.mrf.mxu0
  %v176 = vadd.f32 %v153, %v175
  %177 = vmatmul.f32.gmra.mxu0 %v102
  %v178 = vpop.f32.mrf.mxu0
  %v179 = vadd.f32 %v156, %v178
  %180 = vdwg.mxu0
  %181 = vmatpush.msra.mxu0 %v86
  %182 = vmatpush.msra.mxu0 %v85
  %183 = vmatpush.msra.mxu0 %v84
  %184 = vmatpush.msra.mxu0 %v83
  %185 = vmatpush.msra.mxu0 %v82
  %186 = vmatpush.msra.mxu0 %v81
  %187 = vmatpush.msra.mxu0 %v80
  %188 = vmatpush.msra.mxu0 %v79
  %189 = vmatpush.msra.mxu0 %v78
  %190 = vmatpush.msra.mxu0 %v77
  %191 = vmatpush.msra.mxu0 %v76
  %192 = vmatpush.msra.mxu0 %v75
  %193 = vmatpush.msra.mxu0 %v74
  %194 = vmatpush.msra.mxu0 %v73
  %195 = vmatpush.msra.mxu0 %v72
  %196 = vmatpush.msra.mxu0 %v71
  %197 = vmatmul.f32.gmra.mxu0 %v98
  %v198 = vpop.f32.mrf.mxu0
  %v199 = vadd.f32 %v176, %v198
  %200 = vmatmul.f32.gmra.mxu0 %v103
  %v201 = vpop.f32.mrf.mxu0
  %v202 = vadd.f32 %v179, %v201
  %203 = vdwg.mxu0
  %204 = vmatpush.msra.mxu0 0.0
  %205 = vmatpush.msra.mxu0 0.0
  %206 = vmatpush.msra.mxu0 0.0
  %207 = vmatpush.msra.mxu0 0.0
  %208 = vmatpush.msra.mxu0 0.0
  %209 = vmatpush.msra.mxu0 0.0
  %210 = vmatpush.msra.mxu0 0.0
  %211 = vmatpush.msra.mxu0 0.0
  %212 = vmatpush.msra.mxu0 %v94
  %213 = vmatpush.msra.mxu0 %v93
  %214 = vmatpush.msra.mxu0 %v92
  %215 = vmatpush.msra.mxu0 %v91
  %216 = vmatpush.msra.mxu0 %v90
  %217 = vmatpush.msra.mxu0 %v89
  %218 = vmatpush.msra.mxu0 %v88
  %219 = vmatpush.msra.mxu0 %v87
  %220 = vmatmul.f32.gmra.mxu0 %v107
  %v221 = vpop.f32.mrf.mxu0
  %v222 = vadd.f32 %v199, %v221
  %223 = vmatmul.f32.gmra.mxu0 %v110
  %v224 = vpop.f32.mrf.mxu0
  %v225 = vadd.f32 %v202, %v224
  %226 = vdwg.mxu0
  %v227 = vld [vmem:[%s1] sm:$0xff]
  %v228 = vld [vmem:[%s1 + $0x8] sm:$0xff]
  %v229 = vld [vmem:[%s1 + $0x10] sm:$0xff]
  %v230 = vld [vmem:[%s1 + $0x18] sm:$0xff]
  %v231 = vld [vmem:[%s1 + $0x20] sm:$0xff]
  %v232 = vld [vmem:[%s1 + $0x28] sm:$0xff]
  %v233 = vld [vmem:[%s1 + $0x30] sm:$0xff]
  %v234 = vld [vmem:[%s1 + $0x38] sm:$0xff]
  %v235 = vld [vmem:[%s1 + $0x40] sm:$0xff]
  %v236 = vld [vmem:[%s1 + $0x48] sm:$0xff]
  %v238 = vsel %vm105, %v231, 0
  %v241 = vsel %vm105, %v236, 0
  %243 = vmatpush.msra.mxu0 %v38
  %244 = vmatpush.msra.mxu0 %v37
  %245 = vmatpush.msra.mxu0 %v36
  %246 = vmatpush.msra.mxu0 %v35
  %247 = vmatpush.msra.mxu0 %v34
  %248 = vmatpush.msra.mxu0 %v33
  %249 = vmatpush.msra.mxu0 %v32
  %250 = vmatpush.msra.mxu0 %v31
  %251 = vmatpush.msra.mxu0 %v30
  %252 = vmatpush.msra.mxu0 %v29
  %253 = vmatpush.msra.mxu0 %v28
  %254 = vmatpush.msra.mxu0 %v27
  %255 = vmatpush.msra.mxu0 %v26
  %256 = vmatpush.msra.mxu0 %v25
  %257 = vmatpush.msra.mxu0 %v24
  %258 = vmatpush.msra.mxu0 %v23
  %259 = vmatmul.f32.gmra.mxu0 %v227
  %v260 = vpop.f32.mrf.mxu0
  %v261 = vadd.f32 0.0, %v260
  %262 = vmatmul.f32.gmra.mxu0 %v232
  %v263 = vpop.f32.mrf.mxu0
  %v264 = vadd.f32 0.0, %v263
  %265 = vdwg.mxu0
  %266 = vmatpush.msra.mxu0 %v54
  %267 = vmatpush.msra.mxu0 %v53
  %268 = vmatpush.msra.mxu0 %v52
  %269 = vmatpush.msra.mxu0 %v51
  %270 = vmatpush.msra.mxu0 %v50
  %271 = vmatpush.msra.mxu0 %v49
  %272 = vmatpush.msra.mxu0 %v48
  %273 = vmatpush.msra.mxu0 %v47
  %274 = vmatpush.msra.mxu0 %v46
  %275 = vmatpush.msra.mxu0 %v45
  %276 = vmatpush.msra.mxu0 %v44
  %277 = vmatpush.msra.mxu0 %v43
  %278 = vmatpush.msra.mxu0 %v42
  %279 = vmatpush.msra.mxu0 %v41
  %280 = vmatpush.msra.mxu0 %v40
  %281 = vmatpush.msra.mxu0 %v39
  %282 = vmatmul.f32.gmra.mxu0 %v228
  %v283 = vpop.f32.mrf.mxu0
  %v284 = vadd.f32 %v261, %v283
  %285 = vmatmul.f32.gmra.mxu0 %v233
  %v286 = vpop.f32.mrf.mxu0
  %v287 = vadd.f32 %v264, %v286
  %288 = vdwg.mxu0
  %289 = vmatpush.msra.mxu0 %v70
  %290 = vmatpush.msra.mxu0 %v69
  %291 = vmatpush.msra.mxu0 %v68
  %292 = vmatpush.msra.mxu0 %v67
  %293 = vmatpush.msra.mxu0 %v66
  %294 = vmatpush.msra.mxu0 %v65
  %295 = vmatpush.msra.mxu0 %v64
  %296 = vmatpush.msra.mxu0 %v63
  %297 = vmatpush.msra.mxu0 %v62
  %298 = vmatpush.msra.mxu0 %v61
  %299 = vmatpush.msra.mxu0 %v60
  %300 = vmatpush.msra.mxu0 %v59
  %301 = vmatpush.msra.mxu0 %v58
  %302 = vmatpush.msra.mxu0 %v57
  %303 = vmatpush.msra.mxu0 %v56
  %304 = vmatpush.msra.mxu0 %v55
  %305 = vmatmul.f32.gmra.mxu0 %v229
  %v306 = vpop.f32.mrf.mxu0
  %v307 = vadd.f32 %v284, %v306
  %308 = vmatmul.f32.gmra.mxu0 %v234
  %v309 = vpop.f32.mrf.mxu0
  %v310 = vadd.f32 %v287, %v309
  %311 = vdwg.mxu0
  %312 = vmatpush.msra.mxu0 %v86
  %313 = vmatpush.msra.mxu0 %v85
  %314 = vmatpush.msra.mxu0 %v84
  %315 = vmatpush.msra.mxu0 %v83
  %316 = vmatpush.msra.mxu0 %v82
  %317 = vmatpush.msra.mxu0 %v81
  %318 = vmatpush.msra.mxu0 %v80
  %319 = vmatpush.msra.mxu0 %v79
  %320 = vmatpush.msra.mxu0 %v78
  %321 = vmatpush.msra.mxu0 %v77
  %322 = vmatpush.msra.mxu0 %v76
  %323 = vmatpush.msra.mxu0 %v75
  %324 = vmatpush.msra.mxu0 %v74
  %325 = vmatpush.msra.mxu0 %v73
  %326 = vmatpush.msra.mxu0 %v72
  %327 = vmatpush.msra.mxu0 %v71
  %328 = vmatmul.f32.gmra.mxu0 %v230
  %v329 = vpop.f32.mrf.mxu0
  %v330 = vadd.f32 %v307, %v329
  %331 = vmatmul.f32.gmra.mxu0 %v235
  %v332 = vpop.f32.mrf.mxu0
  %v333 = vadd.f32 %v310, %v332
  %334 = vdwg.mxu0
  %335 = vmatpush.msra.mxu0 0.0
  %336 = vmatpush.msra.mxu0 0.0
  %337 = vmatpush.msra.mxu0 0.0
  %338 = vmatpush.msra.mxu0 0.0
  %339 = vmatpush.msra.mxu0 0.0
  %340 = vmatpush.msra.mxu0 0.0
  %341 = vmatpush.msra.mxu0 0.0
  %342 = vmatpush.msra.mxu0 0.0
  %343 = vmatpush.msra.mxu0 %v94
  %344 = vmatpush.msra.mxu0 %v93
  %345 = vmatpush.msra.mxu0 %v92
  %346 = vmatpush.msra.mxu0 %v91
  %347 = vmatpush.msra.mxu0 %v90
  %348 = vmatpush.msra.mxu0 %v89
  %349 = vmatpush.msra.mxu0 %v88
  %350 = vmatpush.msra.mxu0 %v87
  %351 = vmatmul.f32.gmra.mxu0 %v238
  %v352 = vpop.f32.mrf.mxu0
  %v353 = vadd.f32 %v330, %v352
  %354 = vmatmul.f32.gmra.mxu0 %v241
  %v355 = vpop.f32.mrf.mxu0
  %v356 = vadd.f32 %v333, %v355
  %357 = vdwg.mxu0
  %v358 = vmax.f32 %v222, %v353
  %v359 = vmax.f32 %v225, %v356
  %v360 = vld [vmem:[%s2] sm:$0xff]
  %v361 = vld [vmem:[%s2 + $0x8] sm:$0xff]
  %v362 = vld [vmem:[%s2 + $0x10] sm:$0xff]
  %v363 = vld [vmem:[%s2 + $0x18] sm:$0xff]
  %v364 = vld [vmem:[%s2 + $0x20] sm:$0xff]
  %v365 = vld [vmem:[%s2 + $0x28] sm:$0xff]
  %v366 = vld [vmem:[%s2 + $0x30] sm:$0xff]
  %v367 = vld [vmem:[%s2 + $0x38] sm:$0xff]
  %v368 = vld [vmem:[%s2 + $0x40] sm:$0xff]
  %v369 = vld [vmem:[%s2 + $0x48] sm:$0xff]
  %v371 = vsel %vm105, %v364, 0
  %v374 = vsel %vm105, %v369, 0
  %376 = vmatpush.msra.mxu0 %v38
  %377 = vmatpush.msra.mxu0 %v37
  %378 = vmatpush.msra.mxu0 %v36
  %379 = vmatpush.msra.mxu0 %v35
  %380 = vmatpush.msra.mxu0 %v34
  %381 = vmatpush.msra.mxu0 %v33
  %382 = vmatpush.msra.mxu0 %v32
  %383 = vmatpush.msra.mxu0 %v31
  %384 = vmatpush.msra.mxu0 %v30
  %385 = vmatpush.msra.mxu0 %v29
  %386 = vmatpush.msra.mxu0 %v28
  %387 = vmatpush.msra.mxu0 %v27
  %388 = vmatpush.msra.mxu0 %v26
  %389 = vmatpush.msra.mxu0 %v25
  %390 = vmatpush.msra.mxu0 %v24
  %391 = vmatpush.msra.mxu0 %v23
  %392 = vmatmul.f32.gmra.mxu0 %v360
  %v393 = vpop.f32.mrf.mxu0
  %v394 = vadd.f32 0.0, %v393
  %395 = vmatmul.f32.gmra.mxu0 %v365
  %v396 = vpop.f32.mrf.mxu0
  %v397 = vadd.f32 0.0, %v396
  %398 = vdwg.mxu0
  %399 = vmatpush.msra.mxu0 %v54
  %400 = vmatpush.msra.mxu0 %v53
  %401 = vmatpush.msra.mxu0 %v52
  %402 = vmatpush.msra.mxu0 %v51
  %403 = vmatpush.msra.mxu0 %v50
  %404 = vmatpush.msra.mxu0 %v49
  %405 = vmatpush.msra.mxu0 %v48
  %406 = vmatpush.msra.mxu0 %v47
  %407 = vmatpush.msra.mxu0 %v46
  %408 = vmatpush.msra.mxu0 %v45
  %409 = vmatpush.msra.mxu0 %v44
  %410 = vmatpush.msra.mxu0 %v43
  %411 = vmatpush.msra.mxu0 %v42
  %412 = vmatpush.msra.mxu0 %v41
  %413 = vmatpush.msra.mxu0 %v40
  %414 = vmatpush.msra.mxu0 %v39
  %415 = vmatmul.f32.gmra.mxu0 %v361
  %v416 = vpop.f32.mrf.mxu0
  %v417 = vadd.f32 %v394, %v416
  %418 = vmatmul.f32.gmra.mxu0 %v366
  %v419 = vpop.f32.mrf.mxu0
  %v420 = vadd.f32 %v397, %v419
  %421 = vdwg.mxu0
  %422 = vmatpush.msra.mxu0 %v70
  %423 = vmatpush.msra.mxu0 %v69
  %424 = vmatpush.msra.mxu0 %v68
  %425 = vmatpush.msra.mxu0 %v67
  %426 = vmatpush.msra.mxu0 %v66
  %427 = vmatpush.msra.mxu0 %v65
  %428 = vmatpush.msra.mxu0 %v64
  %429 = vmatpush.msra.mxu0 %v63
  %430 = vmatpush.msra.mxu0 %v62
  %431 = vmatpush.msra.mxu0 %v61
  %432 = vmatpush.msra.mxu0 %v60
  %433 = vmatpush.msra.mxu0 %v59
  %434 = vmatpush.msra.mxu0 %v58
  %435 = vmatpush.msra.mxu0 %v57
  %436 = vmatpush.msra.mxu0 %v56
  %437 = vmatpush.msra.mxu0 %v55
  %438 = vmatmul.f32.gmra.mxu0 %v362
  %v439 = vpop.f32.mrf.mxu0
  %v440 = vadd.f32 %v417, %v439
  %441 = vmatmul.f32.gmra.mxu0 %v367
  %v442 = vpop.f32.mrf.mxu0
  %v443 = vadd.f32 %v420, %v442
  %444 = vdwg.mxu0
  %445 = vmatpush.msra.mxu0 %v86
  %446 = vmatpush.msra.mxu0 %v85
  %447 = vmatpush.msra.mxu0 %v84
  %448 = vmatpush.msra.mxu0 %v83
  %449 = vmatpush.msra.mxu0 %v82
  %450 = vmatpush.msra.mxu0 %v81
  %451 = vmatpush.msra.mxu0 %v80
  %452 = vmatpush.msra.mxu0 %v79
  %453 = vmatpush.msra.mxu0 %v78
  %454 = vmatpush.msra.mxu0 %v77
  %455 = vmatpush.msra.mxu0 %v76
  %456 = vmatpush.msra.mxu0 %v75
  %457 = vmatpush.msra.mxu0 %v74
  %458 = vmatpush.msra.mxu0 %v73
  %459 = vmatpush.msra.mxu0 %v72
  %460 = vmatpush.msra.mxu0 %v71
  %461 = vmatmul.f32.gmra.mxu0 %v363
  %v462 = vpop.f32.mrf.mxu0
  %v463 = vadd.f32 %v440, %v462
  %464 = vmatmul.f32.gmra.mxu0 %v368
  %v465 = vpop.f32.mrf.mxu0
  %v466 = vadd.f32 %v443, %v465
  %467 = vdwg.mxu0
  %468 = vmatpush.msra.mxu0 0.0
  %469 = vmatpush.msra.mxu0 0.0
  %470 = vmatpush.msra.mxu0 0.0
  %471 = vmatpush.msra.mxu0 0.0
  %472 = vmatpush.msra.mxu0 0.0
  %473 = vmatpush.msra.mxu0 0.0
  %474 = vmatpush.msra.mxu0 0.0
  %475 = vmatpush.msra.mxu0 0.0
  %476 = vmatpush.msra.mxu0 %v94
  %477 = vmatpush.msra.mxu0 %v93
  %478 = vmatpush.msra.mxu0 %v92
  %479 = vmatpush.msra.mxu0 %v91
  %480 = vmatpush.msra.mxu0 %v90
  %481 = vmatpush.msra.mxu0 %v89
  %482 = vmatpush.msra.mxu0 %v88
  %483 = vmatpush.msra.mxu0 %v87
  %484 = vmatmul.f32.gmra.mxu0 %v371
  %v485 = vpop.f32.mrf.mxu0
  %v486 = vadd.f32 %v463, %v485
  %487 = vmatmul.f32.gmra.mxu0 %v374
  %v488 = vpop.f32.mrf.mxu0
  %v489 = vadd.f32 %v466, %v488
  %490 = vdwg.mxu0
  %v491 = vld [vmem:[%s3] sm:$0xff]
  %v492 = vld [vmem:[%s3 + $0x8] sm:$0xff]
  %v493 = vld [vmem:[%s3 + $0x10] sm:$0xff]
  %v494 = vld [vmem:[%s3 + $0x18] sm:$0xff]
  %v495 = vld [vmem:[%s3 + $0x20] sm:$0xff]
  %v496 = vld [vmem:[%s3 + $0x28] sm:$0xff]
  %v497 = vld [vmem:[%s3 + $0x30] sm:$0xff]
  %v498 = vld [vmem:[%s3 + $0x38] sm:$0xff]
  %v499 = vld [vmem:[%s3 + $0x40] sm:$0xff]
  %v500 = vld [vmem:[%s3 + $0x48] sm:$0xff]
  %v502 = vsel %vm105, %v495, 0
  %v505 = vsel %vm105, %v500, 0
  %507 = vmatpush.msra.mxu0 %v38
  %508 = vmatpush.msra.mxu0 %v37
  %509 = vmatpush.msra.mxu0 %v36
  %510 = vmatpush.msra.mxu0 %v35
  %511 = vmatpush.msra.mxu0 %v34
  %512 = vmatpush.msra.mxu0 %v33
  %513 = vmatpush.msra.mxu0 %v32
  %514 = vmatpush.msra.mxu0 %v31
  %515 = vmatpush.msra.mxu0 %v30
  %516 = vmatpush.msra.mxu0 %v29
  %517 = vmatpush.msra.mxu0 %v28
  %518 = vmatpush.msra.mxu0 %v27
  %519 = vmatpush.msra.mxu0 %v26
  %520 = vmatpush.msra.mxu0 %v25
  %521 = vmatpush.msra.mxu0 %v24
  %522 = vmatpush.msra.mxu0 %v23
  %523 = vmatmul.f32.gmra.mxu0 %v491
  %v524 = vpop.f32.mrf.mxu0
  %v525 = vadd.f32 0.0, %v524
  %526 = vmatmul.f32.gmra.mxu0 %v496
  %v527 = vpop.f32.mrf.mxu0
  %v528 = vadd.f32 0.0, %v527
  %529 = vdwg.mxu0
  %530 = vmatpush.msra.mxu0 %v54
  %531 = vmatpush.msra.mxu0 %v53
  %532 = vmatpush.msra.mxu0 %v52
  %533 = vmatpush.msra.mxu0 %v51
  %534 = vmatpush.msra.mxu0 %v50
  %535 = vmatpush.msra.mxu0 %v49
  %536 = vmatpush.msra.mxu0 %v48
  %537 = vmatpush.msra.mxu0 %v47
  %538 = vmatpush.msra.mxu0 %v46
  %539 = vmatpush.msra.mxu0 %v45
  %540 = vmatpush.msra.mxu0 %v44
  %541 = vmatpush.msra.mxu0 %v43
  %542 = vmatpush.msra.mxu0 %v42
  %543 = vmatpush.msra.mxu0 %v41
  %544 = vmatpush.msra.mxu0 %v40
  %545 = vmatpush.msra.mxu0 %v39
  %546 = vmatmul.f32.gmra.mxu0 %v492
  %v547 = vpop.f32.mrf.mxu0
  %v548 = vadd.f32 %v525, %v547
  %549 = vmatmul.f32.gmra.mxu0 %v497
  %v550 = vpop.f32.mrf.mxu0
  %v551 = vadd.f32 %v528, %v550
  %552 = vdwg.mxu0
  %553 = vmatpush.msra.mxu0 %v70
  %554 = vmatpush.msra.mxu0 %v69
  %555 = vmatpush.msra.mxu0 %v68
  %556 = vmatpush.msra.mxu0 %v67
  %557 = vmatpush.msra.mxu0 %v66
  %558 = vmatpush.msra.mxu0 %v65
  %559 = vmatpush.msra.mxu0 %v64
  %560 = vmatpush.msra.mxu0 %v63
  %561 = vmatpush.msra.mxu0 %v62
  %562 = vmatpush.msra.mxu0 %v61
  %563 = vmatpush.msra.mxu0 %v60
  %564 = vmatpush.msra.mxu0 %v59
  %565 = vmatpush.msra.mxu0 %v58
  %566 = vmatpush.msra.mxu0 %v57
  %567 = vmatpush.msra.mxu0 %v56
  %568 = vmatpush.msra.mxu0 %v55
  %569 = vmatmul.f32.gmra.mxu0 %v493
  %v570 = vpop.f32.mrf.mxu0
  %v571 = vadd.f32 %v548, %v570
  %572 = vmatmul.f32.gmra.mxu0 %v498
  %v573 = vpop.f32.mrf.mxu0
  %v574 = vadd.f32 %v551, %v573
  %575 = vdwg.mxu0
  %576 = vmatpush.msra.mxu0 %v86
  %577 = vmatpush.msra.mxu0 %v85
  %578 = vmatpush.msra.mxu0 %v84
  %579 = vmatpush.msra.mxu0 %v83
  %580 = vmatpush.msra.mxu0 %v82
  %581 = vmatpush.msra.mxu0 %v81
  %582 = vmatpush.msra.mxu0 %v80
  %583 = vmatpush.msra.mxu0 %v79
  %584 = vmatpush.msra.mxu0 %v78
  %585 = vmatpush.msra.mxu0 %v77
  %586 = vmatpush.msra.mxu0 %v76
  %587 = vmatpush.msra.mxu0 %v75
  %588 = vmatpush.msra.mxu0 %v74
  %589 = vmatpush.msra.mxu0 %v73
  %590 = vmatpush.msra.mxu0 %v72
  %591 = vmatpush.msra.mxu0 %v71
  %592 = vmatmul.f32.gmra.mxu0 %v494
  %v593 = vpop.f32.mrf.mxu0
  %v594 = vadd.f32 %v571, %v593
  %595 = vmatmul.f32.gmra.mxu0 %v499
  %v596 = vpop.f32.mrf.mxu0
  %v597 = vadd.f32 %v574, %v596
  %598 = vdwg.mxu0
  %599 = vmatpush.msra.mxu0 0.0
  %600 = vmatpush.msra.mxu0 0.0
  %601 = vmatpush.msra.mxu0 0.0
  %602 = vmatpush.msra.mxu0 0.0
  %603 = vmatpush.msra.mxu0 0.0
  %604 = vmatpush.msra.mxu0 0.0
  %605 = vmatpush.msra.mxu0 0.0
  %606 = vmatpush.msra.mxu0 0.0
  %607 = vmatpush.msra.mxu0 %v94
  %608 = vmatpush.msra.mxu0 %v93
  %609 = vmatpush.msra.mxu0 %v92
  %610 = vmatpush.msra.mxu0 %v91
  %611 = vmatpush.msra.mxu0 %v90
  %612 = vmatpush.msra.mxu0 %v89
  %613 = vmatpush.msra.mxu0 %v88
  %614 = vmatpush.msra.mxu0 %v87
  %615 = vmatmul.f32.gmra.mxu0 %v502
  %v616 = vpop.f32.mrf.mxu0
  %v617 = vadd.f32 %v594, %v616
  %618 = vmatmul.f32.gmra.mxu0 %v505
  %v619 = vpop.f32.mrf.mxu0
  %v620 = vadd.f32 %v597, %v619
  %621 = vdwg.mxu0
  %v622 = vmax.f32 %v486, %v617
  %v623 = vmax.f32 %v489, %v620
  %v624 = vmax.f32 %v358, %v622
  %v625 = vmax.f32 %v359, %v623
  %v626 = vld [vmem:[%s5] sm:$0x1]
  %v628 = vperm.slane %v626, 0
  %v630 = vadd.f32 %v624, %v628
  %v631 = vadd.f32 %v625, %v628
  %v632 = vmax.f32 %v630, 0.0
  %v633 = vmax.f32 %v631, 0.0
  %634 = vst.msk [vmem:[%s6] sm:$0xff] %vm105, %v632
  %635 = vst.msk [vmem:[%s6 + $0x8] sm:$0xff] %vm105, %v633
  // Predicated region
  $region26: #{deep_rqnet_forward.6} parent=0 // pred_check
    _
  $region27: #{deep_rqnet_forward.6} parent=0 // pred_check_branch
    %637 = sbr.rel (0) target = $region29
  $region28: #{deep_rqnet_forward.6} parent=0 // pred_region
    _
  $region29: #{deep_rqnet_forward.6} parent=0 // pred_fallthru
    _
  // Predicated region
  $region30: #{deep_rqnet_forward.6} parent=0 // pred_check
    _
  $region31: #{deep_rqnet_forward.6} parent=0 // pred_check_branch
    %639 = sbr.rel (0) target = $region33
  $region32: #{deep_rqnet_forward.6} parent=0 // pred_region
    _
  $region33: #{deep_rqnet_forward.6} parent=0 // pred_fallthru
    _

// kernel: deep_rqnet_forward.7
$region0: #{deep_rqnet_forward.7}
  #allocation0 [shape = 'u32[]', space=smem, size = 0x4, offset = 0x4, fixed_abs, tag = 'smem constant byte address 0x4 - core index']
  #allocation1 [shape = 'u32[72,128]{1,0:T(1,128)}', space=vmem, size = 0x9000, scoped, tag = 'internal scratch']
  #allocation2 [shape = 'f32[4,768]{1,0:T(4,128)}', space=vmem, size = 0x3000, scoped, tag = 'scratch operand']
  #allocation3 [shape = 'f32[1,256]{1,0:T(1,128)}', space=vmem, size = 0x400, scoped, tag = 'scratch operand']
  #allocation4 [shape = 'f32[4,256]{1,0:T(4,128)}', space=vmem, size = 0x1000, scoped, tag = 'scratch operand']
  %s0 = inlined_call_operand.vmem [shape: f32[4,256], index: 0, kind: input, shape index: {}]
  %s1 = inlined_call_operand.vmem [shape: f32[256,768], index: 1, kind: input, shape index: {}]
  %s2 = inlined_call_operand.vmem [shape: f32[256,768], index: 2, kind: input, shape index: {}]
  %s3 = inlined_call_operand.vmem [shape: f32[1,768], index: 3, kind: input, shape index: {}]
  %s4 = inlined_call_operand.vmem [shape: f32[1,768], index: 4, kind: input, shape index: {}]
  %s5 = inlined_call_operand.vmem [shape: f32[256,128], index: 5, kind: input, shape index: {}]
  %s6 = inlined_call_operand.vmem [shape: f32[1,128], index: 6, kind: input, shape index: {}]
  %s7 = inlined_call_operand.vmem [shape: f32[128,128], index: 7, kind: input, shape index: {}]
  %s8 = inlined_call_operand.vmem [shape: f32[1,128], index: 8, kind: input, shape index: {}]
  %s9 = inlined_call_operand.hbm [shape: f32[4,128], index: 9, kind: output, shape index: {}]
  %s10 = sld [smem:[#allocation0]]
  $region46: #{deep_rqnet_forward.7} parent=0
    _
  %s12 = ssub.s32 1, %s10
  %s13 = scalar_select 0, %s12, %s10
  $region1: #{deep_rqnet_forward.7} parent=0
    #allocation5 [shape = 'u8[2048]{0}', space=vmem, size = 0x800, scoped, tag = 'output window, operand 0, single buffered']
    #allocation6 [shape = 's32[1]{0}', space=sflag, size = 0x4, scoped, tag = 'scoped memory for deep_rqnet_forward.7']
    %14 = vsyncpa [#allocation6], 0
    // Predicated region
    $region2: #{deep_rqnet_forward.7} parent=1 // pred_check
      _
    $region3: #{deep_rqnet_forward.7} parent=1 // pred_check_branch
      %16 = sbr.rel (0) target = $region5
    $region4: #{deep_rqnet_forward.7} parent=1 // pred_region
      _
    $region5: #{deep_rqnet_forward.7} parent=1 // pred_fallthru
      _
    // Predicated region
    $region6: #{deep_rqnet_forward.7} parent=1 // pred_check
      _
    $region7: #{deep_rqnet_forward.7} parent=1 // pred_check_branch
      %18 = sbr.rel (0) target = $region9
    $region8: #{deep_rqnet_forward.7} parent=1 // pred_region
      _
    $region9: #{deep_rqnet_forward.7} parent=1 // pred_fallthru
      _
    // Predicated region
    $region10: #{deep_rqnet_forward.7} parent=1 // pred_check
      _
    $region11: #{deep_rqnet_forward.7} parent=1 // pred_check_branch
      %20 = sbr.rel (0) target = $region13
    $region12: #{deep_rqnet_forward.7} parent=1 // pred_region
      _
    $region13: #{deep_rqnet_forward.7} parent=1 // pred_fallthru
      _
    // Predicated region
    $region14: #{deep_rqnet_forward.7} parent=1 // pred_check
      _
    $region15: #{deep_rqnet_forward.7} parent=1 // pred_check_branch
      %22 = sbr.rel (0) target = $region17
    $region16: #{deep_rqnet_forward.7} parent=1 // pred_region
      _
    $region17: #{deep_rqnet_forward.7} parent=1 // pred_fallthru
      _
    // Predicated region
    $region18: #{deep_rqnet_forward.7} parent=1 // pred_check
      _
    $region19: #{deep_rqnet_forward.7} parent=1 // pred_check_branch
      %24 = sbr.rel (0) target = $region21
    $region20: #{deep_rqnet_forward.7} parent=1 // pred_region
      _
    $region21: #{deep_rqnet_forward.7} parent=1 // pred_fallthru
      _
    // Predicated region
    $region22: #{deep_rqnet_forward.7} parent=1 // pred_check
      _
    $region23: #{deep_rqnet_forward.7} parent=1 // pred_check_branch
      %26 = sbr.rel (0) target = $region25
    $region24: #{deep_rqnet_forward.7} parent=1 // pred_region
      _
    $region25: #{deep_rqnet_forward.7} parent=1 // pred_fallthru
      _
    // Predicated region
    $region26: #{deep_rqnet_forward.7} parent=1 // pred_check
      _
    $region27: #{deep_rqnet_forward.7} parent=1 // pred_check_branch
      %28 = sbr.rel (0) target = $region29
    $region28: #{deep_rqnet_forward.7} parent=1 // pred_region
      _
    $region29: #{deep_rqnet_forward.7} parent=1 // pred_fallthru
      _
    // Predicated region
    $region30: #{deep_rqnet_forward.7} parent=1 // pred_check
      _
    $region31: #{deep_rqnet_forward.7} parent=1 // pred_check_branch
      %30 = sbr.rel (0) target = $region33
    $region32: #{deep_rqnet_forward.7} parent=1 // pred_region
      _
    $region33: #{deep_rqnet_forward.7} parent=1 // pred_fallthru
      _
    // Predicated region
    $region34: #{deep_rqnet_forward.7} parent=1 // pred_check
      _
    $region35: #{deep_rqnet_forward.7} parent=1 // pred_check_branch
      %32 = sbr.rel (0) target = $region37
    $region36: #{deep_rqnet_forward.7} parent=1 // pred_region
      _
    $region37: #{deep_rqnet_forward.7} parent=1 // pred_fallthru
      _
    %v33 = vld [vmem:[%s0] sm:$0xff]
    %v34 = vld [vmem:[%s1] sm:$0xff]
    %v35 = vld [vmem:[%s1 + $0x8] sm:$0xff]
    %v36 = vld [vmem:[%s1 + $0x10] sm:$0xff]
    %v37 = vld [vmem:[%s1 + $0x18] sm:$0xff]
    %v38 = vld [vmem:[%s1 + $0x20] sm:$0xff]
    %v39 = vld [vmem:[%s1 + $0x28] sm:$0xff]
    %v40 = vld [vmem:[%s1 + $0x30] sm:$0xff]
    %v41 = vld [vmem:[%s1 + $0x38] sm:$0xff]
    %v42 = vld [vmem:[%s1 + $0x40] sm:$0xff]
    %v43 = vld [vmem:[%s1 + $0x48] sm:$0xff]
    %v44 = vld [vmem:[%s1 + $0x50] sm:$0xff]
    %v45 = vld [vmem:[%s1 + $0x58] sm:$0xff]
    %v46 = vld [vmem:[%s1 + $0x60] sm:$0xff]
    %v47 = vld [vmem:[%s1 + $0x68] sm:$0xff]
    %v48 = vld [vmem:[%s1 + $0x70] sm:$0xff]
    %v49 = vld [vmem:[%s1 + $0x78] sm:$0xff]
    %v50 = vld [vmem:[%s1 + $0x80] sm:$0xff]
    %v51 = vld [vmem:[%s1 + $0x88] sm:$0xff]
    %v52 = vld [vmem:[%s1 + $0x90] sm:$0xff]
    %v53 = vld [vmem:[%s1 + $0x98] sm:$0xff]
    %v54 = vld [vmem:[%s1 + $0xa0] sm:$0xff]
    %v55 = vld [vmem:[%s1 + $0xa8] sm:$0xff]
    %v56 = vld [vmem:[%s1 + $0xb0] sm:$0xff]
    %v57 = vld [vmem:[%s1 + $0xb8] sm:$0xff]
    %v58 = vld [vmem:[%s1 + $0xc0] sm:$0xff]
    %v59 = vld [vmem:[%s1 + $0xc8] sm:$0xff]
    %v60 = vld [vmem:[%s1 + $0xd0] sm:$0xff]
    %v61 = vld [vmem:[%s1 + $0xd8] sm:$0xff]
    %v62 = vld [vmem:[%s1 + $0xe0] sm:$0xff]
    %v63 = vld [vmem:[%s1 + $0xe8] sm:$0xff]
    %v64 = vld [vmem:[%s1 + $0xf0] sm:$0xff]
    %v65 = vld [vmem:[%s1 + $0xf8] sm:$0xff]
    %v66 = vld [vmem:[%s1 + $0x100] sm:$0xff]
    %v67 = vld [vmem:[%s1 + $0x108] sm:$0xff]
    %v68 = vld [vmem:[%s1 + $0x110] sm:$0xff]
    %v69 = vld [vmem:[%s1 + $0x118] sm:$0xff]
    %v70 = vld [vmem:[%s1 + $0x120] sm:$0xff]
    %v71 = vld [vmem:[%s1 + $0x128] sm:$0xff]
    %v72 = vld [vmem:[%s1 + $0x130] sm:$0xff]
    %v73 = vld [vmem:[%s1 + $0x138] sm:$0xff]
    %v74 = vld [vmem:[%s1 + $0x140] sm:$0xff]
    %v75 = vld [vmem:[%s1 + $0x148] sm:$0xff]
    %v76 = vld [vmem:[%s1 + $0x150] sm:$0xff]
    %v77 = vld [vmem:[%s1 + $0x158] sm:$0xff]
    %v78 = vld [vmem:[%s1 + $0x160] sm:$0xff]
    %v79 = vld [vmem:[%s1 + $0x168] sm:$0xff]
    %v80 = vld [vmem:[%s1 + $0x170] sm:$0xff]
    %v81 = vld [vmem:[%s1 + $0x178] sm:$0xff]
    %v82 = vld [vmem:[%s1 + $0x180] sm:$0xff]
    %v83 = vld [vmem:[%s1 + $0x188] sm:$0xff]
    %v84 = vld [vmem:[%s1 + $0x190] sm:$0xff]
    %v85 = vld [vmem:[%s1 + $0x198] sm:$0xff]
    %v86 = vld [vmem:[%s1 + $0x1a0] sm:$0xff]
    %v87 = vld [vmem:[%s1 + $0x1a8] sm:$0xff]
    %v88 = vld [vmem:[%s1 + $0x1b0] sm:$0xff]
    %v89 = vld [vmem:[%s1 + $0x1b8] sm:$0xff]
    %v90 = vld [vmem:[%s1 + $0x1c0] sm:$0xff]
    %v91 = vld [vmem:[%s1 + $0x1c8] sm:$0xff]
    %v92 = vld [vmem:[%s1 + $0x1d0] sm:$0xff]
    %v93 = vld [vmem:[%s1 + $0x1d8] sm:$0xff]
    %v94 = vld [vmem:[%s1 + $0x1e0] sm:$0xff]
    %v95 = vld [vmem:[%s1 + $0x1e8] sm:$0xff]
    %v96 = vld [vmem:[%s1 + $0x1f0] sm:$0xff]
    %v97 = vld [vmem:[%s1 + $0x1f8] sm:$0xff]
    %v98 = vld [vmem:[%s1 + $0x200] sm:$0xff]
    %v99 = vld [vmem:[%s1 + $0x208] sm:$0xff]
    %v100 = vld [vmem:[%s1 + $0x210] sm:$0xff]
    %v101 = vld [vmem:[%s1 + $0x218] sm:$0xff]
    %v102 = vld [vmem:[%s1 + $0x220] sm:$0xff]
    %v103 = vld [vmem:[%s1 + $0x228] sm:$0xff]
    %v104 = vld [vmem:[%s1 + $0x230] sm:$0xff]
    %v105 = vld [vmem:[%s1 + $0x238] sm:$0xff]
    %v106 = vld [vmem:[%s1 + $0x240] sm:$0xff]
    %v107 = vld [vmem:[%s1 + $0x248] sm:$0xff]
    %v108 = vld [vmem:[%s1 + $0x250] sm:$0xff]
    %v109 = vld [vmem:[%s1 + $0x258] sm:$0xff]
    %v110 = vld [vmem:[%s1 + $0x260] sm:$0xff]
    %v111 = vld [vmem:[%s1 + $0x268] sm:$0xff]
    %v112 = vld [vmem:[%s1 + $0x270] sm:$0xff]
    %v113 = vld [vmem:[%s1 + $0x278] sm:$0xff]
    %v114 = vld [vmem:[%s1 + $0x280] sm:$0xff]
    %v115 = vld [vmem:[%s1 + $0x288] sm:$0xff]
    %v116 = vld [vmem:[%s1 + $0x290] sm:$0xff]
    %v117 = vld [vmem:[%s1 + $0x298] sm:$0xff]
    %v118 = vld [vmem:[%s1 + $0x2a0] sm:$0xff]
    %v119 = vld [vmem:[%s1 + $0x2a8] sm:$0xff]
    %v120 = vld [vmem:[%s1 + $0x2b0] sm:$0xff]
    %v121 = vld [vmem:[%s1 + $0x2b8] sm:$0xff]
    %v122 = vld [vmem:[%s1 + $0x2c0] sm:$0xff]
    %v123 = vld [vmem:[%s1 + $0x2c8] sm:$0xff]
    %v124 = vld [vmem:[%s1 + $0x2d0] sm:$0xff]
    %v125 = vld [vmem:[%s1 + $0x2d8] sm:$0xff]
    %v126 = vld [vmem:[%s1 + $0x2e0] sm:$0xff]
    %v127 = vld [vmem:[%s1 + $0x2e8] sm:$0xff]
    %v128 = vld [vmem:[%s1 + $0x2f0] sm:$0xff]
    %v129 = vld [vmem:[%s1 + $0x2f8] sm:$0xff]
    %v130 = vld [vmem:[%s1 + $0x300] sm:$0xff]
    %v131 = vld [vmem:[%s1 + $0x308] sm:$0xff]
    %v132 = vld [vmem:[%s1 + $0x310] sm:$0xff]
    %v133 = vld [vmem:[%s1 + $0x318] sm:$0xff]
    %v134 = vld [vmem:[%s1 + $0x320] sm:$0xff]
    %v135 = vld [vmem:[%s1 + $0x328] sm:$0xff]
    %v136 = vld [vmem:[%s1 + $0x330] sm:$0xff]
    %v137 = vld [vmem:[%s1 + $0x338] sm:$0xff]
    %v138 = vld [vmem:[%s1 + $0x340] sm:$0xff]
    %v139 = vld [vmem:[%s1 + $0x348] sm:$0xff]
    %v140 = vld [vmem:[%s1 + $0x350] sm:$0xff]
    %v141 = vld [vmem:[%s1 + $0x358] sm:$0xff]
    %v142 = vld [vmem:[%s1 + $0x360] sm:$0xff]
    %v143 = vld [vmem:[%s1 + $0x368] sm:$0xff]
    %v144 = vld [vmem:[%s1 + $0x370] sm:$0xff]
    %v145 = vld [vmem:[%s1 + $0x378] sm:$0xff]
    %v146 = vld [vmem:[%s1 + $0x380] sm:$0xff]
    %v147 = vld [vmem:[%s1 + $0x388] sm:$0xff]
    %v148 = vld [vmem:[%s1 + $0x390] sm:$0xff]
    %v149 = vld [vmem:[%s1 + $0x398] sm:$0xff]
    %v150 = vld [vmem:[%s1 + $0x3a0] sm:$0xff]
    %v151 = vld [vmem:[%s1 + $0x3a8] sm:$0xff]
    %v152 = vld [vmem:[%s1 + $0x3b0] sm:$0xff]
    %v153 = vld [vmem:[%s1 + $0x3b8] sm:$0xff]
    %v154 = vld [vmem:[%s1 + $0x3c0] sm:$0xff]
    %v155 = vld [vmem:[%s1 + $0x3c8] sm:$0xff]
    %v156 = vld [vmem:[%s1 + $0x3d0] sm:$0xff]
    %v157 = vld [vmem:[%s1 + $0x3d8] sm:$0xff]
    %v158 = vld [vmem:[%s1 + $0x3e0] sm:$0xff]
    %v159 = vld [vmem:[%s1 + $0x3e8] sm:$0xff]
    %v160 = vld [vmem:[%s1 + $0x3f0] sm:$0xff]
    %v161 = vld [vmem:[%s1 + $0x3f8] sm:$0xff]
    %v162 = vld [vmem:[%s1 + $0x400] sm:$0xff]
    %v163 = vld [vmem:[%s1 + $0x408] sm:$0xff]
    %v164 = vld [vmem:[%s1 + $0x410] sm:$0xff]
    %v165 = vld [vmem:[%s1 + $0x418] sm:$0xff]
    %v166 = vld [vmem:[%s1 + $0x420] sm:$0xff]
    %v167 = vld [vmem:[%s1 + $0x428] sm:$0xff]
    %v168 = vld [vmem:[%s1 + $0x430] sm:$0xff]
    %v169 = vld [vmem:[%s1 + $0x438] sm:$0xff]
    %v170 = vld [vmem:[%s1 + $0x440] sm:$0xff]
    %v171 = vld [vmem:[%s1 + $0x448] sm:$0xff]
    %v172 = vld [vmem:[%s1 + $0x450] sm:$0xff]
    %v173 = vld [vmem:[%s1 + $0x458] sm:$0xff]
    %v174 = vld [vmem:[%s1 + $0x460] sm:$0xff]
    %v175 = vld [vmem:[%s1 + $0x468] sm:$0xff]
    %v176 = vld [vmem:[%s1 + $0x470] sm:$0xff]
    %v177 = vld [vmem:[%s1 + $0x478] sm:$0xff]
    %v178 = vld [vmem:[%s1 + $0x480] sm:$0xff]
    %v179 = vld [vmem:[%s1 + $0x488] sm:$0xff]
    %v180 = vld [vmem:[%s1 + $0x490] sm:$0xff]
    %v181 = vld [vmem:[%s1 + $0x498] sm:$0xff]
    %v182 = vld [vmem:[%s1 + $0x4a0] sm:$0xff]
    %v183 = vld [vmem:[%s1 + $0x4a8] sm:$0xff]
    %v184 = vld [vmem:[%s1 + $0x4b0] sm:$0xff]
    %v185 = vld [vmem:[%s1 + $0x4b8] sm:$0xff]
    %v186 = vld [vmem:[%s1 + $0x4c0] sm:$0xff]
    %v187 = vld [vmem:[%s1 + $0x4c8] sm:$0xff]
    %v188 = vld [vmem:[%s1 + $0x4d0] sm:$0xff]
    %v189 = vld [vmem:[%s1 + $0x4d8] sm:$0xff]
    %v190 = vld [vmem:[%s1 + $0x4e0] sm:$0xff]
    %v191 = vld [vmem:[%s1 + $0x4e8] sm:$0xff]
    %v192 = vld [vmem:[%s1 + $0x4f0] sm:$0xff]
    %v193 = vld [vmem:[%s1 + $0x4f8] sm:$0xff]
    %v194 = vld [vmem:[%s1 + $0x500] sm:$0xff]
    %v195 = vld [vmem:[%s1 + $0x508] sm:$0xff]
    %v196 = vld [vmem:[%s1 + $0x510] sm:$0xff]
    %v197 = vld [vmem:[%s1 + $0x518] sm:$0xff]
    %v198 = vld [vmem:[%s1 + $0x520] sm:$0xff]
    %v199 = vld [vmem:[%s1 + $0x528] sm:$0xff]
    %v200 = vld [vmem:[%s1 + $0x530] sm:$0xff]
    %v201 = vld [vmem:[%s1 + $0x538] sm:$0xff]
    %v202 = vld [vmem:[%s1 + $0x540] sm:$0xff]
    %v203 = vld [vmem:[%s1 + $0x548] sm:$0xff]
    %v204 = vld [vmem:[%s1 + $0x550] sm:$0xff]
    %v205 = vld [vmem:[%s1 + $0x558] sm:$0xff]
    %v206 = vld [vmem:[%s1 + $0x560] sm:$0xff]
    %v207 = vld [vmem:[%s1 + $0x568] sm:$0xff]
    %v208 = vld [vmem:[%s1 + $0x570] sm:$0xff]
    %v209 = vld [vmem:[%s1 + $0x578] sm:$0xff]
    %v210 = vld [vmem:[%s1 + $0x580] sm:$0xff]
    %v211 = vld [vmem:[%s1 + $0x588] sm:$0xff]
    %v212 = vld [vmem:[%s1 + $0x590] sm:$0xff]
    %v213 = vld [vmem:[%s1 + $0x598] sm:$0xff]
    %v214 = vld [vmem:[%s1 + $0x5a0] sm:$0xff]
    %v215 = vld [vmem:[%s1 + $0x5a8] sm:$0xff]
    %v216 = vld [vmem:[%s1 + $0x5b0] sm:$0xff]
    %v217 = vld [vmem:[%s1 + $0x5b8] sm:$0xff]
    %v218 = vld [vmem:[%s1 + $0x5c0] sm:$0xff]
    %v219 = vld [vmem:[%s1 + $0x5c8] sm:$0xff]
    %v220 = vld [vmem:[%s1 + $0x5d0] sm:$0xff]
    %v221 = vld [vmem:[%s1 + $0x5d8] sm:$0xff]
    %v222 = vld [vmem:[%s1 + $0x5e0] sm:$0xff]
    %v223 = vld [vmem:[%s1 + $0x5e8] sm:$0xff]
    %v224 = vld [vmem:[%s1 + $0x5f0] sm:$0xff]
    %v225 = vld [vmem:[%s1 + $0x5f8] sm:$0xff]
    %v226 = vld [vmem:[%s3] sm:$0x3f]
    %v228 = vperm.slane %v226, 0
    %v229 = vperm.slane %v226, 1
    %v230 = vperm.slane %v226, 2
    %v231 = vperm.slane %v226, 3
    %v232 = vperm.slane %v226, 4
    %v233 = vperm.slane %v226, 5
    %241 = vst [vmem:[#allocation1] ss:$2 sm:$0xff] %v33
    %v242 = vld.sshfl [vmem:[#allocation1] sm:$0xff pattern:$0x75316420]
    %v243 = vld.sshfl [vmem:[#allocation1 + $0x8] sm:$0xff pattern:$0x75316420]
    %246 = vmatpush.msra.mxu0 %v124
    %247 = vmatpush.msra.mxu0 %v118
    %248 = vmatpush.msra.mxu0 %v112
    %249 = vmatpush.msra.mxu0 %v106
    %250 = vmatpush.msra.mxu0 %v100
    %251 = vmatpush.msra.mxu0 %v94
    %252 = vmatpush.msra.mxu0 %v88
    %253 = vmatpush.msra.mxu0 %v82
    %254 = vmatpush.msra.mxu0 %v76
    %255 = vmatpush.msra.mxu0 %v70
    %256 = vmatpush.msra.mxu0 %v64
    %257 = vmatpush.msra.mxu0 %v58
    %258 = vmatpush.msra.mxu0 %v52
    %259 = vmatpush.msra.mxu0 %v46
    %260 = vmatpush.msra.mxu0 %v40
    %261 = vmatpush.msra.mxu0 %v34
    %262 = vmatmul.f32.gmra.mxu0 %v242
    %v263 = vpop.f32.mrf.mxu0
    %v264 = vadd.f32 %v228, %v263
    %265 = vdwg.mxu0
    %266 = vmatpush.msra.mxu0 %v220
    %267 = vmatpush.msra.mxu0 %v214
    %268 = vmatpush.msra.mxu0 %v208
    %269 = vmatpush.msra.mxu0 %v202
    %270 = vmatpush.msra.mxu0 %v196
    %271 = vmatpush.msra.mxu0 %v190
    %272 = vmatpush.msra.mxu0 %v184
    %273 = vmatpush.msra.mxu0 %v178
    %274 = vmatpush.msra.mxu0 %v172
    %275 = vmatpush.msra.mxu0 %v166
    %276 = vmatpush.msra.mxu0 %v160
    %277 = vmatpush.msra.mxu0 %v154
    %278 = vmatpush.msra.mxu0 %v148
    %279 = vmatpush.msra.mxu0 %v142
    %280 = vmatpush.msra.mxu0 %v136
    %281 = vmatpush.msra.mxu0 %v130
    %282 = vmatmul.f32.gmra.mxu0 %v243
    %v283 = vpop.f32.mrf.mxu0
    %v284 = vadd.f32 %v264, %v283
    %285 = vdwg.mxu0
    %286 = vmatpush.msra.mxu0 %v125
    %287 = vmatpush.msra.mxu0 %v119
    %288 = vmatpush.msra.mxu0 %v113
    %289 = vmatpush.msra.mxu0 %v107
    %290 = vmatpush.msra.mxu0 %v101
    %291 = vmatpush.msra.mxu0 %v95
    %292 = vmatpush.msra.mxu0 %v89
    %293 = vmatpush.msra.mxu0 %v83
    %294 = vmatpush.msra.mxu0 %v77
    %295 = vmatpush.msra.mxu0 %v71
    %296 = vmatpush.msra.mxu0 %v65
    %297 = vmatpush.msra.mxu0 %v59
    %298 = vmatpush.msra.mxu0 %v53
    %299 = vmatpush.msra.mxu0 %v47
    %300 = vmatpush.msra.mxu0 %v41
    %301 = vmatpush.msra.mxu0 %v35
    %302 = vmatmul.f32.gmra.mxu0 %v242
    %v303 = vpop.f32.mrf.mxu0
    %v304 = vadd.f32 %v229, %v303
    %305 = vdwg.mxu0
    %306 = vmatpush.msra.mxu0 %v221
    %307 = vmatpush.msra.mxu0 %v215
    %308 = vmatpush.msra.mxu0 %v209
    %309 = vmatpush.msra.mxu0 %v203
    %310 = vmatpush.msra.mxu0 %v197
    %311 = vmatpush.msra.mxu0 %v191
    %312 = vmatpush.msra.mxu0 %v185
    %313 = vmatpush.msra.mxu0 %v179
    %314 = vmatpush.msra.mxu0 %v173
    %315 = vmatpush.msra.mxu0 %v167
    %316 = vmatpush.msra.mxu0 %v161
    %317 = vmatpush.msra.mxu0 %v155
    %318 = vmatpush.msra.mxu0 %v149
    %319 = vmatpush.msra.mxu0 %v143
    %320 = vmatpush.msra.mxu0 %v137
    %321 = vmatpush.msra.mxu0 %v131
    %322 = vmatmul.f32.gmra.mxu0 %v243
    %v323 = vpop.f32.mrf.mxu0
    %v324 = vadd.f32 %v304, %v323
    %325 = vdwg.mxu0
    %326 = vmatpush.msra.mxu0 %v126
    %327 = vmatpush.msra.mxu0 %v120
    %328 = vmatpush.msra.mxu0 %v114
    %329 = vmatpush.msra.mxu0 %v108
    %330 = vmatpush.msra.mxu0 %v102
    %331 = vmatpush.msra.mxu0 %v96
    %332 = vmatpush.msra.mxu0 %v90
    %333 = vmatpush.msra.mxu0 %v84
    %334 = vmatpush.msra.mxu0 %v78
    %335 = vmatpush.msra.mxu0 %v72
    %336 = vmatpush.msra.mxu0 %v66
    %337 = vmatpush.msra.mxu0 %v60
    %338 = vmatpush.msra.mxu0 %v54
    %339 = vmatpush.msra.mxu0 %v48
    %340 = vmatpush.msra.mxu0 %v42
    %341 = vmatpush.msra.mxu0 %v36
    %342 = vmatmul.f32.gmra.mxu0 %v242
    %v343 = vpop.f32.mrf.mxu0
    %v344 = vadd.f32 %v230, %v343
    %345 = vdwg.mxu0
    %346 = vmatpush.msra.mxu0 %v222
    %347 = vmatpush.msra.mxu0 %v216
    %348 = vmatpush.msra.mxu0 %v210
    %349 = vmatpush.msra.mxu0 %v204
    %350 = vmatpush.msra.mxu0 %v198
    %351 = vmatpush.msra.mxu0 %v192
    %352 = vmatpush.msra.mxu0 %v186
    %353 = vmatpush.msra.mxu0 %v180
    %354 = vmatpush.msra.mxu0 %v174
    %355 = vmatpush.msra.mxu0 %v168
    %356 = vmatpush.msra.mxu0 %v162
    %357 = vmatpush.msra.mxu0 %v156
    %358 = vmatpush.msra.mxu0 %v150
    %359 = vmatpush.msra.mxu0 %v144
    %360 = vmatpush.msra.mxu0 %v138
    %361 = vmatpush.msra.mxu0 %v132
    %362 = vmatmul.f32.gmra.mxu0 %v243
    %v363 = vpop.f32.mrf.mxu0
    %v364 = vadd.f32 %v344, %v363
    %365 = vdwg.mxu0
    %366 = vmatpush.msra.mxu0 %v127
    %367 = vmatpush.msra.mxu0 %v121
    %368 = vmatpush.msra.mxu0 %v115
    %369 = vmatpush.msra.mxu0 %v109
    %370 = vmatpush.msra.mxu0 %v103
    %371 = vmatpush.msra.mxu0 %v97
    %372 = vmatpush.msra.mxu0 %v91
    %373 = vmatpush.msra.mxu0 %v85
    %374 = vmatpush.msra.mxu0 %v79
    %375 = vmatpush.msra.mxu0 %v73
    %376 = vmatpush.msra.mxu0 %v67
    %377 = vmatpush.msra.mxu0 %v61
    %378 = vmatpush.msra.mxu0 %v55
    %379 = vmatpush.msra.mxu0 %v49
    %380 = vmatpush.msra.mxu0 %v43
    %381 = vmatpush.msra.mxu0 %v37
    %382 = vmatmul.f32.gmra.mxu0 %v242
    %v383 = vpop.f32.mrf.mxu0
    %v384 = vadd.f32 %v231, %v383
    %385 = vdwg.mxu0
    %386 = vmatpush.msra.mxu0 %v223
    %387 = vmatpush.msra.mxu0 %v217
    %388 = vmatpush.msra.mxu0 %v211
    %389 = vmatpush.msra.mxu0 %v205
    %390 = vmatpush.msra.mxu0 %v199
    %391 = vmatpush.msra.mxu0 %v193
    %392 = vmatpush.msra.mxu0 %v187
    %393 = vmatpush.msra.mxu0 %v181
    %394 = vmatpush.msra.mxu0 %v175
    %395 = vmatpush.msra.mxu0 %v169
    %396 = vmatpush.msra.mxu0 %v163
    %397 = vmatpush.msra.mxu0 %v157
    %398 = vmatpush.msra.mxu0 %v151
    %399 = vmatpush.msra.mxu0 %v145
    %400 = vmatpush.msra.mxu0 %v139
    %401 = vmatpush.msra.mxu0 %v133
    %402 = vmatmul.f32.gmra.mxu0 %v243
    %v403 = vpop.f32.mrf.mxu0
    %v404 = vadd.f32 %v384, %v403
    %405 = vdwg.mxu0
    %406 = vmatpush.msra.mxu0 %v128
    %407 = vmatpush.msra.mxu0 %v122
    %408 = vmatpush.msra.mxu0 %v116
    %409 = vmatpush.msra.mxu0 %v110
    %410 = vmatpush.msra.mxu0 %v104
    %411 = vmatpush.msra.mxu0 %v98
    %412 = vmatpush.msra.mxu0 %v92
    %413 = vmatpush.msra.mxu0 %v86
    %414 = vmatpush.msra.mxu0 %v80
    %415 = vmatpush.msra.mxu0 %v74
    %416 = vmatpush.msra.mxu0 %v68
    %417 = vmatpush.msra.mxu0 %v62
    %418 = vmatpush.msra.mxu0 %v56
    %419 = vmatpush.msra.mxu0 %v50
    %420 = vmatpush.msra.mxu0 %v44
    %421 = vmatpush.msra.mxu0 %v38
    %422 = vmatmul.f32.gmra.mxu0 %v242
    %v423 = vpop.f32.mrf.mxu0
    %v424 = vadd.f32 %v232, %v423
    %425 = vdwg.mxu0
    %426 = vmatpush.msra.mxu0 %v224
    %427 = vmatpush.msra.mxu0 %v218
    %428 = vmatpush.msra.mxu0 %v212
    %429 = vmatpush.msra.mxu0 %v206
    %430 = vmatpush.msra.mxu0 %v200
    %431 = vmatpush.msra.mxu0 %v194
    %432 = vmatpush.msra.mxu0 %v188
    %433 = vmatpush.msra.mxu0 %v182
    %434 = vmatpush.msra.mxu0 %v176
    %435 = vmatpush.msra.mxu0 %v170
    %436 = vmatpush.msra.mxu0 %v164
    %437 = vmatpush.msra.mxu0 %v158
    %438 = vmatpush.msra.mxu0 %v152
    %439 = vmatpush.msra.mxu0 %v146
    %440 = vmatpush.msra.mxu0 %v140
    %441 = vmatpush.msra.mxu0 %v134
    %442 = vmatmul.f32.gmra.mxu0 %v243
    %v443 = vpop.f32.mrf.mxu0
    %v444 = vadd.f32 %v424, %v443
    %445 = vdwg.mxu0
    %446 = vmatpush.msra.mxu0 %v129
    %447 = vmatpush.msra.mxu0 %v123
    %448 = vmatpush.msra.mxu0 %v117
    %449 = vmatpush.msra.mxu0 %v111
    %450 = vmatpush.msra.mxu0 %v105
    %451 = vmatpush.msra.mxu0 %v99
    %452 = vmatpush.msra.mxu0 %v93
    %453 = vmatpush.msra.mxu0 %v87
    %454 = vmatpush.msra.mxu0 %v81
    %455 = vmatpush.msra.mxu0 %v75
    %456 = vmatpush.msra.mxu0 %v69
    %457 = vmatpush.msra.mxu0 %v63
    %458 = vmatpush.msra.mxu0 %v57
    %459 = vmatpush.msra.mxu0 %v51
    %460 = vmatpush.msra.mxu0 %v45
    %461 = vmatpush.msra.mxu0 %v39
    %462 = vmatmul.f32.gmra.mxu0 %v242
    %v463 = vpop.f32.mrf.mxu0
    %v464 = vadd.f32 %v233, %v463
    %465 = vdwg.mxu0
    %466 = vmatpush.msra.mxu0 %v225
    %467 = vmatpush.msra.mxu0 %v219
    %468 = vmatpush.msra.mxu0 %v213
    %469 = vmatpush.msra.mxu0 %v207
    %470 = vmatpush.msra.mxu0 %v201
    %471 = vmatpush.msra.mxu0 %v195
    %472 = vmatpush.msra.mxu0 %v189
    %473 = vmatpush.msra.mxu0 %v183
    %474 = vmatpush.msra.mxu0 %v177
    %475 = vmatpush.msra.mxu0 %v171
    %476 = vmatpush.msra.mxu0 %v165
    %477 = vmatpush.msra.mxu0 %v159
    %478 = vmatpush.msra.mxu0 %v153
    %479 = vmatpush.msra.mxu0 %v147
    %480 = vmatpush.msra.mxu0 %v141
    %481 = vmatpush.msra.mxu0 %v135
    %482 = vmatmul.f32.gmra.mxu0 %v243
    %v483 = vpop.f32.mrf.mxu0
    %v484 = vadd.f32 %v464, %v483
    %485 = vdwg.mxu0
    %v492 = vrot.slane %v324, 4
    %v493 = vrot.slane %v404, 4
    %v494 = vrot.slane %v484, 4
    %vm495 = vcmask 1043456
    %v496 = vsel %vm495, %v284, %v492
    %v497 = vsel %vm495, %v364, %v493
    %v498 = vsel %vm495, %v444, %v494
    %502 = vst [vmem:[#allocation2] sm:$0xff] %v496
    %503 = vst [vmem:[#allocation2 + $0x8] sm:$0xff] %v497
    %504 = vst [vmem:[#allocation2 + $0x10] sm:$0xff] %v498
    %v505 = vlaneseq
    %vm506 = vcmp.ge.s32.totalorder %v505, 0
    %vm507 = vcmp.lt.s32.totalorder %v505, 256
    %vm508 = vmand %vm506, %vm507
    %509 = vst.msk [vmem:[#allocation3] sm:$0x3] %vm508, 0.0
    %v510 = vld [vmem:[%s2] sm:$0xff]
    %v511 = vld [vmem:[%s2 + $0x8] sm:$0xff]
    %v512 = vld [vmem:[%s2 + $0x10] sm:$0xff]
    %v513 = vld [vmem:[%s2 + $0x18] sm:$0xff]
    %v514 = vld [vmem:[%s2 + $0x20] sm:$0xff]
    %v515 = vld [vmem:[%s2 + $0x28] sm:$0xff]
    %v516 = vld [vmem:[%s2 + $0x30] sm:$0xff]
    %v517 = vld [vmem:[%s2 + $0x38] sm:$0xff]
    %v518 = vld [vmem:[%s2 + $0x40] sm:$0xff]
    %v519 = vld [vmem:[%s2 + $0x48] sm:$0xff]
    %v520 = vld [vmem:[%s2 + $0x50] sm:$0xff]
    %v521 = vld [vmem:[%s2 + $0x58] sm:$0xff]
    %v522 = vld [vmem:[%s2 + $0x60] sm:$0xff]
    %v523 = vld [vmem:[%s2 + $0x68] sm:$0xff]
    %v524 = vld [vmem:[%s2 + $0x70] sm:$0xff]
    %v525 = vld [vmem:[%s2 + $0x78] sm:$0xff]
    %v526 = vld [vmem:[%s2 + $0x80] sm:$0xff]
    %v527 = vld [vmem:[%s2 + $0x88] sm:$0xff]
    %v528 = vld [vmem:[%s2 + $0x90] sm:$0xff]
    %v529 = vld [vmem:[%s2 + $0x98] sm:$0xff]
    %v530 = vld [vmem:[%s2 + $0xa0] sm:$0xff]
    %v531 = vld [vmem:[%s2 + $0xa8] sm:$0xff]
    %v532 = vld [vmem:[%s2 + $0xb0] sm:$0xff]
    %v533 = vld [vmem:[%s2 + $0xb8] sm:$0xff]
    %v534 = vld [vmem:[%s2 + $0xc0] sm:$0xff]
    %v535 = vld [vmem:[%s2 + $0xc8] sm:$0xff]
    %v536 = vld [vmem:[%s2 + $0xd0] sm:$0xff]
    %v537 = vld [vmem:[%s2 + $0xd8] sm:$0xff]
    %v538 = vld [vmem:[%s2 + $0xe0] sm:$0xff]
    %v539 = vld [vmem:[%s2 + $0xe8] sm:$0xff]
    %v540 = vld [vmem:[%s2 + $0xf0] sm:$0xff]
    %v541 = vld [vmem:[%s2 + $0xf8] sm:$0xff]
    %v542 = vld [vmem:[%s2 + $0x100] sm:$0xff]
    %v543 = vld [vmem:[%s2 + $0x108] sm:$0xff]
    %v544 = vld [vmem:[%s2 + $0x110] sm:$0xff]
    %v545 = vld [vmem:[%s2 + $0x118] sm:$0xff]
    %v546 = vld [vmem:[%s2 + $0x120] sm:$0xff]
    %v547 = vld [vmem:[%s2 + $0x128] sm:$0xff]
    %v548 = vld [vmem:[%s2 + $0x130] sm:$0xff]
    %v549 = vld [vmem:[%s2 + $0x138] sm:$0xff]
    %v550 = vld [vmem:[%s2 + $0x140] sm:$0xff]
    %v551 = vld [vmem:[%s2 + $0x148] sm:$0xff]
    %v552 = vld [vmem:[%s2 + $0x150] sm:$0xff]
    %v553 = vld [vmem:[%s2 + $0x158] sm:$0xff]
    %v554 = vld [vmem:[%s2 + $0x160] sm:$0xff]
    %v555 = vld [vmem:[%s2 + $0x168] sm:$0xff]
    %v556 = vld [vmem:[%s2 + $0x170] sm:$0xff]
    %v557 = vld [vmem:[%s2 + $0x178] sm:$0xff]
    %v558 = vld [vmem:[%s2 + $0x180] sm:$0xff]
    %v559 = vld [vmem:[%s2 + $0x188] sm:$0xff]
    %v560 = vld [vmem:[%s2 + $0x190] sm:$0xff]
    %v561 = vld [vmem:[%s2 + $0x198] sm:$0xff]
    %v562 = vld [vmem:[%s2 + $0x1a0] sm:$0xff]
    %v563 = vld [vmem:[%s2 + $0x1a8] sm:$0xff]
    %v564 = vld [vmem:[%s2 + $0x1b0] sm:$0xff]
    %v565 = vld [vmem:[%s2 + $0x1b8] sm:$0xff]
    %v566 = vld [vmem:[%s2 + $0x1c0] sm:$0xff]
    %v567 = vld [vmem:[%s2 + $0x1c8] sm:$0xff]
    %v568 = vld [vmem:[%s2 + $0x1d0] sm:$0xff]
    %v569 = vld [vmem:[%s2 + $0x1d8] sm:$0xff]
    %v570 = vld [vmem:[%s2 + $0x1e0] sm:$0xff]
    %v571 = vld [vmem:[%s2 + $0x1e8] sm:$0xff]
    %v572 = vld [vmem:[%s2 + $0x1f0] sm:$0xff]
    %v573 = vld [vmem:[%s2 + $0x1f8] sm:$0xff]
    %v574 = vld [vmem:[%s2 + $0x200] sm:$0xff]
    %v575 = vld [vmem:[%s2 + $0x208] sm:$0xff]
    %v576 = vld [vmem:[%s2 + $0x210] sm:$0xff]
    %v577 = vld [vmem:[%s2 + $0x218] sm:$0xff]
    %v578 = vld [vmem:[%s2 + $0x220] sm:$0xff]
    %v579 = vld [vmem:[%s2 + $0x228] sm:$0xff]
    %v580 = vld [vmem:[%s2 + $0x230] sm:$0xff]
    %v581 = vld [vmem:[%s2 + $0x238] sm:$0xff]
    %v582 = vld [vmem:[%s2 + $0x240] sm:$0xff]
    %v583 = vld [vmem:[%s2 + $0x248] sm:$0xff]
    %v584 = vld [vmem:[%s2 + $0x250] sm:$0xff]
    %v585 = vld [vmem:[%s2 + $0x258] sm:$0xff]
    %v586 = vld [vmem:[%s2 + $0x260] sm:$0xff]
    %v587 = vld [vmem:[%s2 + $0x268] sm:$0xff]
    %v588 = vld [vmem:[%s2 + $0x270] sm:$0xff]
    %v589 = vld [vmem:[%s2 + $0x278] sm:$0xff]
    %v590 = vld [vmem:[%s2 + $0x280] sm:$0xff]
    %v591 = vld [vmem:[%s2 + $0x288] sm:$0xff]
    %v592 = vld [vmem:[%s2 + $0x290] sm:$0xff]
    %v593 = vld [vmem:[%s2 + $0x298] sm:$0xff]
    %v594 = vld [vmem:[%s2 + $0x2a0] sm:$0xff]
    %v595 = vld [vmem:[%s2 + $0x2a8] sm:$0xff]
    %v596 = vld [vmem:[%s2 + $0x2b0] sm:$0xff]
    %v597 = vld [vmem:[%s2 + $0x2b8] sm:$0xff]
    %v598 = vld [vmem:[%s2 + $0x2c0] sm:$0xff]
    %v599 = vld [vmem:[%s2 + $0x2c8] sm:$0xff]
    %v600 = vld [vmem:[%s2 + $0x2d0] sm:$0xff]
    %v601 = vld [vmem:[%s2 + $0x2d8] sm:$0xff]
    %v602 = vld [vmem:[%s2 + $0x2e0] sm:$0xff]
    %v603 = vld [vmem:[%s2 + $0x2e8] sm:$0xff]
    %v604 = vld [vmem:[%s2 + $0x2f0] sm:$0xff]
    %v605 = vld [vmem:[%s2 + $0x2f8] sm:$0xff]
    %v606 = vld [vmem:[%s2 + $0x300] sm:$0xff]
    %v607 = vld [vmem:[%s2 + $0x308] sm:$0xff]
    %v608 = vld [vmem:[%s2 + $0x310] sm:$0xff]
    %v609 = vld [vmem:[%s2 + $0x318] sm:$0xff]
    %v610 = vld [vmem:[%s2 + $0x320] sm:$0xff]
    %v611 = vld [vmem:[%s2 + $0x328] sm:$0xff]
    %v612 = vld [vmem:[%s2 + $0x330] sm:$0xff]
    %v613 = vld [vmem:[%s2 + $0x338] sm:$0xff]
    %v614 = vld [vmem:[%s2 + $0x340] sm:$0xff]
    %v615 = vld [vmem:[%s2 + $0x348] sm:$0xff]
    %v616 = vld [vmem:[%s2 + $0x350] sm:$0xff]
    %v617 = vld [vmem:[%s2 + $0x358] sm:$0xff]
    %v618 = vld [vmem:[%s2 + $0x360] sm:$0xff]
    %v619 = vld [vmem:[%s2 + $0x368] sm:$0xff]
    %v620 = vld [vmem:[%s2 + $0x370] sm:$0xff]
    %v621 = vld [vmem:[%s2 + $0x378] sm:$0xff]
    %v622 = vld [vmem:[%s2 + $0x380] sm:$0xff]
    %v623 = vld [vmem:[%s2 + $0x388] sm:$0xff]
    %v624 = vld [vmem:[%s2 + $0x390] sm:$0xff]
    %v625 = vld [vmem:[%s2 + $0x398] sm:$0xff]
    %v626 = vld [vmem:[%s2 + $0x3a0] sm:$0xff]
    %v627 = vld [vmem:[%s2 + $0x3a8] sm:$0xff]
    %v628 = vld [vmem:[%s2 + $0x3b0] sm:$0xff]
    %v629 = vld [vmem:[%s2 + $0x3b8] sm:$0xff]
    %v630 = vld [vmem:[%s2 + $0x3c0] sm:$0xff]
    %v631 = vld [vmem:[%s2 + $0x3c8] sm:$0xff]
    %v632 = vld [vmem:[%s2 + $0x3d0] sm:$0xff]
    %v633 = vld [vmem:[%s2 + $0x3d8] sm:$0xff]
    %v634 = vld [vmem:[%s2 + $0x3e0] sm:$0xff]
    %v635 = vld [vmem:[%s2 + $0x3e8] sm:$0xff]
    %v636 = vld [vmem:[%s2 + $0x3f0] sm:$0xff]
    %v637 = vld [vmem:[%s2 + $0x3f8] sm:$0xff]
    %v638 = vld [vmem:[%s2 + $0x400] sm:$0xff]
    %v639 = vld [vmem:[%s2 + $0x408] sm:$0xff]
    %v640 = vld [vmem:[%s2 + $0x410] sm:$0xff]
    %v641 = vld [vmem:[%s2 + $0x418] sm:$0xff]
    %v642 = vld [vmem:[%s2 + $0x420] sm:$0xff]
    %v643 = vld [vmem:[%s2 + $0x428] sm:$0xff]
    %v644 = vld [vmem:[%s2 + $0x430] sm:$0xff]
    %v645 = vld [vmem:[%s2 + $0x438] sm:$0xff]
    %v646 = vld [vmem:[%s2 + $0x440] sm:$0xff]
    %v647 = vld [vmem:[%s2 + $0x448] sm:$0xff]
    %v648 = vld [vmem:[%s2 + $0x450] sm:$0xff]
    %v649 = vld [vmem:[%s2 + $0x458] sm:$0xff]
    %v650 = vld [vmem:[%s2 + $0x460] sm:$0xff]
    %v651 = vld [vmem:[%s2 + $0x468] sm:$0xff]
    %v652 = vld [vmem:[%s2 + $0x470] sm:$0xff]
    %v653 = vld [vmem:[%s2 + $0x478] sm:$0xff]
    %v654 = vld [vmem:[%s2 + $0x480] sm:$0xff]
    %v655 = vld [vmem:[%s2 + $0x488] sm:$0xff]
    %v656 = vld [vmem:[%s2 + $0x490] sm:$0xff]
    %v657 = vld [vmem:[%s2 + $0x498] sm:$0xff]
    %v658 = vld [vmem:[%s2 + $0x4a0] sm:$0xff]
    %v659 = vld [vmem:[%s2 + $0x4a8] sm:$0xff]
    %v660 = vld [vmem:[%s2 + $0x4b0] sm:$0xff]
    %v661 = vld [vmem:[%s2 + $0x4b8] sm:$0xff]
    %v662 = vld [vmem:[%s2 + $0x4c0] sm:$0xff]
    %v663 = vld [vmem:[%s2 + $0x4c8] sm:$0xff]
    %v664 = vld [vmem:[%s2 + $0x4d0] sm:$0xff]
    %v665 = vld [vmem:[%s2 + $0x4d8] sm:$0xff]
    %v666 = vld [vmem:[%s2 + $0x4e0] sm:$0xff]
    %v667 = vld [vmem:[%s2 + $0x4e8] sm:$0xff]
    %v668 = vld [vmem:[%s2 + $0x4f0] sm:$0xff]
    %v669 = vld [vmem:[%s2 + $0x4f8] sm:$0xff]
    %v670 = vld [vmem:[%s2 + $0x500] sm:$0xff]
    %v671 = vld [vmem:[%s2 + $0x508] sm:$0xff]
    %v672 = vld [vmem:[%s2 + $0x510] sm:$0xff]
    %v673 = vld [vmem:[%s2 + $0x518] sm:$0xff]
    %v674 = vld [vmem:[%s2 + $0x520] sm:$0xff]
    %v675 = vld [vmem:[%s2 + $0x528] sm:$0xff]
    %v676 = vld [vmem:[%s2 + $0x530] sm:$0xff]
    %v677 = vld [vmem:[%s2 + $0x538] sm:$0xff]
    %v678 = vld [vmem:[%s2 + $0x540] sm:$0xff]
    %v679 = vld [vmem:[%s2 + $0x548] sm:$0xff]
    %v680 = vld [vmem:[%s2 + $0x550] sm:$0xff]
    %v681 = vld [vmem:[%s2 + $0x558] sm:$0xff]
    %v682 = vld [vmem:[%s2 + $0x560] sm:$0xff]
    %v683 = vld [vmem:[%s2 + $0x568] sm:$0xff]
    %v684 = vld [vmem:[%s2 + $0x570] sm:$0xff]
    %v685 = vld [vmem:[%s2 + $0x578] sm:$0xff]
    %v686 = vld [vmem:[%s2 + $0x580] sm:$0xff]
    %v687 = vld [vmem:[%s2 + $0x588] sm:$0xff]
    %v688 = vld [vmem:[%s2 + $0x590] sm:$0xff]
    %v689 = vld [vmem:[%s2 + $0x598] sm:$0xff]
    %v690 = vld [vmem:[%s2 + $0x5a0] sm:$0xff]
    %v691 = vld [vmem:[%s2 + $0x5a8] sm:$0xff]
    %v692 = vld [vmem:[%s2 + $0x5b0] sm:$0xff]
    %v693 = vld [vmem:[%s2 + $0x5b8] sm:$0xff]
    %v694 = vld [vmem:[%s2 + $0x5c0] sm:$0xff]
    %v695 = vld [vmem:[%s2 + $0x5c8] sm:$0xff]
    %v696 = vld [vmem:[%s2 + $0x5d0] sm:$0xff]
    %v697 = vld [vmem:[%s2 + $0x5d8] sm:$0xff]
    %v698 = vld [vmem:[%s2 + $0x5e0] sm:$0xff]
    %v699 = vld [vmem:[%s2 + $0x5e8] sm:$0xff]
    %v700 = vld [vmem:[%s2 + $0x5f0] sm:$0xff]
    %v701 = vld [vmem:[%s2 + $0x5f8] sm:$0xff]
    %v702 = vld [vmem:[%s4] sm:$0x3f]
    %v703 = vld [vmem:[#allocation2] ss:$4 sm:$0x3f]
    %v704 = vld [vmem:[#allocation3] sm:$0x3]
    %v706 = vperm.slane %v704, 0
    %v707 = vperm.slane %v704, 1
    %v711 = vperm.slane %v702, 0
    %v712 = vperm.slane %v702, 1
    %v713 = vperm.slane %v702, 2
    %v714 = vperm.slane %v702, 3
    %v715 = vperm.slane %v702, 4
    %v716 = vperm.slane %v702, 5
    %723 = vmatpush.msra.mxu0 %v600
    %724 = vmatpush.msra.mxu0 %v594
    %725 = vmatpush.msra.mxu0 %v588
    %726 = vmatpush.msra.mxu0 %v582
    %727 = vmatpush.msra.mxu0 %v576
    %728 = vmatpush.msra.mxu0 %v570
    %729 = vmatpush.msra.mxu0 %v564
    %730 = vmatpush.msra.mxu0 %v558
    %731 = vmatpush.msra.mxu0 %v552
    %732 = vmatpush.msra.mxu0 %v546
    %733 = vmatpush.msra.mxu0 %v540
    %734 = vmatpush.msra.mxu0 %v534
    %735 = vmatpush.msra.mxu0 %v528
    %736 = vmatpush.msra.mxu0 %v522
    %737 = vmatpush.msra.mxu0 %v516
    %738 = vmatpush.msra.mxu0 %v510
    %739 = vmatmul.f32.gmra.mxu0 %v706
    %v740 = vpop.f32.mrf.mxu0
    %v741 = vadd.f32 %v711, %v740
    %742 = vdwg.mxu0
    %743 = vmatpush.msra.mxu0 %v696
    %744 = vmatpush.msra.mxu0 %v690
    %745 = vmatpush.msra.mxu0 %v684
    %746 = vmatpush.msra.mxu0 %v678
    %747 = vmatpush.msra.mxu0 %v672
    %748 = vmatpush.msra.mxu0 %v666
    %749 = vmatpush.msra.mxu0 %v660
    %750 = vmatpush.msra.mxu0 %v654
    %751 = vmatpush.msra.mxu0 %v648
    %752 = vmatpush.msra.mxu0 %v642
    %753 = vmatpush.msra.mxu0 %v636
    %754 = vmatpush.msra.mxu0 %v630
    %755 = vmatpush.msra.mxu0 %v624
    %756 = vmatpush.msra.mxu0 %v618
    %757 = vmatpush.msra.mxu0 %v612
    %758 = vmatpush.msra.mxu0 %v606
    %759 = vmatmul.f32.gmra.mxu0 %v707
    %v760 = vpop.f32.mrf.mxu0
    %v761 = vadd.f32 %v741, %v760
    %762 = vdwg.mxu0
    %763 = vmatpush.msra.mxu0 %v601
    %764 = vmatpush.msra.mxu0 %v595
    %765 = vmatpush.msra.mxu0 %v589
    %766 = vmatpush.msra.mxu0 %v583
    %767 = vmatpush.msra.mxu0 %v577
    %768 = vmatpush.msra.mxu0 %v571
    %769 = vmatpush.msra.mxu0 %v565
    %770 = vmatpush.msra.mxu0 %v559
    %771 = vmatpush.msra.mxu0 %v553
    %772 = vmatpush.msra.mxu0 %v547
    %773 = vmatpush.msra.mxu0 %v541
    %774 = vmatpush.msra.mxu0 %v535
    %775 = vmatpush.msra.mxu0 %v529
    %776 = vmatpush.msra.mxu0 %v523
    %777 = vmatpush.msra.mxu0 %v517
    %778 = vmatpush.msra.mxu0 %v511
    %779 = vmatmul.f32.gmra.mxu0 %v706
    %v780 = vpop.f32.mrf.mxu0
    %v781 = vadd.f32 %v712, %v780
    %782 = vdwg.mxu0
    %783 = vmatpush.msra.mxu0 %v697
    %784 = vmatpush.msra.mxu0 %v691
    %785 = vmatpush.msra.mxu0 %v685
    %786 = vmatpush.msra.mxu0 %v679
    %787 = vmatpush.msra.mxu0 %v673
    %788 = vmatpush.msra.mxu0 %v667
    %789 = vmatpush.msra.mxu0 %v661
    %790 = vmatpush.msra.mxu0 %v655
    %791 = vmatpush.msra.mxu0 %v649
    %792 = vmatpush.msra.mxu0 %v643
    %793 = vmatpush.msra.mxu0 %v637
    %794 = vmatpush.msra.mxu0 %v631
    %795 = vmatpush.msra.mxu0 %v625
    %796 = vmatpush.msra.mxu0 %v619
    %797 = vmatpush.msra.mxu0 %v613
    %798 = vmatpush.msra.mxu0 %v607
    %799 = vmatmul.f32.gmra.mxu0 %v707
    %v800 = vpop.f32.mrf.mxu0
    %v801 = vadd.f32 %v781, %v800
    %802 = vdwg.mxu0
    %803 = vmatpush.msra.mxu0 %v602
    %804 = vmatpush.msra.mxu0 %v596
    %805 = vmatpush.msra.mxu0 %v590
    %806 = vmatpush.msra.mxu0 %v584
    %807 = vmatpush.msra.mxu0 %v578
    %808 = vmatpush.msra.mxu0 %v572
    %809 = vmatpush.msra.mxu0 %v566
    %810 = vmatpush.msra.mxu0 %v560
    %811 = vmatpush.msra.mxu0 %v554
    %812 = vmatpush.msra.mxu0 %v548
    %813 = vmatpush.msra.mxu0 %v542
    %814 = vmatpush.msra.mxu0 %v536
    %815 = vmatpush.msra.mxu0 %v530
    %816 = vmatpush.msra.mxu0 %v524
    %817 = vmatpush.msra.mxu0 %v518
    %818 = vmatpush.msra.mxu0 %v512
    %819 = vmatmul.f32.gmra.mxu0 %v706
    %v820 = vpop.f32.mrf.mxu0
    %v821 = vadd.f32 %v713, %v820
    %822 = vdwg.mxu0
    %823 = vmatpush.msra.mxu0 %v698
    %824 = vmatpush.msra.mxu0 %v692
    %825 = vmatpush.msra.mxu0 %v686
    %826 = vmatpush.msra.mxu0 %v680
    %827 = vmatpush.msra.mxu0 %v674
    %828 = vmatpush.msra.mxu0 %v668
    %829 = vmatpush.msra.mxu0 %v662
    %830 = vmatpush.msra.mxu0 %v656
    %831 = vmatpush.msra.mxu0 %v650
    %832 = vmatpush.msra.mxu0 %v644
    %833 = vmatpush.msra.mxu0 %v638
    %834 = vmatpush.msra.mxu0 %v632
    %835 = vmatpush.msra.mxu0 %v626
    %836 = vmatpush.msra.mxu0 %v620
    %837 = vmatpush.msra.mxu0 %v614
    %838 = vmatpush.msra.mxu0 %v608
    %839 = vmatmul.f32.gmra.mxu0 %v707
    %v840 = vpop.f32.mrf.mxu0
    %v841 = vadd.f32 %v821, %v840
    %842 = vdwg.mxu0
    %843 = vmatpush.msra.mxu0 %v603
    %844 = vmatpush.msra.mxu0 %v597
    %845 = vmatpush.msra.mxu0 %v591
    %846 = vmatpush.msra.mxu0 %v585
    %847 = vmatpush.msra.mxu0 %v579
    %848 = vmatpush.msra.mxu0 %v573
    %849 = vmatpush.msra.mxu0 %v567
    %850 = vmatpush.msra.mxu0 %v561
    %851 = vmatpush.msra.mxu0 %v555
    %852 = vmatpush.msra.mxu0 %v549
    %853 = vmatpush.msra.mxu0 %v543
    %854 = vmatpush.msra.mxu0 %v537
    %855 = vmatpush.msra.mxu0 %v531
    %856 = vmatpush.msra.mxu0 %v525
    %857 = vmatpush.msra.mxu0 %v519
    %858 = vmatpush.msra.mxu0 %v513
    %859 = vmatmul.f32.gmra.mxu0 %v706
    %v860 = vpop.f32.mrf.mxu0
    %v861 = vadd.f32 %v714, %v860
    %862 = vdwg.mxu0
    %863 = vmatpush.msra.mxu0 %v699
    %864 = vmatpush.msra.mxu0 %v693
    %865 = vmatpush.msra.mxu0 %v687
    %866 = vmatpush.msra.mxu0 %v681
    %867 = vmatpush.msra.mxu0 %v675
    %868 = vmatpush.msra.mxu0 %v669
    %869 = vmatpush.msra.mxu0 %v663
    %870 = vmatpush.msra.mxu0 %v657
    %871 = vmatpush.msra.mxu0 %v651
    %872 = vmatpush.msra.mxu0 %v645
    %873 = vmatpush.msra.mxu0 %v639
    %874 = vmatpush.msra.mxu0 %v633
    %875 = vmatpush.msra.mxu0 %v627
    %876 = vmatpush.msra.mxu0 %v621
    %877 = vmatpush.msra.mxu0 %v615
    %878 = vmatpush.msra.mxu0 %v609
    %879 = vmatmul.f32.gmra.mxu0 %v707
    %v880 = vpop.f32.mrf.mxu0
    %v881 = vadd.f32 %v861, %v880
    %882 = vdwg.mxu0
    %883 = vmatpush.msra.mxu0 %v604
    %884 = vmatpush.msra.mxu0 %v598
    %885 = vmatpush.msra.mxu0 %v592
    %886 = vmatpush.msra.mxu0 %v586
    %887 = vmatpush.msra.mxu0 %v580
    %888 = vmatpush.msra.mxu0 %v574
    %889 = vmatpush.msra.mxu0 %v568
    %890 = vmatpush.msra.mxu0 %v562
    %891 = vmatpush.msra.mxu0 %v556
    %892 = vmatpush.msra.mxu0 %v550
    %893 = vmatpush.msra.mxu0 %v544
    %894 = vmatpush.msra.mxu0 %v538
    %895 = vmatpush.msra.mxu0 %v532
    %896 = vmatpush.msra.mxu0 %v526
    %897 = vmatpush.msra.mxu0 %v520
    %898 = vmatpush.msra.mxu0 %v514
    %899 = vmatmul.f32.gmra.mxu0 %v706
    %v900 = vpop.f32.mrf.mxu0
    %v901 = vadd.f32 %v715, %v900
    %902 = vdwg.mxu0
    %903 = vmatpush.msra.mxu0 %v700
    %904 = vmatpush.msra.mxu0 %v694
    %905 = vmatpush.msra.mxu0 %v688
    %906 = vmatpush.msra.mxu0 %v682
    %907 = vmatpush.msra.mxu0 %v676
    %908 = vmatpush.msra.mxu0 %v670
    %909 = vmatpush.msra.mxu0 %v664
    %910 = vmatpush.msra.mxu0 %v658
    %911 = vmatpush.msra.mxu0 %v652
    %912 = vmatpush.msra.mxu0 %v646
    %913 = vmatpush.msra.mxu0 %v640
    %914 = vmatpush.msra.mxu0 %v634
    %915 = vmatpush.msra.mxu0 %v628
    %916 = vmatpush.msra.mxu0 %v622
    %917 = vmatpush.msra.mxu0 %v616
    %918 = vmatpush.msra.mxu0 %v610
    %919 = vmatmul.f32.gmra.mxu0 %v707
    %v920 = vpop.f32.mrf.mxu0
    %v921 = vadd.f32 %v901, %v920
    %922 = vdwg.mxu0
    %923 = vmatpush.msra.mxu0 %v605
    %924 = vmatpush.msra.mxu0 %v599
    %925 = vmatpush.msra.mxu0 %v593
    %926 = vmatpush.msra.mxu0 %v587
    %927 = vmatpush.msra.mxu0 %v581
    %928 = vmatpush.msra.mxu0 %v575
    %929 = vmatpush.msra.mxu0 %v569
    %930 = vmatpush.msra.mxu0 %v563
    %931 = vmatpush.msra.mxu0 %v557
    %932 = vmatpush.msra.mxu0 %v551
    %933 = vmatpush.msra.mxu0 %v545
    %934 = vmatpush.msra.mxu0 %v539
    %935 = vmatpush.msra.mxu0 %v533
    %936 = vmatpush.msra.mxu0 %v527
    %937 = vmatpush.msra.mxu0 %v521
    %938 = vmatpush.msra.mxu0 %v515
    %939 = vmatmul.f32.gmra.mxu0 %v706
    %v940 = vpop.f32.mrf.mxu0
    %v941 = vadd.f32 %v716, %v940
    %942 = vdwg.mxu0
    %943 = vmatpush.msra.mxu0 %v701
    %944 = vmatpush.msra.mxu0 %v695
    %945 = vmatpush.msra.mxu0 %v689
    %946 = vmatpush.msra.mxu0 %v683
    %947 = vmatpush.msra.mxu0 %v677
    %948 = vmatpush.msra.mxu0 %v671
    %949 = vmatpush.msra.mxu0 %v665
    %950 = vmatpush.msra.mxu0 %v659
    %951 = vmatpush.msra.mxu0 %v653
    %952 = vmatpush.msra.mxu0 %v647
    %953 = vmatpush.msra.mxu0 %v641
    %954 = vmatpush.msra.mxu0 %v635
    %955 = vmatpush.msra.mxu0 %v629
    %956 = vmatpush.msra.mxu0 %v623
    %957 = vmatpush.msra.mxu0 %v617
    %958 = vmatpush.msra.mxu0 %v611
    %959 = vmatmul.f32.gmra.mxu0 %v707
    %v960 = vpop.f32.mrf.mxu0
    %v961 = vadd.f32 %v941, %v960
    %962 = vdwg.mxu0
    %v965 = vrot.slane %v801, 7
    %vm966 = vcmask 1040384
    %v967 = vsel %vm966, %v761, %v965
    %v969 = vadd.f32 %v703, %v967
    %v970 = vxor.u32 %v969, 2147483648
    %v971 = vmul.f32 %v970, 1.442695
    %v972 = vpow.pop %v971
    %v973 = vadd.f32 %v972, 1.0
    %v974 = vrcp.pop %v973
    %v975 = vmul.f32 %v973, %v974
    %v976 = vsub.f32 1.0, %v975
    %v977 = vmul.f32 %v974, %v976
    %v978 = vadd.f32 %v974, %v977
    %vm979 = vweird.f32 %v973
    %vm980 = vweird.f32 %v974
    %vm981 = vmor %vm979, %vm980
    %v982 = vsel %vm981, %v974, %v978
    %v983 = vand.u32 2147483647, %v973
    %vm984 = vcmp.eq.f32.partialorder %v983, 8.507059e+37
    %v985 = vand.u32 %v973, 2147483648
    %v986 = vor.u32 1.1754944e-38, %v985
    %v987 = vsel %vm984, %v986, %v982
    %v988 = vmul.f32 1.0, %v987
    %v990 = vrot.slane %v703, 2
    %v994 = vrot.slane %v881, 7
    %v995 = vsel %vm966, %v841, %v994
    %v997 = vadd.f32 %v990, %v995
    %v998 = vxor.u32 %v997, 2147483648
    %v999 = vmul.f32 %v998, 1.442695
    %v1000 = vpow.pop %v999
    %v1001 = vadd.f32 %v1000, 1.0
    %v1002 = vrcp.pop %v1001
    %v1003 = vmul.f32 %v1001, %v1002
    %v1004 = vsub.f32 1.0, %v1003
    %v1005 = vmul.f32 %v1002, %v1004
    %v1006 = vadd.f32 %v1002, %v1005
    %vm1007 = vweird.f32 %v1001
    %vm1008 = vweird.f32 %v1002
    %vm1009 = vmor %vm1007, %vm1008
    %v1010 = vsel %vm1009, %v1002, %v1006
    %v1011 = vand.u32 2147483647, %v1001
    %vm1012 = vcmp.eq.f32.partialorder %v1011, 8.507059e+37
    %v1013 = vand.u32 %v1001, 2147483648
    %v1014 = vor.u32 1.1754944e-38, %v1013
    %v1015 = vsel %vm1012, %v1014, %v1010
    %v1016 = vmul.f32 1.0, %v1015
    %v1019 = vrot.slane %v961, 7
    %v1020 = vsel %vm966, %v921, %v1019
    %v1022 = vmul.f32 %v988, %v1020
    %v1023 = vrot.slane %v703, 4
    %v1025 = vadd.f32 %v1023, %v1022
    %v1026 = vtanh.pop %v1025
    %v1027 = vsub.f32 1.0, %v1016
    %v1028 = vmul.f32 %v1027, %v1026
    %v1029 = vmul.f32 %v1016, %v704
    %v1030 = vadd.f32 %v1028, %v1029
    %1031 = vst.msk [vmem:[#allocation3] sm:$0x3] %vm508, %v1030
    %1032 = vst.msk [vmem:[#allocation4] ss:$4 sm:$0x3] %vm508, %v1030
    %s1033 = scalar_lea.vmem [#allocation2], 1
    %v1034 = vld [vmem:[%s1033] ss:$4 sm:$0x3f]
    %v1035 = vld [vmem:[#allocation3] sm:$0x3]
    %v1037 = vperm.slane %v1035, 0
    %v1038 = vperm.slane %v1035, 1
    %1041 = vmatpush.msra.mxu0 %v600
    %1042 = vmatpush.msra.mxu0 %v594
    %1043 = vmatpush.msra.mxu0 %v588
    %1044 = vmatpush.msra.mxu0 %v582
    %1045 = vmatpush.msra.mxu0 %v576
    %1046 = vmatpush.msra.mxu0 %v570
    %1047 = vmatpush.msra.mxu0 %v564
    %1048 = vmatpush.msra.mxu0 %v558
    %1049 = vmatpush.msra.mxu0 %v552
    %1050 = vmatpush.msra.mxu0 %v546
    %1051 = vmatpush.msra.mxu0 %v540
    %1052 = vmatpush.msra.mxu0 %v534
    %1053 = vmatpush.msra.mxu0 %v528
    %1054 = vmatpush.msra.mxu0 %v522
    %1055 = vmatpush.msra.mxu0 %v516
    %1056 = vmatpush.msra.mxu0 %v510
    %1057 = vmatmul.f32.gmra.mxu0 %v1037
    %v1058 = vpop.f32.mrf.mxu0
    %v1059 = vadd.f32 %v711, %v1058
    %1060 = vdwg.mxu0
    %1061 = vmatpush.msra.mxu0 %v696
    %1062 = vmatpush.msra.mxu0 %v690
    %1063 = vmatpush.msra.mxu0 %v684
    %1064 = vmatpush.msra.mxu0 %v678
    %1065 = vmatpush.msra.mxu0 %v672
    %1066 = vmatpush.msra.mxu0 %v666
    %1067 = vmatpush.msra.mxu0 %v660
    %1068 = vmatpush.msra.mxu0 %v654
    %1069 = vmatpush.msra.mxu0 %v648
    %1070 = vmatpush.msra.mxu0 %v642
    %1071 = vmatpush.msra.mxu0 %v636
    %1072 = vmatpush.msra.mxu0 %v630
    %1073 = vmatpush.msra.mxu0 %v624
    %1074 = vmatpush.msra.mxu0 %v618
    %1075 = vmatpush.msra.mxu0 %v612
    %1076 = vmatpush.msra.mxu0 %v606
    %1077 = vmatmul.f32.gmra.mxu0 %v1038
    %v1078 = vpop.f32.mrf.mxu0
    %v1079 = vadd.f32 %v1059, %v1078
    %1080 = vdwg.mxu0
    %1081 = vmatpush.msra.mxu0 %v601
    %1082 = vmatpush.msra.mxu0 %v595
    %1083 = vmatpush.msra.mxu0 %v589
    %1084 = vmatpush.msra.mxu0 %v583
    %1085 = vmatpush.msra.mxu0 %v577
    %1086 = vmatpush.msra.mxu0 %v571
    %1087 = vmatpush.msra.mxu0 %v565
    %1088 = vmatpush.msra.mxu0 %v559
    %1089 = vmatpush.msra.mxu0 %v553
    %1090 = vmatpush.msra.mxu0 %v547
    %1091 = vmatpush.msra.mxu0 %v541
    %1092 = vmatpush.msra.mxu0 %v535
    %1093 = vmatpush.msra.mxu0 %v529
    %1094 = vmatpush.msra.mxu0 %v523
    %1095 = vmatpush.msra.mxu0 %v517
    %1096 = vmatpush.msra.mxu0 %v511
    %1097 = vmatmul.f32.gmra.mxu0 %v1037
    %v1098 = vpop.f32.mrf.mxu0
    %v1099 = vadd.f32 %v712, %v1098
    %1100 = vdwg.mxu0
    %1101 = vmatpush.msra.mxu0 %v697
    %1102 = vmatpush.msra.mxu0 %v691
    %1103 = vmatpush.msra.mxu0 %v685
    %1104 = vmatpush.msra.mxu0 %v679
    %1105 = vmatpush.msra.mxu0 %v673
    %1106 = vmatpush.msra.mxu0 %v667
    %1107 = vmatpush.msra.mxu0 %v661
    %1108 = vmatpush.msra.mxu0 %v655
    %1109 = vmatpush.msra.mxu0 %v649
    %1110 = vmatpush.msra.mxu0 %v643
    %1111 = vmatpush.msra.mxu0 %v637
    %1112 = vmatpush.msra.mxu0 %v631
    %1113 = vmatpush.msra.mxu0 %v625
    %1114 = vmatpush.msra.mxu0 %v619
    %1115 = vmatpush.msra.mxu0 %v613
    %1116 = vmatpush.msra.mxu0 %v607
    %1117 = vmatmul.f32.gmra.mxu0 %v1038
    %v1118 = vpop.f32.mrf.mxu0
    %v1119 = vadd.f32 %v1099, %v1118
    %1120 = vdwg.mxu0
    %1121 = vmatpush.msra.mxu0 %v602
    %1122 = vmatpush.msra.mxu0 %v596
    %1123 = vmatpush.msra.mxu0 %v590
    %1124 = vmatpush.msra.mxu0 %v584
    %1125 = vmatpush.msra.mxu0 %v578
    %1126 = vmatpush.msra.mxu0 %v572
    %1127 = vmatpush.msra.mxu0 %v566
    %1128 = vmatpush.msra.mxu0 %v560
    %1129 = vmatpush.msra.mxu0 %v554
    %1130 = vmatpush.msra.mxu0 %v548
    %1131 = vmatpush.msra.mxu0 %v542
    %1132 = vmatpush.msra.mxu0 %v536
    %1133 = vmatpush.msra.mxu0 %v530
    %1134 = vmatpush.msra.mxu0 %v524
    %1135 = vmatpush.msra.mxu0 %v518
    %1136 = vmatpush.msra.mxu0 %v512
    %1137 = vmatmul.f32.gmra.mxu0 %v1037
    %v1138 = vpop.f32.mrf.mxu0
    %v1139 = vadd.f32 %v713, %v1138
    %1140 = vdwg.mxu0
    %1141 = vmatpush.msra.mxu0 %v698
    %1142 = vmatpush.msra.mxu0 %v692
    %1143 = vmatpush.msra.mxu0 %v686
    %1144 = vmatpush.msra.mxu0 %v680
    %1145 = vmatpush.msra.mxu0 %v674
    %1146 = vmatpush.msra.mxu0 %v668
    %1147 = vmatpush.msra.mxu0 %v662
    %1148 = vmatpush.msra.mxu0 %v656
    %1149 = vmatpush.msra.mxu0 %v650
    %1150 = vmatpush.msra.mxu0 %v644
    %1151 = vmatpush.msra.mxu0 %v638
    %1152 = vmatpush.msra.mxu0 %v632
    %1153 = vmatpush.msra.mxu0 %v626
    %1154 = vmatpush.msra.mxu0 %v620
    %1155 = vmatpush.msra.mxu0 %v614
    %1156 = vmatpush.msra.mxu0 %v608
    %1157 = vmatmul.f32.gmra.mxu0 %v1038
    %v1158 = vpop.f32.mrf.mxu0
    %v1159 = vadd.f32 %v1139, %v1158
    %1160 = vdwg.mxu0
    %1161 = vmatpush.msra.mxu0 %v603
    %1162 = vmatpush.msra.mxu0 %v597
    %1163 = vmatpush.msra.mxu0 %v591
    %1164 = vmatpush.msra.mxu0 %v585
    %1165 = vmatpush.msra.mxu0 %v579
    %1166 = vmatpush.msra.mxu0 %v573
    %1167 = vmatpush.msra.mxu0 %v567
    %1168 = vmatpush.msra.mxu0 %v561
    %1169 = vmatpush.msra.mxu0 %v555
    %1170 = vmatpush.msra.mxu0 %v549
    %1171 = vmatpush.msra.mxu0 %v543
    %1172 = vmatpush.msra.mxu0 %v537
    %1173 = vmatpush.msra.mxu0 %v531
    %1174 = vmatpush.msra.mxu0 %v525
    %1175 = vmatpush.msra.mxu0 %v519
    %1176 = vmatpush.msra.mxu0 %v513
    %1177 = vmatmul.f32.gmra.mxu0 %v1037
    %v1178 = vpop.f32.mrf.mxu0
    %v1179 = vadd.f32 %v714, %v1178
    %1180 = vdwg.mxu0
    %1181 = vmatpush.msra.mxu0 %v699
    %1182 = vmatpush.msra.mxu0 %v693
    %1183 = vmatpush.msra.mxu0 %v687
    %1184 = vmatpush.msra.mxu0 %v681
    %1185 = vmatpush.msra.mxu0 %v675
    %1186 = vmatpush.msra.mxu0 %v669
    %1187 = vmatpush.msra.mxu0 %v663
    %1188 = vmatpush.msra.mxu0 %v657
    %1189 = vmatpush.msra.mxu0 %v651
    %1190 = vmatpush.msra.mxu0 %v645
    %1191 = vmatpush.msra.mxu0 %v639
    %1192 = vmatpush.msra.mxu0 %v633
    %1193 = vmatpush.msra.mxu0 %v627
    %1194 = vmatpush.msra.mxu0 %v621
    %1195 = vmatpush.msra.mxu0 %v615
    %1196 = vmatpush.msra.mxu0 %v609
    %1197 = vmatmul.f32.gmra.mxu0 %v1038
    %v1198 = vpop.f32.mrf.mxu0
    %v1199 = vadd.f32 %v1179, %v1198
    %1200 = vdwg.mxu0
    %1201 = vmatpush.msra.mxu0 %v604
    %1202 = vmatpush.msra.mxu0 %v598
    %1203 = vmatpush.msra.mxu0 %v592
    %1204 = vmatpush.msra.mxu0 %v586
    %1205 = vmatpush.msra.mxu0 %v580
    %1206 = vmatpush.msra.mxu0 %v574
    %1207 = vmatpush.msra.mxu0 %v568
    %1208 = vmatpush.msra.mxu0 %v562
    %1209 = vmatpush.msra.mxu0 %v556
    %1210 = vmatpush.msra.mxu0 %v550
    %1211 = vmatpush.msra.mxu0 %v544
    %1212 = vmatpush.msra.mxu0 %v538
    %1213 = vmatpush.msra.mxu0 %v532
    %1214 = vmatpush.msra.mxu0 %v526
    %1215 = vmatpush.msra.mxu0 %v520
    %1216 = vmatpush.msra.mxu0 %v514
    %1217 = vmatmul.f32.gmra.mxu0 %v1037
    %v1218 = vpop.f32.mrf.mxu0
    %v1219 = vadd.f32 %v715, %v1218
    %1220 = vdwg.mxu0
    %1221 = vmatpush.msra.mxu0 %v700
    %1222 = vmatpush.msra.mxu0 %v694
    %1223 = vmatpush.msra.mxu0 %v688
    %1224 = vmatpush.msra.mxu0 %v682
    %1225 = vmatpush.msra.mxu0 %v676
    %1226 = vmatpush.msra.mxu0 %v670
    %1227 = vmatpush.msra.mxu0 %v664
    %1228 = vmatpush.msra.mxu0 %v658
    %1229 = vmatpush.msra.mxu0 %v652
    %1230 = vmatpush.msra.mxu0 %v646
    %1231 = vmatpush.msra.mxu0 %v640
    %1232 = vmatpush.msra.mxu0 %v634
    %1233 = vmatpush.msra.mxu0 %v628
    %1234 = vmatpush.msra.mxu0 %v622
    %1235 = vmatpush.msra.mxu0 %v616
    %1236 = vmatpush.msra.mxu0 %v610
    %1237 = vmatmul.f32.gmra.mxu0 %v1038
    %v1238 = vpop.f32.mrf.mxu0
    %v1239 = vadd.f32 %v1219, %v1238
    %1240 = vdwg.mxu0
    %1241 = vmatpush.msra.mxu0 %v605
    %1242 = vmatpush.msra.mxu0 %v599
    %1243 = vmatpush.msra.mxu0 %v593
    %1244 = vmatpush.msra.mxu0 %v587
    %1245 = vmatpush.msra.mxu0 %v581
    %1246 = vmatpush.msra.mxu0 %v575
    %1247 = vmatpush.msra.mxu0 %v569
    %1248 = vmatpush.msra.mxu0 %v563
    %1249 = vmatpush.msra.mxu0 %v557
    %1250 = vmatpush.msra.mxu0 %v551
    %1251 = vmatpush.msra.mxu0 %v545
    %1252 = vmatpush.msra.mxu0 %v539
    %1253 = vmatpush.msra.mxu0 %v533
    %1254 = vmatpush.msra.mxu0 %v527
    %1255 = vmatpush.msra.mxu0 %v521
    %1256 = vmatpush.msra.mxu0 %v515
    %1257 = vmatmul.f32.gmra.mxu0 %v1037
    %v1258 = vpop.f32.mrf.mxu0
    %v1259 = vadd.f32 %v716, %v1258
    %1260 = vdwg.mxu0
    %1261 = vmatpush.msra.mxu0 %v701
    %1262 = vmatpush.msra.mxu0 %v695
    %1263 = vmatpush.msra.mxu0 %v689
    %1264 = vmatpush.msra.mxu0 %v683
    %1265 = vmatpush.msra.mxu0 %v677
    %1266 = vmatpush.msra.mxu0 %v671
    %1267 = vmatpush.msra.mxu0 %v665
    %1268 = vmatpush.msra.mxu0 %v659
    %1269 = vmatpush.msra.mxu0 %v653
    %1270 = vmatpush.msra.mxu0 %v647
    %1271 = vmatpush.msra.mxu0 %v641
    %1272 = vmatpush.msra.mxu0 %v635
    %1273 = vmatpush.msra.mxu0 %v629
    %1274 = vmatpush.msra.mxu0 %v623
    %1275 = vmatpush.msra.mxu0 %v617
    %1276 = vmatpush.msra.mxu0 %v611
    %1277 = vmatmul.f32.gmra.mxu0 %v1038
    %v1278 = vpop.f32.mrf.mxu0
    %v1279 = vadd.f32 %v1259, %v1278
    %1280 = vdwg.mxu0
    %v1283 = vrot.slane %v1119, 7
    %v1284 = vsel %vm966, %v1079, %v1283
    %v1286 = vadd.f32 %v1034, %v1284
    %v1287 = vxor.u32 %v1286, 2147483648
    %v1288 = vmul.f32 %v1287, 1.442695
    %v1289 = vpow.pop %v1288
    %v1290 = vadd.f32 %v1289, 1.0
    %v1291 = vrcp.pop %v1290
    %v1292 = vmul.f32 %v1290, %v1291
    %v1293 = vsub.f32 1.0, %v1292
    %v1294 = vmul.f32 %v1291, %v1293
    %v1295 = vadd.f32 %v1291, %v1294
    %vm1296 = vweird.f32 %v1290
    %vm1297 = vweird.f32 %v1291
    %vm1298 = vmor %vm1296, %vm1297
    %v1299 = vsel %vm1298, %v1291, %v1295
    %v1300 = vand.u32 2147483647, %v1290
    %vm1301 = vcmp.eq.f32.partialorder %v1300, 8.507059e+37
    %v1302 = vand.u32 %v1290, 2147483648
    %v1303 = vor.u32 1.1754944e-38, %v1302
    %v1304 = vsel %vm1301, %v1303, %v1299
    %v1305 = vmul.f32 1.0, %v1304
    %v1307 = vrot.slane %v1034, 2
    %v1311 = vrot.slane %v1199, 7
    %v1312 = vsel %vm966, %v1159, %v1311
    %v1314 = vadd.f32 %v1307, %v1312
    %v1315 = vxor.u32 %v1314, 2147483648
    %v1316 = vmul.f32 %v1315, 1.442695
    %v1317 = vpow.pop %v1316
    %v1318 = vadd.f32 %v1317, 1.0
    %v1319 = vrcp.pop %v1318
    %v1320 = vmul.f32 %v1318, %v1319
    %v1321 = vsub.f32 1.0, %v1320
    %v1322 = vmul.f32 %v1319, %v1321
    %v1323 = vadd.f32 %v1319, %v1322
    %vm1324 = vweird.f32 %v1318
    %vm1325 = vweird.f32 %v1319
    %vm1326 = vmor %vm1324, %vm1325
    %v1327 = vsel %vm1326, %v1319, %v1323
    %v1328 = vand.u32 2147483647, %v1318
    %vm1329 = vcmp.eq.f32.partialorder %v1328, 8.507059e+37
    %v1330 = vand.u32 %v1318, 2147483648
    %v1331 = vor.u32 1.1754944e-38, %v1330
    %v1332 = vsel %vm1329, %v1331, %v1327
    %v1333 = vmul.f32 1.0, %v1332
    %v1336 = vrot.slane %v1279, 7
    %v1337 = vsel %vm966, %v1239, %v1336
    %v1339 = vmul.f32 %v1305, %v1337
    %v1340 = vrot.slane %v1034, 4
    %v1342 = vadd.f32 %v1340, %v1339
    %v1343 = vtanh.pop %v1342
    %v1344 = vsub.f32 1.0, %v1333
    %v1345 = vmul.f32 %v1344, %v1343
    %v1346 = vmul.f32 %v1333, %v1035
    %v1347 = vadd.f32 %v1345, %v1346
    %1348 = vst.msk [vmem:[#allocation3] sm:$0x3] %vm508, %v1347
    %s1349 = scalar_lea.vmem [#allocation4], 1
    %1350 = vst.msk [vmem:[%s1349] ss:$4 sm:$0x3] %vm508, %v1347
    %s1351 = scalar_lea.vmem [#allocation2], 2
    %v1352 = vld [vmem:[%s1351] ss:$4 sm:$0x3f]
    %v1353 = vld [vmem:[#allocation3] sm:$0x3]
    %v1355 = vperm.slane %v1353, 0
    %v1356 = vperm.slane %v1353, 1
    %1359 = vmatpush.msra.mxu0 %v600
    %1360 = vmatpush.msra.mxu0 %v594
    %1361 = vmatpush.msra.mxu0 %v588
    %1362 = vmatpush.msra.mxu0 %v582
    %1363 = vmatpush.msra.mxu0 %v576
    %1364 = vmatpush.msra.mxu0 %v570
    %1365 = vmatpush.msra.mxu0 %v564
    %1366 = vmatpush.msra.mxu0 %v558
    %1367 = vmatpush.msra.mxu0 %v552
    %1368 = vmatpush.msra.mxu0 %v546
    %1369 = vmatpush.msra.mxu0 %v540
    %1370 = vmatpush.msra.mxu0 %v534
    %1371 = vmatpush.msra.mxu0 %v528
    %1372 = vmatpush.msra.mxu0 %v522
    %1373 = vmatpush.msra.mxu0 %v516
    %1374 = vmatpush.msra.mxu0 %v510
    %1375 = vmatmul.f32.gmra.mxu0 %v1355
    %v1376 = vpop.f32.mrf.mxu0
    %v1377 = vadd.f32 %v711, %v1376
    %1378 = vdwg.mxu0
    %1379 = vmatpush.msra.mxu0 %v696
    %1380 = vmatpush.msra.mxu0 %v690
    %1381 = vmatpush.msra.mxu0 %v684
    %1382 = vmatpush.msra.mxu0 %v678
    %1383 = vmatpush.msra.mxu0 %v672
    %1384 = vmatpush.msra.mxu0 %v666
    %1385 = vmatpush.msra.mxu0 %v660
    %1386 = vmatpush.msra.mxu0 %v654
    %1387 = vmatpush.msra.mxu0 %v648
    %1388 = vmatpush.msra.mxu0 %v642
    %1389 = vmatpush.msra.mxu0 %v636
    %1390 = vmatpush.msra.mxu0 %v630
    %1391 = vmatpush.msra.mxu0 %v624
    %1392 = vmatpush.msra.mxu0 %v618
    %1393 = vmatpush.msra.mxu0 %v612
    %1394 = vmatpush.msra.mxu0 %v606
    %1395 = vmatmul.f32.gmra.mxu0 %v1356
    %v1396 = vpop.f32.mrf.mxu0
    %v1397 = vadd.f32 %v1377, %v1396
    %1398 = vdwg.mxu0
    %1399 = vmatpush.msra.mxu0 %v601
    %1400 = vmatpush.msra.mxu0 %v595
    %1401 = vmatpush.msra.mxu0 %v589
    %1402 = vmatpush.msra.mxu0 %v583
    %1403 = vmatpush.msra.mxu0 %v577
    %1404 = vmatpush.msra.mxu0 %v571
    %1405 = vmatpush.msra.mxu0 %v565
    %1406 = vmatpush.msra.mxu0 %v559
    %1407 = vmatpush.msra.mxu0 %v553
    %1408 = vmatpush.msra.mxu0 %v547
    %1409 = vmatpush.msra.mxu0 %v541
    %1410 = vmatpush.msra.mxu0 %v535
    %1411 = vmatpush.msra.mxu0 %v529
    %1412 = vmatpush.msra.mxu0 %v523
    %1413 = vmatpush.msra.mxu0 %v517
    %1414 = vmatpush.msra.mxu0 %v511
    %1415 = vmatmul.f32.gmra.mxu0 %v1355
    %v1416 = vpop.f32.mrf.mxu0
    %v1417 = vadd.f32 %v712, %v1416
    %1418 = vdwg.mxu0
    %1419 = vmatpush.msra.mxu0 %v697
    %1420 = vmatpush.msra.mxu0 %v691
    %1421 = vmatpush.msra.mxu0 %v685
    %1422 = vmatpush.msra.mxu0 %v679
    %1423 = vmatpush.msra.mxu0 %v673
    %1424 = vmatpush.msra.mxu0 %v667
    %1425 = vmatpush.msra.mxu0 %v661
    %1426 = vmatpush.msra.mxu0 %v655
    %1427 = vmatpush.msra.mxu0 %v649
    %1428 = vmatpush.msra.mxu0 %v643
    %1429 = vmatpush.msra.mxu0 %v637
    %1430 = vmatpush.msra.mxu0 %v631
    %1431 = vmatpush.msra.mxu0 %v625
    %1432 = vmatpush.msra.mxu0 %v619
    %1433 = vmatpush.msra.mxu0 %v613
    %1434 = vmatpush.msra.mxu0 %v607
    %1435 = vmatmul.f32.gmra.mxu0 %v1356
    %v1436 = vpop.f32.mrf.mxu0
    %v1437 = vadd.f32 %v1417, %v1436
    %1438 = vdwg.mxu0
    %1439 = vmatpush.msra.mxu0 %v602
    %1440 = vmatpush.msra.mxu0 %v596
    %1441 = vmatpush.msra.mxu0 %v590
    %1442 = vmatpush.msra.mxu0 %v584
    %1443 = vmatpush.msra.mxu0 %v578
    %1444 = vmatpush.msra.mxu0 %v572
    %1445 = vmatpush.msra.mxu0 %v566
    %1446 = vmatpush.msra.mxu0 %v560
    %1447 = vmatpush.msra.mxu0 %v554
    %1448 = vmatpush.msra.mxu0 %v548
    %1449 = vmatpush.msra.mxu0 %v542
    %1450 = vmatpush.msra.mxu0 %v536
    %1451 = vmatpush.msra.mxu0 %v530
    %1452 = vmatpush.msra.mxu0 %v524
    %1453 = vmatpush.msra.mxu0 %v518
    %1454 = vmatpush.msra.mxu0 %v512
    %1455 = vmatmul.f32.gmra.mxu0 %v1355
    %v1456 = vpop.f32.mrf.mxu0
    %v1457 = vadd.f32 %v713, %v1456
    %1458 = vdwg.mxu0
    %1459 = vmatpush.msra.mxu0 %v698
    %1460 = vmatpush.msra.mxu0 %v692
    %1461 = vmatpush.msra.mxu0 %v686
    %1462 = vmatpush.msra.mxu0 %v680
    %1463 = vmatpush.msra.mxu0 %v674
    %1464 = vmatpush.msra.mxu0 %v668
    %1465 = vmatpush.msra.mxu0 %v662
    %1466 = vmatpush.msra.mxu0 %v656
    %1467 = vmatpush.msra.mxu0 %v650
    %1468 = vmatpush.msra.mxu0 %v644
    %1469 = vmatpush.msra.mxu0 %v638
    %1470 = vmatpush.msra.mxu0 %v632
    %1471 = vmatpush.msra.mxu0 %v626
    %1472 = vmatpush.msra.mxu0 %v620
    %1473 = vmatpush.msra.mxu0 %v614
    %1474 = vmatpush.msra.mxu0 %v608
    %1475 = vmatmul.f32.gmra.mxu0 %v1356
    %v1476 = vpop.f32.mrf.mxu0
    %v1477 = vadd.f32 %v1457, %v1476
    %1478 = vdwg.mxu0
    %1479 = vmatpush.msra.mxu0 %v603
    %1480 = vmatpush.msra.mxu0 %v597
    %1481 = vmatpush.msra.mxu0 %v591
    %1482 = vmatpush.msra.mxu0 %v585
    %1483 = vmatpush.msra.mxu0 %v579
    %1484 = vmatpush.msra.mxu0 %v573
    %1485 = vmatpush.msra.mxu0 %v567
    %1486 = vmatpush.msra.mxu0 %v561
    %1487 = vmatpush.msra.mxu0 %v555
    %1488 = vmatpush.msra.mxu0 %v549
    %1489 = vmatpush.msra.mxu0 %v543
    %1490 = vmatpush.msra.mxu0 %v537
    %1491 = vmatpush.msra.mxu0 %v531
    %1492 = vmatpush.msra.mxu0 %v525
    %1493 = vmatpush.msra.mxu0 %v519
    %1494 = vmatpush.msra.mxu0 %v513
    %1495 = vmatmul.f32.gmra.mxu0 %v1355
    %v1496 = vpop.f32.mrf.mxu0
    %v1497 = vadd.f32 %v714, %v1496
    %1498 = vdwg.mxu0
    %1499 = vmatpush.msra.mxu0 %v699
    %1500 = vmatpush.msra.mxu0 %v693
    %1501 = vmatpush.msra.mxu0 %v687
    %1502 = vmatpush.msra.mxu0 %v681
    %1503 = vmatpush.msra.mxu0 %v675
    %1504 = vmatpush.msra.mxu0 %v669
    %1505 = vmatpush.msra.mxu0 %v663
    %1506 = vmatpush.msra.mxu0 %v657
    %1507 = vmatpush.msra.mxu0 %v651
    %1508 = vmatpush.msra.mxu0 %v645
    %1509 = vmatpush.msra.mxu0 %v639
    %1510 = vmatpush.msra.mxu0 %v633
    %1511 = vmatpush.msra.mxu0 %v627
    %1512 = vmatpush.msra.mxu0 %v621
    %1513 = vmatpush.msra.mxu0 %v615
    %1514 = vmatpush.msra.mxu0 %v609
    %1515 = vmatmul.f32.gmra.mxu0 %v1356
    %v1516 = vpop.f32.mrf.mxu0
    %v1517 = vadd.f32 %v1497, %v1516
    %1518 = vdwg.mxu0
    %1519 = vmatpush.msra.mxu0 %v604
    %1520 = vmatpush.msra.mxu0 %v598
    %1521 = vmatpush.msra.mxu0 %v592
    %1522 = vmatpush.msra.mxu0 %v586
    %1523 = vmatpush.msra.mxu0 %v580
    %1524 = vmatpush.msra.mxu0 %v574
    %1525 = vmatpush.msra.mxu0 %v568
    %1526 = vmatpush.msra.mxu0 %v562
    %1527 = vmatpush.msra.mxu0 %v556
    %1528 = vmatpush.msra.mxu0 %v550
    %1529 = vmatpush.msra.mxu0 %v544
    %1530 = vmatpush.msra.mxu0 %v538
    %1531 = vmatpush.msra.mxu0 %v532
    %1532 = vmatpush.msra.mxu0 %v526
    %1533 = vmatpush.msra.mxu0 %v520
    %1534 = vmatpush.msra.mxu0 %v514
    %1535 = vmatmul.f32.gmra.mxu0 %v1355
    %v1536 = vpop.f32.mrf.mxu0
    %v1537 = vadd.f32 %v715, %v1536
    %1538 = vdwg.mxu0
    %1539 = vmatpush.msra.mxu0 %v700
    %1540 = vmatpush.msra.mxu0 %v694
    %1541 = vmatpush.msra.mxu0 %v688
    %1542 = vmatpush.msra.mxu0 %v682
    %1543 = vmatpush.msra.mxu0 %v676
    %1544 = vmatpush.msra.mxu0 %v670
    %1545 = vmatpush.msra.mxu0 %v664
    %1546 = vmatpush.msra.mxu0 %v658
    %1547 = vmatpush.msra.mxu0 %v652
    %1548 = vmatpush.msra.mxu0 %v646
    %1549 = vmatpush.msra.mxu0 %v640
    %1550 = vmatpush.msra.mxu0 %v634
    %1551 = vmatpush.msra.mxu0 %v628
    %1552 = vmatpush.msra.mxu0 %v622
    %1553 = vmatpush.msra.mxu0 %v616
    %1554 = vmatpush.msra.mxu0 %v610
    %1555 = vmatmul.f32.gmra.mxu0 %v1356
    %v1556 = vpop.f32.mrf.mxu0
    %v1557 = vadd.f32 %v1537, %v1556
    %1558 = vdwg.mxu0
    %1559 = vmatpush.msra.mxu0 %v605
    %1560 = vmatpush.msra.mxu0 %v599
    %1561 = vmatpush.msra.mxu0 %v593
    %1562 = vmatpush.msra.mxu0 %v587
    %1563 = vmatpush.msra.mxu0 %v581
    %1564 = vmatpush.msra.mxu0 %v575
    %1565 = vmatpush.msra.mxu0 %v569
    %1566 = vmatpush.msra.mxu0 %v563
    %1567 = vmatpush.msra.mxu0 %v557
    %1568 = vmatpush.msra.mxu0 %v551
    %1569 = vmatpush.msra.mxu0 %v545
    %1570 = vmatpush.msra.mxu0 %v539
    %1571 = vmatpush.msra.mxu0 %v533
    %1572 = vmatpush.msra.mxu0 %v527
    %1573 = vmatpush.msra.mxu0 %v521
    %1574 = vmatpush.msra.mxu0 %v515
    %1575 = vmatmul.f32.gmra.mxu0 %v1355
    %v1576 = vpop.f32.mrf.mxu0
    %v1577 = vadd.f32 %v716, %v1576
    %1578 = vdwg.mxu0
    %1579 = vmatpush.msra.mxu0 %v701
    %1580 = vmatpush.msra.mxu0 %v695
    %1581 = vmatpush.msra.mxu0 %v689
    %1582 = vmatpush.msra.mxu0 %v683
    %1583 = vmatpush.msra.mxu0 %v677
    %1584 = vmatpush.msra.mxu0 %v671
    %1585 = vmatpush.msra.mxu0 %v665
    %1586 = vmatpush.msra.mxu0 %v659
    %1587 = vmatpush.msra.mxu0 %v653
    %1588 = vmatpush.msra.mxu0 %v647
    %1589 = vmatpush.msra.mxu0 %v641
    %1590 = vmatpush.msra.mxu0 %v635
    %1591 = vmatpush.msra.mxu0 %v629
    %1592 = vmatpush.msra.mxu0 %v623
    %1593 = vmatpush.msra.mxu0 %v617
    %1594 = vmatpush.msra.mxu0 %v611
    %1595 = vmatmul.f32.gmra.mxu0 %v1356
    %v1596 = vpop.f32.mrf.mxu0
    %v1597 = vadd.f32 %v1577, %v1596
    %1598 = vdwg.mxu0
    %v1601 = vrot.slane %v1437, 7
    %v1602 = vsel %vm966, %v1397, %v1601
    %v1604 = vadd.f32 %v1352, %v1602
    %v1605 = vxor.u32 %v1604, 2147483648
    %v1606 = vmul.f32 %v1605, 1.442695
    %v1607 = vpow.pop %v1606
    %v1608 = vadd.f32 %v1607, 1.0
    %v1609 = vrcp.pop %v1608
    %v1610 = vmul.f32 %v1608, %v1609
    %v1611 = vsub.f32 1.0, %v1610
    %v1612 = vmul.f32 %v1609, %v1611
    %v1613 = vadd.f32 %v1609, %v1612
    %vm1614 = vweird.f32 %v1608
    %vm1615 = vweird.f32 %v1609
    %vm1616 = vmor %vm1614, %vm1615
    %v1617 = vsel %vm1616, %v1609, %v1613
    %v1618 = vand.u32 2147483647, %v1608
    %vm1619 = vcmp.eq.f32.partialorder %v1618, 8.507059e+37
    %v1620 = vand.u32 %v1608, 2147483648
    %v1621 = vor.u32 1.1754944e-38, %v1620
    %v1622 = vsel %vm1619, %v1621, %v1617
    %v1623 = vmul.f32 1.0, %v1622
    %v1625 = vrot.slane %v1352, 2
    %v1629 = vrot.slane %v1517, 7
    %v1630 = vsel %vm966, %v1477, %v1629
    %v1632 = vadd.f32 %v1625, %v1630
    %v1633 = vxor.u32 %v1632, 2147483648
    %v1634 = vmul.f32 %v1633, 1.442695
    %v1635 = vpow.pop %v1634
    %v1636 = vadd.f32 %v1635, 1.0
    %v1637 = vrcp.pop %v1636
    %v1638 = vmul.f32 %v1636, %v1637
    %v1639 = vsub.f32 1.0, %v1638
    %v1640 = vmul.f32 %v1637, %v1639
    %v1641 = vadd.f32 %v1637, %v1640
    %vm1642 = vweird.f32 %v1636
    %vm1643 = vweird.f32 %v1637
    %vm1644 = vmor %vm1642, %vm1643
    %v1645 = vsel %vm1644, %v1637, %v1641
    %v1646 = vand.u32 2147483647, %v1636
    %vm1647 = vcmp.eq.f32.partialorder %v1646, 8.507059e+37
    %v1648 = vand.u32 %v1636, 2147483648
    %v1649 = vor.u32 1.1754944e-38, %v1648
    %v1650 = vsel %vm1647, %v1649, %v1645
    %v1651 = vmul.f32 1.0, %v1650
    %v1654 = vrot.slane %v1597, 7
    %v1655 = vsel %vm966, %v1557, %v1654
    %v1657 = vmul.f32 %v1623, %v1655
    %v1658 = vrot.slane %v1352, 4
    %v1660 = vadd.f32 %v1658, %v1657
    %v1661 = vtanh.pop %v1660
    %v1662 = vsub.f32 1.0, %v1651
    %v1663 = vmul.f32 %v1662, %v1661
    %v1664 = vmul.f32 %v1651, %v1353
    %v1665 = vadd.f32 %v1663, %v1664
    %1666 = vst.msk [vmem:[#allocation3] sm:$0x3] %vm508, %v1665
    %s1667 = scalar_lea.vmem [#allocation4], 2
    %1668 = vst.msk [vmem:[%s1667] ss:$4 sm:$0x3] %vm508, %v1665
    %s1669 = scalar_lea.vmem [#allocation2], 3
    %v1670 = vld [vmem:[%s1669] ss:$4 sm:$0x3f]
    %v1671 = vld [vmem:[#allocation3] sm:$0x3]
    %v1673 = vperm.slane %v1671, 0
    %v1674 = vperm.slane %v1671, 1
    %1677 = vmatpush.msra.mxu0 %v600
    %1678 = vmatpush.msra.mxu0 %v594
    %1679 = vmatpush.msra.mxu0 %v588
    %1680 = vmatpush.msra.mxu0 %v582
    %1681 = vmatpush.msra.mxu0 %v576
    %1682 = vmatpush.msra.mxu0 %v570
    %1683 = vmatpush.msra.mxu0 %v564
    %1684 = vmatpush.msra.mxu0 %v558
    %1685 = vmatpush.msra.mxu0 %v552
    %1686 = vmatpush.msra.mxu0 %v546
    %1687 = vmatpush.msra.mxu0 %v540
    %1688 = vmatpush.msra.mxu0 %v534
    %1689 = vmatpush.msra.mxu0 %v528
    %1690 = vmatpush.msra.mxu0 %v522
    %1691 = vmatpush.msra.mxu0 %v516
    %1692 = vmatpush.msra.mxu0 %v510
    %1693 = vmatmul.f32.gmra.mxu0 %v1673
    %v1694 = vpop.f32.mrf.mxu0
    %v1695 = vadd.f32 %v711, %v1694
    %1696 = vdwg.mxu0
    %1697 = vmatpush.msra.mxu0 %v696
    %1698 = vmatpush.msra.mxu0 %v690
    %1699 = vmatpush.msra.mxu0 %v684
    %1700 = vmatpush.msra.mxu0 %v678
    %1701 = vmatpush.msra.mxu0 %v672
    %1702 = vmatpush.msra.mxu0 %v666
    %1703 = vmatpush.msra.mxu0 %v660
    %1704 = vmatpush.msra.mxu0 %v654
    %1705 = vmatpush.msra.mxu0 %v648
    %1706 = vmatpush.msra.mxu0 %v642
    %1707 = vmatpush.msra.mxu0 %v636
    %1708 = vmatpush.msra.mxu0 %v630
    %1709 = vmatpush.msra.mxu0 %v624
    %1710 = vmatpush.msra.mxu0 %v618
    %1711 = vmatpush.msra.mxu0 %v612
    %1712 = vmatpush.msra.mxu0 %v606
    %1713 = vmatmul.f32.gmra.mxu0 %v1674
    %v1714 = vpop.f32.mrf.mxu0
    %v1715 = vadd.f32 %v1695, %v1714
    %1716 = vdwg.mxu0
    %1717 = vmatpush.msra.mxu0 %v601
    %1718 = vmatpush.msra.mxu0 %v595
    %1719 = vmatpush.msra.mxu0 %v589
    %1720 = vmatpush.msra.mxu0 %v583
    %1721 = vmatpush.msra.mxu0 %v577
    %1722 = vmatpush.msra.mxu0 %v571
    %1723 = vmatpush.msra.mxu0 %v565
    %1724 = vmatpush.msra.mxu0 %v559
    %1725 = vmatpush.msra.mxu0 %v553
    %1726 = vmatpush.msra.mxu0 %v547
    %1727 = vmatpush.msra.mxu0 %v541
    %1728 = vmatpush.msra.mxu0 %v535
    %1729 = vmatpush.msra.mxu0 %v529
    %1730 = vmatpush.msra.mxu0 %v523
    %1731 = vmatpush.msra.mxu0 %v517
    %1732 = vmatpush.msra.mxu0 %v511
    %1733 = vmatmul.f32.gmra.mxu0 %v1673
    %v1734 = vpop.f32.mrf.mxu0
    %v1735 = vadd.f32 %v712, %v1734
    %1736 = vdwg.mxu0
    %1737 = vmatpush.msra.mxu0 %v697
    %1738 = vmatpush.msra.mxu0 %v691
    %1739 = vmatpush.msra.mxu0 %v685
    %1740 = vmatpush.msra.mxu0 %v679
    %1741 = vmatpush.msra.mxu0 %v673
    %1742 = vmatpush.msra.mxu0 %v667
    %1743 = vmatpush.msra.mxu0 %v661
    %1744 = vmatpush.msra.mxu0 %v655
    %1745 = vmatpush.msra.mxu0 %v649
    %1746 = vmatpush.msra.mxu0 %v643
    %1747 = vmatpush.msra.mxu0 %v637
    %1748 = vmatpush.msra.mxu0 %v631
    %1749 = vmatpush.msra.mxu0 %v625
    %1750 = vmatpush.msra.mxu0 %v619
    %1751 = vmatpush.msra.mxu0 %v613
    %1752 = vmatpush.msra.mxu0 %v607
    %1753 = vmatmul.f32.gmra.mxu0 %v1674
    %v1754 = vpop.f32.mrf.mxu0
    %v1755 = vadd.f32 %v1735, %v1754
    %1756 = vdwg.mxu0
    %1757 = vmatpush.msra.mxu0 %v602
    %1758 = vmatpush.msra.mxu0 %v596
    %1759 = vmatpush.msra.mxu0 %v590
    %1760 = vmatpush.msra.mxu0 %v584
    %1761 = vmatpush.msra.mxu0 %v578
    %1762 = vmatpush.msra.mxu0 %v572
    %1763 = vmatpush.msra.mxu0 %v566
    %1764 = vmatpush.msra.mxu0 %v560
    %1765 = vmatpush.msra.mxu0 %v554
    %1766 = vmatpush.msra.mxu0 %v548
    %1767 = vmatpush.msra.mxu0 %v542
    %1768 = vmatpush.msra.mxu0 %v536
    %1769 = vmatpush.msra.mxu0 %v530
    %1770 = vmatpush.msra.mxu0 %v524
    %1771 = vmatpush.msra.mxu0 %v518
    %1772 = vmatpush.msra.mxu0 %v512
    %1773 = vmatmul.f32.gmra.mxu0 %v1673
    %v1774 = vpop.f32.mrf.mxu0
    %v1775 = vadd.f32 %v713, %v1774
    %1776 = vdwg.mxu0
    %1777 = vmatpush.msra.mxu0 %v698
    %1778 = vmatpush.msra.mxu0 %v692
    %1779 = vmatpush.msra.mxu0 %v686
    %1780 = vmatpush.msra.mxu0 %v680
    %1781 = vmatpush.msra.mxu0 %v674
    %1782 = vmatpush.msra.mxu0 %v668
    %1783 = vmatpush.msra.mxu0 %v662
    %1784 = vmatpush.msra.mxu0 %v656
    %1785 = vmatpush.msra.mxu0 %v650
    %1786 = vmatpush.msra.mxu0 %v644
    %1787 = vmatpush.msra.mxu0 %v638
    %1788 = vmatpush.msra.mxu0 %v632
    %1789 = vmatpush.msra.mxu0 %v626
    %1790 = vmatpush.msra.mxu0 %v620
    %1791 = vmatpush.msra.mxu0 %v614
    %1792 = vmatpush.msra.mxu0 %v608
    %1793 = vmatmul.f32.gmra.mxu0 %v1674
    %v1794 = vpop.f32.mrf.mxu0
    %v1795 = vadd.f32 %v1775, %v1794
    %1796 = vdwg.mxu0
    %1797 = vmatpush.msra.mxu0 %v603
    %1798 = vmatpush.msra.mxu0 %v597
    %1799 = vmatpush.msra.mxu0 %v591
    %1800 = vmatpush.msra.mxu0 %v585
    %1801 = vmatpush.msra.mxu0 %v579
    %1802 = vmatpush.msra.mxu0 %v573
    %1803 = vmatpush.msra.mxu0 %v567
    %1804 = vmatpush.msra.mxu0 %v561
    %1805 = vmatpush.msra.mxu0 %v555
    %1806 = vmatpush.msra.mxu0 %v549
    %1807 = vmatpush.msra.mxu0 %v543
    %1808 = vmatpush.msra.mxu0 %v537
    %1809 = vmatpush.msra.mxu0 %v531
    %1810 = vmatpush.msra.mxu0 %v525
    %1811 = vmatpush.msra.mxu0 %v519
    %1812 = vmatpush.msra.mxu0 %v513
    %1813 = vmatmul.f32.gmra.mxu0 %v1673
    %v1814 = vpop.f32.mrf.mxu0
    %v1815 = vadd.f32 %v714, %v1814
    %1816 = vdwg.mxu0
    %1817 = vmatpush.msra.mxu0 %v699
    %1818 = vmatpush.msra.mxu0 %v693
    %1819 = vmatpush.msra.mxu0 %v687
    %1820 = vmatpush.msra.mxu0 %v681
    %1821 = vmatpush.msra.mxu0 %v675
    %1822 = vmatpush.msra.mxu0 %v669
    %1823 = vmatpush.msra.mxu0 %v663
    %1824 = vmatpush.msra.mxu0 %v657
    %1825 = vmatpush.msra.mxu0 %v651
    %1826 = vmatpush.msra.mxu0 %v645
    %1827 = vmatpush.msra.mxu0 %v639
    %1828 = vmatpush.msra.mxu0 %v633
    %1829 = vmatpush.msra.mxu0 %v627
    %1830 = vmatpush.msra.mxu0 %v621
    %1831 = vmatpush.msra.mxu0 %v615
    %1832 = vmatpush.msra.mxu0 %v609
    %1833 = vmatmul.f32.gmra.mxu0 %v1674
    %v1834 = vpop.f32.mrf.mxu0
    %v1835 = vadd.f32 %v1815, %v1834
    %1836 = vdwg.mxu0
    %1837 = vmatpush.msra.mxu0 %v604
    %1838 = vmatpush.msra.mxu0 %v598
    %1839 = vmatpush.msra.mxu0 %v592
    %1840 = vmatpush.msra.mxu0 %v586
    %1841 = vmatpush.msra.mxu0 %v580
    %1842 = vmatpush.msra.mxu0 %v574
    %1843 = vmatpush.msra.mxu0 %v568
    %1844 = vmatpush.msra.mxu0 %v562
    %1845 = vmatpush.msra.mxu0 %v556
    %1846 = vmatpush.msra.mxu0 %v550
    %1847 = vmatpush.msra.mxu0 %v544
    %1848 = vmatpush.msra.mxu0 %v538
    %1849 = vmatpush.msra.mxu0 %v532
    %1850 = vmatpush.msra.mxu0 %v526
    %1851 = vmatpush.msra.mxu0 %v520
    %1852 = vmatpush.msra.mxu0 %v514
    %1853 = vmatmul.f32.gmra.mxu0 %v1673
    %v1854 = vpop.f32.mrf.mxu0
    %v1855 = vadd.f32 %v715, %v1854
    %1856 = vdwg.mxu0
    %1857 = vmatpush.msra.mxu0 %v700
    %1858 = vmatpush.msra.mxu0 %v694
    %1859 = vmatpush.msra.mxu0 %v688
    %1860 = vmatpush.msra.mxu0 %v682
    %1861 = vmatpush.msra.mxu0 %v676
    %1862 = vmatpush.msra.mxu0 %v670
    %1863 = vmatpush.msra.mxu0 %v664
    %1864 = vmatpush.msra.mxu0 %v658
    %1865 = vmatpush.msra.mxu0 %v652
    %1866 = vmatpush.msra.mxu0 %v646
    %1867 = vmatpush.msra.mxu0 %v640
    %1868 = vmatpush.msra.mxu0 %v634
    %1869 = vmatpush.msra.mxu0 %v628
    %1870 = vmatpush.msra.mxu0 %v622
    %1871 = vmatpush.msra.mxu0 %v616
    %1872 = vmatpush.msra.mxu0 %v610
    %1873 = vmatmul.f32.gmra.mxu0 %v1674
    %v1874 = vpop.f32.mrf.mxu0
    %v1875 = vadd.f32 %v1855, %v1874
    %1876 = vdwg.mxu0
    %1877 = vmatpush.msra.mxu0 %v605
    %1878 = vmatpush.msra.mxu0 %v599
    %1879 = vmatpush.msra.mxu0 %v593
    %1880 = vmatpush.msra.mxu0 %v587
    %1881 = vmatpush.msra.mxu0 %v581
    %1882 = vmatpush.msra.mxu0 %v575
    %1883 = vmatpush.msra.mxu0 %v569
    %1884 = vmatpush.msra.mxu0 %v563
    %1885 = vmatpush.msra.mxu0 %v557
    %1886 = vmatpush.msra.mxu0 %v551
    %1887 = vmatpush.msra.mxu0 %v545
    %1888 = vmatpush.msra.mxu0 %v539
    %1889 = vmatpush.msra.mxu0 %v533
    %1890 = vmatpush.msra.mxu0 %v527
    %1891 = vmatpush.msra.mxu0 %v521
    %1892 = vmatpush.msra.mxu0 %v515
    %1893 = vmatmul.f32.gmra.mxu0 %v1673
    %v1894 = vpop.f32.mrf.mxu0
    %v1895 = vadd.f32 %v716, %v1894
    %1896 = vdwg.mxu0
    %1897 = vmatpush.msra.mxu0 %v701
    %1898 = vmatpush.msra.mxu0 %v695
    %1899 = vmatpush.msra.mxu0 %v689
    %1900 = vmatpush.msra.mxu0 %v683
    %1901 = vmatpush.msra.mxu0 %v677
    %1902 = vmatpush.msra.mxu0 %v671
    %1903 = vmatpush.msra.mxu0 %v665
    %1904 = vmatpush.msra.mxu0 %v659
    %1905 = vmatpush.msra.mxu0 %v653
    %1906 = vmatpush.msra.mxu0 %v647
    %1907 = vmatpush.msra.mxu0 %v641
    %1908 = vmatpush.msra.mxu0 %v635
    %1909 = vmatpush.msra.mxu0 %v629
    %1910 = vmatpush.msra.mxu0 %v623
    %1911 = vmatpush.msra.mxu0 %v617
    %1912 = vmatpush.msra.mxu0 %v611
    %1913 = vmatmul.f32.gmra.mxu0 %v1674
    %v1914 = vpop.f32.mrf.mxu0
    %v1915 = vadd.f32 %v1895, %v1914
    %1916 = vdwg.mxu0
    %v1919 = vrot.slane %v1755, 7
    %v1920 = vsel %vm966, %v1715, %v1919
    %v1922 = vadd.f32 %v1670, %v1920
    %v1923 = vxor.u32 %v1922, 2147483648
    %v1924 = vmul.f32 %v1923, 1.442695
    %v1925 = vpow.pop %v1924
    %v1926 = vadd.f32 %v1925, 1.0
    %v1927 = vrcp.pop %v1926
    %v1928 = vmul.f32 %v1926, %v1927
    %v1929 = vsub.f32 1.0, %v1928
    %v1930 = vmul.f32 %v1927, %v1929
    %v1931 = vadd.f32 %v1927, %v1930
    %vm1932 = vweird.f32 %v1926
    %vm1933 = vweird.f32 %v1927
    %vm1934 = vmor %vm1932, %vm1933
    %v1935 = vsel %vm1934, %v1927, %v1931
    %v1936 = vand.u32 2147483647, %v1926
    %vm1937 = vcmp.eq.f32.partialorder %v1936, 8.507059e+37
    %v1938 = vand.u32 %v1926, 2147483648
    %v1939 = vor.u32 1.1754944e-38, %v1938
    %v1940 = vsel %vm1937, %v1939, %v1935
    %v1941 = vmul.f32 1.0, %v1940
    %v1943 = vrot.slane %v1670, 2
    %v1947 = vrot.slane %v1835, 7
    %v1948 = vsel %vm966, %v1795, %v1947
    %v1950 = vadd.f32 %v1943, %v1948
    %v1951 = vxor.u32 %v1950, 2147483648
    %v1952 = vmul.f32 %v1951, 1.442695
    %v1953 = vpow.pop %v1952
    %v1954 = vadd.f32 %v1953, 1.0
    %v1955 = vrcp.pop %v1954
    %v1956 = vmul.f32 %v1954, %v1955
    %v1957 = vsub.f32 1.0, %v1956
    %v1958 = vmul.f32 %v1955, %v1957
    %v1959 = vadd.f32 %v1955, %v1958
    %vm1960 = vweird.f32 %v1954
    %vm1961 = vweird.f32 %v1955
    %vm1962 = vmor %vm1960, %vm1961
    %v1963 = vsel %vm1962, %v1955, %v1959
    %v1964 = vand.u32 2147483647, %v1954
    %vm1965 = vcmp.eq.f32.partialorder %v1964, 8.507059e+37
    %v1966 = vand.u32 %v1954, 2147483648
    %v1967 = vor.u32 1.1754944e-38, %v1966
    %v1968 = vsel %vm1965, %v1967, %v1963
    %v1969 = vmul.f32 1.0, %v1968
    %v1972 = vrot.slane %v1915, 7
    %v1973 = vsel %vm966, %v1875, %v1972
    %v1975 = vmul.f32 %v1941, %v1973
    %v1976 = vrot.slane %v1670, 4
    %v1978 = vadd.f32 %v1976, %v1975
    %v1979 = vtanh.pop %v1978
    %v1980 = vsub.f32 1.0, %v1969
    %v1981 = vmul.f32 %v1980, %v1979
    %v1982 = vmul.f32 %v1969, %v1671
    %v1983 = vadd.f32 %v1981, %v1982
    %1984 = vst.msk [vmem:[#allocation3] sm:$0x3] %vm508, %v1983
    %s1985 = scalar_lea.vmem [#allocation4], 3
    %1986 = vst.msk [vmem:[%s1985] ss:$4 sm:$0x3] %vm508, %v1983
    %v1987 = vld [vmem:[#allocation4] sm:$0xff]
    %v1988 = vld [vmem:[%s5] sm:$0xff]
    %v1989 = vld [vmem:[%s5 + $0x8] sm:$0xff]
    %v1990 = vld [vmem:[%s5 + $0x10] sm:$0xff]
    %v1991 = vld [vmem:[%s5 + $0x18] sm:$0xff]
    %v1992 = vld [vmem:[%s5 + $0x20] sm:$0xff]
    %v1993 = vld [vmem:[%s5 + $0x28] sm:$0xff]
    %v1994 = vld [vmem:[%s5 + $0x30] sm:$0xff]
    %v1995 = vld [vmem:[%s5 + $0x38] sm:$0xff]
    %v1996 = vld [vmem:[%s5 + $0x40] sm:$0xff]
    %v1997 = vld [vmem:[%s5 + $0x48] sm:$0xff]
    %v1998 = vld [vmem:[%s5 + $0x50] sm:$0xff]
    %v1999 = vld [vmem:[%s5 + $0x58] sm:$0xff]
    %v2000 = vld [vmem:[%s5 + $0x60] sm:$0xff]
    %v2001 = vld [vmem:[%s5 + $0x68] sm:$0xff]
    %v2002 = vld [vmem:[%s5 + $0x70] sm:$0xff]
    %v2003 = vld [vmem:[%s5 + $0x78] sm:$0xff]
    %v2004 = vld [vmem:[%s5 + $0x80] sm:$0xff]
    %v2005 = vld [vmem:[%s5 + $0x88] sm:$0xff]
    %v2006 = vld [vmem:[%s5 + $0x90] sm:$0xff]
    %v2007 = vld [vmem:[%s5 + $0x98] sm:$0xff]
    %v2008 = vld [vmem:[%s5 + $0xa0] sm:$0xff]
    %v2009 = vld [vmem:[%s5 + $0xa8] sm:$0xff]
    %v2010 = vld [vmem:[%s5 + $0xb0] sm:$0xff]
    %v2011 = vld [vmem:[%s5 + $0xb8] sm:$0xff]
    %v2012 = vld [vmem:[%s5 + $0xc0] sm:$0xff]
    %v2013 = vld [vmem:[%s5 + $0xc8] sm:$0xff]
    %v2014 = vld [vmem:[%s5 + $0xd0] sm:$0xff]
    %v2015 = vld [vmem:[%s5 + $0xd8] sm:$0xff]
    %v2016 = vld [vmem:[%s5 + $0xe0] sm:$0xff]
    %v2017 = vld [vmem:[%s5 + $0xe8] sm:$0xff]
    %v2018 = vld [vmem:[%s5 + $0xf0] sm:$0xff]
    %v2019 = vld [vmem:[%s5 + $0xf8] sm:$0xff]
    %v2020 = vld [vmem:[%s6] sm:$0x1]
    %v2022 = vperm.slane %v2020, 0
    %2025 = vst [vmem:[#allocation1] ss:$2 sm:$0xff] %v1987
    %v2026 = vld.sshfl [vmem:[#allocation1] sm:$0xff pattern:$0x75316420]
    %v2027 = vld.sshfl [vmem:[#allocation1 + $0x8] sm:$0xff pattern:$0x75316420]
    %2030 = vmatpush.msra.mxu0 %v2003
    %2031 = vmatpush.msra.mxu0 %v2002
    %2032 = vmatpush.msra.mxu0 %v2001
    %2033 = vmatpush.msra.mxu0 %v2000
    %2034 = vmatpush.msra.mxu0 %v1999
    %2035 = vmatpush.msra.mxu0 %v1998
    %2036 = vmatpush.msra.mxu0 %v1997
    %2037 = vmatpush.msra.mxu0 %v1996
    %2038 = vmatpush.msra.mxu0 %v1995
    %2039 = vmatpush.msra.mxu0 %v1994
    %2040 = vmatpush.msra.mxu0 %v1993
    %2041 = vmatpush.msra.mxu0 %v1992
    %2042 = vmatpush.msra.mxu0 %v1991
    %2043 = vmatpush.msra.mxu0 %v1990
    %2044 = vmatpush.msra.mxu0 %v1989
    %2045 = vmatpush.msra.mxu0 %v1988
    %2046 = vmatmul.f32.gmra.mxu0 %v2026
    %v2047 = vpop.f32.mrf.mxu0
    %v2048 = vadd.f32 %v2022, %v2047
    %2049 = vdwg.mxu0
    %2050 = vmatpush.msra.mxu0 %v2019
    %2051 = vmatpush.msra.mxu0 %v2018
    %2052 = vmatpush.msra.mxu0 %v2017
    %2053 = vmatpush.msra.mxu0 %v2016
    %2054 = vmatpush.msra.mxu0 %v2015
    %2055 = vmatpush.msra.mxu0 %v2014
    %2056 = vmatpush.msra.mxu0 %v2013
    %2057 = vmatpush.msra.mxu0 %v2012
    %2058 = vmatpush.msra.mxu0 %v2011
    %2059 = vmatpush.msra.mxu0 %v2010
    %2060 = vmatpush.msra.mxu0 %v2009
    %2061 = vmatpush.msra.mxu0 %v2008
    %2062 = vmatpush.msra.mxu0 %v2007
    %2063 = vmatpush.msra.mxu0 %v2006
    %2064 = vmatpush.msra.mxu0 %v2005
    %2065 = vmatpush.msra.mxu0 %v2004
    %2066 = vmatmul.f32.gmra.mxu0 %v2027
    %v2067 = vpop.f32.mrf.mxu0
    %v2068 = vadd.f32 %v2048, %v2067
    %2069 = vdwg.mxu0
    %v2070 = vld [vmem:[%s7] sm:$0xff]
    %v2071 = vld [vmem:[%s7 + $0x8] sm:$0xff]
    %v2072 = vld [vmem:[%s7 + $0x10] sm:$0xff]
    %v2073 = vld [vmem:[%s7 + $0x18] sm:$0xff]
    %v2074 = vld [vmem:[%s7 + $0x20] sm:$0xff]
    %v2075 = vld [vmem:[%s7 + $0x28] sm:$0xff]
    %v2076 = vld [vmem:[%s7 + $0x30] sm:$0xff]
    %v2077 = vld [vmem:[%s7 + $0x38] sm:$0xff]
    %v2078 = vld [vmem:[%s7 + $0x40] sm:$0xff]
    %v2079 = vld [vmem:[%s7 + $0x48] sm:$0xff]
    %v2080 = vld [vmem:[%s7 + $0x50] sm:$0xff]
    %v2081 = vld [vmem:[%s7 + $0x58] sm:$0xff]
    %v2082 = vld [vmem:[%s7 + $0x60] sm:$0xff]
    %v2083 = vld [vmem:[%s7 + $0x68] sm:$0xff]
    %v2084 = vld [vmem:[%s7 + $0x70] sm:$0xff]
    %v2085 = vld [vmem:[%s7 + $0x78] sm:$0xff]
    %v2086 = vld [vmem:[%s8] sm:$0x1]
    %v2088 = vperm.slane %v2086, 0
    %2090 = vmatpush.msra.mxu0 %v2085
    %2091 = vmatpush.msra.mxu0 %v2084
    %2092 = vmatpush.msra.mxu0 %v2083
    %2093 = vmatpush.msra.mxu0 %v2082
    %2094 = vmatpush.msra.mxu0 %v2081
    %2095 = vmatpush.msra.mxu0 %v2080
    %2096 = vmatpush.msra.mxu0 %v2079
    %2097 = vmatpush.msra.mxu0 %v2078
    %2098 = vmatpush.msra.mxu0 %v2077
    %2099 = vmatpush.msra.mxu0 %v2076
    %2100 = vmatpush.msra.mxu0 %v2075
    %2101 = vmatpush.msra.mxu0 %v2074
    %2102 = vmatpush.msra.mxu0 %v2073
    %2103 = vmatpush.msra.mxu0 %v2072
    %2104 = vmatpush.msra.mxu0 %v2071
    %2105 = vmatpush.msra.mxu0 %v2070
    %2106 = vmatmul.f32.gmra.mxu0 %v2068
    %v2107 = vpop.f32.mrf.mxu0
    %v2108 = vadd.f32 %v2088, %v2107
    %2109 = vdwg.mxu0
    %2110 = vst [vmem:[#allocation5] sm:$0xf] %v2108
    // Predicated region
    $region38: #{deep_rqnet_forward.7} parent=1 // pred_check
      _
    $region39: #{deep_rqnet_forward.7} parent=1 // pred_check_branch
      %2112 = sbr.rel (0) target = $region41
    $region40: #{deep_rqnet_forward.7} parent=1 // pred_region
      %2114 = vsyncadd [#allocation6], 0
      %s2116 = sshll.u32 [#allocation5], 4
      %s2117 = int_to_ptr.vmem [resolvable:$true] %s2116
      %s2118 = sshll.u32 %s9, 4
      %s2119 = int_to_ptr.hbm [resolvable:$true] %s2118
      %2121 = dma.vmem_to_hbm [thread:$0]  %s2117, 64, %s2119, [#allocation6]
    $region41: #{deep_rqnet_forward.7} parent=1 // pred_fallthru
      _
    // Predicated region
    $region42: #{deep_rqnet_forward.7} parent=1 // pred_check
      _
    $region43: #{deep_rqnet_forward.7} parent=1 // pred_check_branch
      %2123 = sbr.rel (0) target = $region45
    $region44: #{deep_rqnet_forward.7} parent=1 // pred_region
      %2125 = dma.done [#allocation6], 64
    $region45: #{deep_rqnet_forward.7} parent=1 // pred_fallthru
      _
    %2126 = vsyncpa [#allocation6], 1

</llo_original>
